<compile_context>
chip_gen: v7x
topology: tpu7x:2x2x1
jax: 0.10.0
libtpu: 0.0.40
codegen_flags: <defaults>
</compile_context>

<pallas_src>
import functools

import jax
import jax.numpy as jnp
from jax.experimental import pallas as pl
from jax.experimental.pallas import tpu as pltpu

BN_EPS = 1e-5


def _round_up(x, m):
    return ((x + m - 1) // m) * m


# ----------------------------------------------------------------------------
# Kernel 1: ConvTranspose2d k=2 s=2 as ONE matmul, phase-major lane-dense out.
# ----------------------------------------------------------------------------
def _up_kernel(x_ref, w_ref, b_ref, o_ref):
    # x_ref: (1, C, S) f32    w_ref: (4*C, C) bf16  [row = phase*C + cout]
    # b_ref: (4*C, 1) f32     o_ref: (1, 4*C, S) bf16
    x = x_ref[0].astype(jnp.bfloat16)                       # (C, S), S on lanes
    y = jnp.dot(w_ref[...], x, preferred_element_type=jnp.float32)
    y = y + b_ref[...]                                      # bias in f32 (VPU)
    o_ref[0] = y.astype(o_ref.dtype)


def upsample_2x(x_nchw, w_up, b_up):
    """x_nchw: (B, C, H, W);  w_up: PyTorch ConvTranspose2d weight (Cin, Cout, 2, 2)."""
    B, C, H, W = x_nchw.shape
    S = H * W
    # (Cin, Cout, 2, 2) -> (di, dj, Cout, Cin) -> (4*Cout, Cin); row = k*C + cout.
    w4 = jnp.transpose(w_up, (2, 3, 1, 0)).reshape(4 * C, C).astype(jnp.bfloat16)
    b4 = jnp.tile(b_up, (4,)).reshape(4 * C, 1)
    out4 = pl.pallas_call(
        _up_kernel,
        out_shape=jax.ShapeDtypeStruct((B, 4 * C, S), jnp.bfloat16),
        grid=(B,),
        in_specs=[
            pl.BlockSpec((1, C, S), lambda b: (b, 0, 0)),
            pl.BlockSpec((4 * C, C), lambda b: (0, 0)),
            pl.BlockSpec((4 * C, 1), lambda b: (0, 0)),
        ],
        out_specs=pl.BlockSpec((1, 4 * C, S), lambda b: (b, 0, 0)),
        compiler_params=pltpu.CompilerParams(dimension_semantics=("parallel",)),
    )(x_nchw.reshape(B, C, S), w4, b4)
    # phase-major -> natural NCHW: out[b, c, 2i+di, 2j+dj] = out4[b, (di*2+dj)*C+c, i*W+j]
    # (one XLA copy over a bf16 tensor; see TODO at file top.)
    up = out4.reshape(B, 2, 2, C, H, W)
    up = jnp.transpose(up, (0, 3, 4, 1, 5, 2)).reshape(B, C, 2 * H, 2 * W)
    return up


# ----------------------------------------------------------------------------
# Kernel 2: fused  transit(1x1 conv + BN + ReLU)  +  channel concat  +
#                  zero pad  +  decode(3x3 conv + BN + ReLU)
#
# The concatenated image lives in a FLAT zero-padded bf16 VMEM scratch F of
# shape (C_cat, L), L = 2*PAD + S2, PAD = round_up(W2+1, 128):
#   F[PAD + r*W2 + c] = Cat[r, c].
# The 3x3 tap (ky, kx) is the flat window F[:, PAD-(W2+1)+ky*W2+kx : +S2];
# top/bottom borders are covered by the zero strips, left/right column
# wrap-around is cancelled by two precomputed lane masks.  The 9 taps are
# accumulated into an f32 VMEM scratch, one K=C_cat matmul per tap.
# ----------------------------------------------------------------------------
def _decode_fused_kernel(c_hi, w2, pad, mask_ref, up_ref, low_ref, wt_ref,
                         bt_ref, wd_ref, bd_ref, o_ref, f_ref, acc_ref):
    # mask_ref: (2, S2) f32          up_ref : (1, C_hi, S2) bf16
    # low_ref : (1, C_lo, S2) f32
    # wt_ref  : (C_lo_t, C_lo) bf16  bt_ref : (C_lo_t, 1) f32
    # wd_ref  : (9, C_out, C_cat) bf16   bd_ref: (C_out, 1) f32
    # o_ref   : (1, C_out, S2) f32
    # f_ref   : VMEM (C_cat, 2*pad + S2) bf16   acc_ref: VMEM (C_out, S2) f32
    c_cat, l_flat = f_ref.shape
    c_out, s2 = acc_ref.shape

    # zero the pad strips (every step: scratch is per-core, see note at top).
    zeros_pad = jnp.zeros((c_cat, pad), f_ref.dtype)
    f_ref[:, 0:pad] = zeros_pad
    f_ref[:, pad + s2:l_flat] = zeros_pad

    # concat block 0: upsampled high-level features (bias already added, bf16),
    # lane-dense store at the 128-aligned interior offset.
    f_ref[0:c_hi, pad:pad + s2] = up_ref[0]

    # concat block 1: transit = ReLU(BN(conv1x1(low)))  (BN folded into wt/bt).
    t = jnp.dot(wt_ref[...], low_ref[0].astype(jnp.bfloat16),
                preferred_element_type=jnp.float32)
    t = jnp.maximum(t + bt_ref[...], 0.0)                  # f32 VPU
    f_ref[c_hi:c_cat, pad:pad + s2] = t.astype(f_ref.dtype)

    # decode: 3x3 conv (pad=1) accumulated over 9 shifted flat windows.
    mask_l = jnp.broadcast_to(mask_ref[0:1, :], (c_out, s2))   # zero where col == 0
    mask_r = jnp.broadcast_to(mask_ref[1:2, :], (c_out, s2))   # zero where col == W2-1
    acc_ref[...] = jnp.zeros_like(acc_ref)
    for ky in range(3):
        for kx in range(3):
            off = pad - w2 - 1 + ky * w2 + kx
            win = f_ref[:, off:off + s2]                       # (C_cat, S2) bf16
            contrib = jnp.dot(wd_ref[ky * 3 + kx], win,
                              preferred_element_type=jnp.float32)
            if kx == 0:
                contrib = contrib * mask_l
            elif kx == 2:
                contrib = contrib * mask_r
            acc_ref[...] += contrib

    y = jnp.maximum(acc_ref[...] + bd_ref[...], 0.0)           # folded BN shift + ReLU
    o_ref[0] = y.astype(o_ref.dtype)


def decode_fused(up_nchw, low_nchw, p):
    """up_nchw: (B, C_hi, 2H, 2W) bf16 upsampled features; low_nchw: (B, C_lo, 2H, 2W) f32."""
    B, C_hi, H2, W2 = up_nchw.shape
    C_lo = low_nchw.shape[1]
    C_lo_t = p["t_w"].shape[0]
    C_out = p["d_w"].shape[0]
    C_cat = C_hi + C_lo_t
    S2 = H2 * W2
    PAD = _round_up(W2 + 1, 128)            # 128-lane-aligned interior start
    L = 2 * PAD + S2

    # ---- fold BatchNorm (eval) into the conv weights (one-time, O(C^2)) ----
    t_scale = p["t_gamma"] * jax.lax.rsqrt(p["t_var"] + BN_EPS)           # (C_lo_t,)
    wt = (p["t_w"][:, :, 0, 0] * t_scale[:, None]).astype(jnp.bfloat16)   # (C_lo_t, C_lo)
    bt = (p["t_beta"] - p["t_mean"] * t_scale).reshape(C_lo_t, 1)

    d_scale = p["d_gamma"] * jax.lax.rsqrt(p["d_var"] + BN_EPS)           # (C_out,)
    wd = p["d_w"] * d_scale[:, None, None, None]                          # (C_out, C_cat, 3, 3)
    wd9 = jnp.transpose(wd, (2, 3, 0, 1)).reshape(9, C_out, C_cat)        # [ky*3+kx, o, c]
    wd9 = wd9.astype(jnp.bfloat16)
    bd = (p["d_beta"] - p["d_mean"] * d_scale).reshape(C_out, 1)

    # lane masks cancelling the left/right column wrap-around of the flat taps.
    col = jnp.arange(S2, dtype=jnp.int32) % W2
    masks = jnp.stack([(col != 0), (col != W2 - 1)]).astype(jnp.float32)  # (2, S2)

    kern = functools.partial(_decode_fused_kernel, C_hi, W2, PAD)
    out_flat = pl.pallas_call(
        kern,
        out_shape=jax.ShapeDtypeStruct((B, C_out, S2), jnp.float32),
        grid=(B,),
        in_specs=[
            pl.BlockSpec((2, S2), lambda b: (0, 0)),
            pl.BlockSpec((1, C_hi, S2), lambda b: (b, 0, 0)),
            pl.BlockSpec((1, C_lo, S2), lambda b: (b, 0, 0)),
            pl.BlockSpec((C_lo_t, C_lo), lambda b: (0, 0)),
            pl.BlockSpec((C_lo_t, 1), lambda b: (0, 0)),
            pl.BlockSpec((9, C_out, C_cat), lambda b: (0, 0, 0)),
            pl.BlockSpec((C_out, 1), lambda b: (0, 0)),
        ],
        out_specs=pl.BlockSpec((1, C_out, S2), lambda b: (b, 0, 0)),
        scratch_shapes=[pltpu.VMEM((C_cat, L), jnp.bfloat16),
                        pltpu.VMEM((C_out, S2), jnp.float32)],
        compiler_params=pltpu.CompilerParams(
            dimension_semantics=("parallel",),
            vmem_limit_bytes=48 * 1024 * 1024),
    )(masks, up_nchw.reshape(B, C_hi, S2), low_nchw.reshape(B, C_lo, S2),
      wt, bt, wd9, bd)
    return out_flat.reshape(B, C_out, H2, W2)


# ----------------------------------------------------------------------------
# Full _DecoderBlock forward (NCHW in / NCHW out, like the PyTorch module).
# ----------------------------------------------------------------------------
@jax.jit
def decoder_block_forward(x_nchw, low_nchw, params):
    up = upsample_2x(x_nchw, params["up_w"], params["up_b"])   # (B, C_hi, 2H, 2W) bf16
    return decode_fused(up, low_nchw, params)                  # (B, C_out, 2H, 2W) f32


# ----------------------------------------------------------------------------
# Pure-JAX reference (independent code path, f32) for validation.
# ----------------------------------------------------------------------------
def reference_forward(x_nchw, low_nchw, p):
    B, Ci, H, W = x_nchw.shape
    # ConvTranspose2d k=2 s=2
    t = jnp.einsum("bcij,codk->boidjk", x_nchw, p["up_w"])
    up = t.reshape(B, p["up_w"].shape[1], 2 * H, 2 * W) + p["up_b"][None, :, None, None]
    # transit: conv1x1 + BN + ReLU
    lo = jnp.einsum("bchw,oc->bohw", low_nchw, p["t_w"][:, :, 0, 0])
    sc = p["t_gamma"] * jax.lax.rsqrt(p["t_var"] + BN_EPS)
    sh = p["t_beta"] - p["t_mean"] * sc
    lo = jnp.maximum(lo * sc[None, :, None, None] + sh[None, :, None, None], 0.0)
    cat = jnp.concatenate([up, lo], axis=1)
    # decode: conv3x3 + BN + ReLU
    w_hwio = jnp.transpose(p["d_w"], (2, 3, 1, 0))
    cat_nhwc = jnp.transpose(cat, (0, 2, 3, 1))
    y = jax.lax.conv_general_dilated(
        cat_nhwc, w_hwio, window_strides=(1, 1), padding="SAME",
        dimension_numbers=("NHWC", "HWIO", "NHWC"))
    y = jnp.transpose(y, (0, 3, 1, 2))
    sc = p["d_gamma"] * jax.lax.rsqrt(p["d_var"] + BN_EPS)
    sh = p["d_beta"] - p["d_mean"] * sc
    return jnp.maximum(y * sc[None, :, None, None] + sh[None, :, None, None], 0.0)


def make_params(key, c_high, c_low, c_out, scale_ratio):
    ks = jax.random.split(key, 12)
    c_lo_t = c_low // scale_ratio
    c_cat = c_high + c_lo_t
    f32 = jnp.float32
    return {
        # ConvTranspose2d(c_high, c_high, 2, 2): weight (Cin, Cout, 2, 2), bias (Cout,)
        "up_w": 0.1 * jax.random.normal(ks[0], (c_high, c_high, 2, 2), f32),
        "up_b": 0.1 * jax.random.normal(ks[1], (c_high,), f32),
        # transit conv1x1 + BN
        "t_w": 0.1 * jax.random.normal(ks[2], (c_lo_t, c_low, 1, 1), f32),
        "t_gamma": 1.0 + 0.1 * jax.random.normal(ks[3], (c_lo_t,), f32),
        "t_beta": 0.1 * jax.random.normal(ks[4], (c_lo_t,), f32),
        "t_mean": 0.1 * jax.random.normal(ks[5], (c_lo_t,), f32),
        "t_var": jax.random.uniform(ks[6], (c_lo_t,), f32, 0.5, 1.5),
        # decode conv3x3 + BN
        "d_w": 0.1 * jax.random.normal(ks[7], (c_out, c_cat, 3, 3), f32),
        "d_gamma": 1.0 + 0.1 * jax.random.normal(ks[8], (c_out,), f32),
        "d_beta": 0.1 * jax.random.normal(ks[9], (c_out,), f32),
        "d_mean": 0.1 * jax.random.normal(ks[10], (c_out,), f32),
        "d_var": jax.random.uniform(ks[11], (c_out,), f32, 0.5, 1.5),
    }


if __name__ == "__main__":
    B, C_HIGH, C_LOW, C_OUT, SCALE = 2, 4, 8, 8, 2
    H = W = 16  # low-res spatial; high-res is 2H x 2W

    key = jax.random.PRNGKey(0)
    k_x, k_low, k_p = jax.random.split(key, 3)
    x = jax.random.normal(k_x, (B, C_HIGH, H, W), jnp.float32)               # NCHW
    low_feat = jax.random.normal(k_low, (B, C_LOW, 2 * H, 2 * W), jnp.float32)
    params = make_params(k_p, C_HIGH, C_LOW, C_OUT, SCALE)

    out = decoder_block_forward(x, low_feat, params)
    out = jax.block_until_ready(out)

    ref = jax.block_until_ready(reference_forward(x, low_feat, params))
    assert out.shape == (B, C_OUT, 2 * H, 2 * W), out.shape
    assert bool(jnp.all(jnp.isfinite(out)))
    # bf16 matmuls / bf16 intermediates -> tolerance loosened vs the f32 v2.
    err = float(jnp.max(jnp.abs(out - ref)))
    assert jnp.allclose(out, ref, rtol=6e-2, atol=6e-2), err

    print("KERNEL_OK")
</pallas_src>

<mosaic_0001>
module attributes {stable_mosaic.version = 11 : i64} {
  func.func @_up_kernel(%arg0: i32, %arg1: memref<1x4x256xf32, #tpu.memory_space<vmem>>, %arg2: memref<16x4xbf16, #tpu.memory_space<vmem>>, %arg3: memref<16x1xf32, #tpu.memory_space<vmem>>, %arg4: memref<1x16x256xbf16, #tpu.memory_space<vmem>>) attributes {dimension_semantics = [#tpu.dimension_semantics<parallel>], iteration_bounds = array<i64: 2>, scalar_prefetch = 0 : i64, scratch_operands = 0 : i64, tpu.core_type = #tpu.core_type<tc>, window_params = [{transform_indices = @transform_0, window_bounds = array<i64: 1, 4, 256>}, {pipeline_mode = #tpu.pipeline_mode<synchronous>, transform_indices = @transform_1, window_bounds = array<i64: 16, 4>}, {pipeline_mode = #tpu.pipeline_mode<synchronous>, transform_indices = @transform_2, window_bounds = array<i64: 16, 1>}, {transform_indices = @transform_3, window_bounds = array<i64: 1, 16, 256>}]} {
    %c0 = arith.constant 0 : index
    %c0_0 = arith.constant 0 : index
    %c0_1 = arith.constant 0 : index
    %0 = vector.load %arg1[%c0, %c0_0, %c0_1] : memref<1x4x256xf32, #tpu.memory_space<vmem>>, vector<1x4x256xf32>
    %1 = vector.shape_cast %0 : vector<1x4x256xf32> to vector<4x256xf32>
    %2 = arith.truncf %1 : vector<4x256xf32> to vector<4x256xbf16>
    %c0_2 = arith.constant 0 : index
    %c0_3 = arith.constant 0 : index
    %3 = vector.load %arg2[%c0_2, %c0_3] : memref<16x4xbf16, #tpu.memory_space<vmem>>, vector<16x4xbf16>
    %cst = arith.constant dense<0.000000e+00> : vector<16x256xf32>
    %4 = tpu.matmul %3, %2, %cst {dimension_numbers = #tpu.dot_dimension_numbers<[1], [0], [0], [1], [0, 0, 1, 1], [], []>} : vector<16x4xbf16>, vector<4x256xbf16>, vector<16x256xf32> -> vector<16x256xf32>
    %c0_4 = arith.constant 0 : index
    %c0_5 = arith.constant 0 : index
    %5 = vector.load %arg3[%c0_4, %c0_5] : memref<16x1xf32, #tpu.memory_space<vmem>>, vector<16x1xf32>
    %6 = vector.broadcast %5 : vector<16x1xf32> to vector<16x256xf32>
    %7 = arith.addf %4, %6 : vector<16x256xf32>
    %8 = arith.truncf %7 : vector<16x256xf32> to vector<16x256xbf16>
    %c0_6 = arith.constant 0 : index
    %c0_7 = arith.constant 0 : index
    %c0_8 = arith.constant 0 : index
    %9 = vector.load %arg4[%c0_6, %c0_7, %c0_8] : memref<1x16x256xbf16, #tpu.memory_space<vmem>>, vector<1x16x256xbf16>
    %10 = vector.shape_cast %9 : vector<1x16x256xbf16> to vector<16x256xbf16>
    %11 = vector.shape_cast %8 : vector<16x256xbf16> to vector<1x16x256xbf16>
    tpu.vector_store %arg4[%c0_6, %c0_7, %c0_8], %11 {strides = array<i32>} : memref<1x16x256xbf16, #tpu.memory_space<vmem>>, vector<1x16x256xbf16>,
    return
  }
  func.func @transform_0(%arg0: i32) -> (i32, i32, i32) {
    %c0_i32 = arith.constant 0 : i32
    %c0_i32_0 = arith.constant 0 : i32
    %c0_i32_1 = arith.constant 0 : i32
    return %arg0, %c0_i32, %c0_i32_0 : i32, i32, i32
  }
  func.func @transform_1(%arg0: i32) -> (i32, i32) {
    %c0_i32 = arith.constant 0 : i32
    %c0_i32_0 = arith.constant 0 : i32
    %c0_i32_1 = arith.constant 0 : i32
    return %c0_i32, %c0_i32_0 : i32, i32
  }
  func.func @transform_2(%arg0: i32) -> (i32, i32) {
    %c0_i32 = arith.constant 0 : i32
    %c0_i32_0 = arith.constant 0 : i32
    %c0_i32_1 = arith.constant 0 : i32
    return %c0_i32, %c0_i32_0 : i32, i32
  }
  func.func @transform_3(%arg0: i32) -> (i32, i32, i32) {
    %c0_i32 = arith.constant 0 : i32
    %c0_i32_0 = arith.constant 0 : i32
    %c0_i32_1 = arith.constant 0 : i32
    return %arg0, %c0_i32, %c0_i32_0 : i32, i32, i32
  }
}

module attributes {stable_mosaic.version = 11 : i64} {
  func.func @_decode_fused_kernel(%arg0: i32, %arg1: memref<2x1024xf32, #tpu.memory_space<vmem>>, %arg2: memref<1x4x1024xbf16, #tpu.memory_space<vmem>>, %arg3: memref<1x8x1024xf32, #tpu.memory_space<vmem>>, %arg4: memref<4x8xbf16, #tpu.memory_space<vmem>>, %arg5: memref<4x1xf32, #tpu.memory_space<vmem>>, %arg6: memref<9x8x8xbf16, #tpu.memory_space<vmem>>, %arg7: memref<8x1xf32, #tpu.memory_space<vmem>>, %arg8: memref<1x8x1024xf32, #tpu.memory_space<vmem>>, %arg9: memref<8x1280xbf16, #tpu.memory_space<vmem>>, %arg10: memref<8x1024xf32, #tpu.memory_space<vmem>>) attributes {dimension_semantics = [#tpu.dimension_semantics<parallel>], iteration_bounds = array<i64: 2>, scalar_prefetch = 0 : i64, scratch_operands = 2 : i64, tpu.core_type = #tpu.core_type<tc>, window_params = [{pipeline_mode = #tpu.pipeline_mode<synchronous>, transform_indices = @transform_0, window_bounds = array<i64: 2, 1024>}, {transform_indices = @transform_1, window_bounds = array<i64: 1, 4, 1024>}, {transform_indices = @transform_2, window_bounds = array<i64: 1, 8, 1024>}, {pipeline_mode = #tpu.pipeline_mode<synchronous>, transform_indices = @transform_3, window_bounds = array<i64: 4, 8>}, {pipeline_mode = #tpu.pipeline_mode<synchronous>, transform_indices = @transform_4, window_bounds = array<i64: 4, 1>}, {pipeline_mode = #tpu.pipeline_mode<synchronous>, transform_indices = @transform_5, window_bounds = array<i64: 9, 8, 8>}, {pipeline_mode = #tpu.pipeline_mode<synchronous>, transform_indices = @transform_6, window_bounds = array<i64: 8, 1>}, {transform_indices = @transform_7, window_bounds = array<i64: 1, 8, 1024>}]} {
    %cst = arith.constant 0.000000e+00 : bf16
    %0 = vector.broadcast %cst : bf16 to vector<8x128xbf16>
    %c0 = arith.constant 0 : index
    %c0_0 = arith.constant 0 : index
    %1 = vector.load %arg9[%c0, %c0_0] : memref<8x1280xbf16, #tpu.memory_space<vmem>>, vector<8x128xbf16>
    tpu.vector_store %arg9[%c0, %c0_0], %0 {strides = array<i32>} : memref<8x1280xbf16, #tpu.memory_space<vmem>>, vector<8x128xbf16>,
    %c0_1 = arith.constant 0 : index
    %c1152 = arith.constant 1152 : index
    %2 = vector.load %arg9[%c0_1, %c1152] : memref<8x1280xbf16, #tpu.memory_space<vmem>>, vector<8x128xbf16>
    tpu.vector_store %arg9[%c0_1, %c1152], %0 {strides = array<i32>} : memref<8x1280xbf16, #tpu.memory_space<vmem>>, vector<8x128xbf16>,
    %c0_2 = arith.constant 0 : index
    %c0_3 = arith.constant 0 : index
    %c0_4 = arith.constant 0 : index
    %3 = vector.load %arg2[%c0_2, %c0_3, %c0_4] : memref<1x4x1024xbf16, #tpu.memory_space<vmem>>, vector<1x4x1024xbf16>
    %4 = vector.shape_cast %3 : vector<1x4x1024xbf16> to vector<4x1024xbf16>
    %c0_5 = arith.constant 0 : index
    %c128 = arith.constant 128 : index
    %5 = vector.load %arg9[%c0_5, %c128] : memref<8x1280xbf16, #tpu.memory_space<vmem>>, vector<4x1024xbf16>
    tpu.vector_store %arg9[%c0_5, %c128], %4 {strides = array<i32>} : memref<8x1280xbf16, #tpu.memory_space<vmem>>, vector<4x1024xbf16>,
    %c0_6 = arith.constant 0 : index
    %c0_7 = arith.constant 0 : index
    %6 = vector.load %arg4[%c0_6, %c0_7] : memref<4x8xbf16, #tpu.memory_space<vmem>>, vector<4x8xbf16>
    %c0_8 = arith.constant 0 : index
    %c0_9 = arith.constant 0 : index
    %c0_10 = arith.constant 0 : index
    %7 = vector.load %arg3[%c0_8, %c0_9, %c0_10] : memref<1x8x1024xf32, #tpu.memory_space<vmem>>, vector<1x8x1024xf32>
    %8 = vector.shape_cast %7 : vector<1x8x1024xf32> to vector<8x1024xf32>
    %9 = arith.truncf %8 : vector<8x1024xf32> to vector<8x1024xbf16>
    %cst_11 = arith.constant dense<0.000000e+00> : vector<4x1024xf32>
    %10 = tpu.matmul %6, %9, %cst_11 {dimension_numbers = #tpu.dot_dimension_numbers<[1], [0], [0], [1], [0, 0, 1, 1], [], []>} : vector<4x8xbf16>, vector<8x1024xbf16>, vector<4x1024xf32> -> vector<4x1024xf32>
    %c0_12 = arith.constant 0 : index
    %c0_13 = arith.constant 0 : index
    %11 = vector.load %arg5[%c0_12, %c0_13] : memref<4x1xf32, #tpu.memory_space<vmem>>, vector<4x1xf32>
    %12 = vector.broadcast %11 : vector<4x1xf32> to vector<4x1024xf32>
    %13 = arith.addf %10, %12 : vector<4x1024xf32>
    %cst_14 = arith.constant 0.000000e+00 : f32
    %14 = vector.broadcast %cst_14 : f32 to vector<4x1024xf32>
    %15 = arith.maximumf %13, %14 : vector<4x1024xf32>
    %16 = arith.truncf %15 : vector<4x1024xf32> to vector<4x1024xbf16>
    %c4 = arith.constant 4 : index
    %c128_15 = arith.constant 128 : index
    %17 = vector.load %arg9[%c4, %c128_15] : memref<8x1280xbf16, #tpu.memory_space<vmem>>, vector<4x1024xbf16>
    tpu.vector_store %arg9[%c4, %c128_15], %16 {strides = array<i32>} : memref<8x1280xbf16, #tpu.memory_space<vmem>>, vector<4x1024xbf16>,
    %c0_16 = arith.constant 0 : index
    %c0_17 = arith.constant 0 : index
    %18 = vector.load %arg1[%c0_16, %c0_17] : memref<2x1024xf32, #tpu.memory_space<vmem>>, vector<1x1024xf32>
    %19 = vector.shape_cast %18 : vector<1x1024xf32> to vector<1x1024xf32>
    %20 = vector.broadcast %19 : vector<1x1024xf32> to vector<8x1024xf32>
    %c1 = arith.constant 1 : index
    %c0_18 = arith.constant 0 : index
    %21 = vector.load %arg1[%c1, %c0_18] : memref<2x1024xf32, #tpu.memory_space<vmem>>, vector<1x1024xf32>
    %22 = vector.shape_cast %21 : vector<1x1024xf32> to vector<1x1024xf32>
    %23 = vector.broadcast %22 : vector<1x1024xf32> to vector<8x1024xf32>
    %cst_19 = arith.constant 0.000000e+00 : f32
    %24 = vector.broadcast %cst_19 : f32 to vector<8x1024xf32>
    %c0_20 = arith.constant 0 : index
    %c0_21 = arith.constant 0 : index
    %25 = vector.load %arg10[%c0_20, %c0_21] : memref<8x1024xf32, #tpu.memory_space<vmem>>, vector<8x1024xf32>
    tpu.vector_store %arg10[%c0_20, %c0_21], %24 {strides = array<i32>} : memref<8x1024xf32, #tpu.memory_space<vmem>>, vector<8x1024xf32>,
    %c0_22 = arith.constant 0 : index
    %c95 = arith.constant 95 : index
    %26 = vector.load %arg9[%c0_22, %c95] : memref<8x1280xbf16, #tpu.memory_space<vmem>>, vector<8x1024xbf16>
    %c0_23 = arith.constant 0 : index
    %c0_24 = arith.constant 0 : index
    %c0_25 = arith.constant 0 : index
    %27 = vector.load %arg6[%c0_23, %c0_24, %c0_25] : memref<9x8x8xbf16, #tpu.memory_space<vmem>>, vector<1x8x8xbf16>
    %28 = vector.shape_cast %27 : vector<1x8x8xbf16> to vector<8x8xbf16>
    %cst_26 = arith.constant dense<0.000000e+00> : vector<8x1024xf32>
    %29 = tpu.matmul %28, %26, %cst_26 {dimension_numbers = #tpu.dot_dimension_numbers<[1], [0], [0], [1], [0, 0, 1, 1], [], []>} : vector<8x8xbf16>, vector<8x1024xbf16>, vector<8x1024xf32> -> vector<8x1024xf32>
    %30 = arith.mulf %29, %20 : vector<8x1024xf32>
    %c0_27 = arith.constant 0 : index
    %c0_28 = arith.constant 0 : index
    %31 = vector.load %arg10[%c0_27, %c0_28] : memref<8x1024xf32, #tpu.memory_space<vmem>>, vector<8x1024xf32>
    %32 = arith.addf %31, %30 : vector<8x1024xf32>
    %c0_29 = arith.constant 0 : index
    %c0_30 = arith.constant 0 : index
    %33 = vector.load %arg10[%c0_29, %c0_30] : memref<8x1024xf32, #tpu.memory_space<vmem>>, vector<8x1024xf32>
    tpu.vector_store %arg10[%c0_29, %c0_30], %32 {strides = array<i32>} : memref<8x1024xf32, #tpu.memory_space<vmem>>, vector<8x1024xf32>,
    %c0_31 = arith.constant 0 : index
    %c96 = arith.constant 96 : index
    %34 = vector.load %arg9[%c0_31, %c96] : memref<8x1280xbf16, #tpu.memory_space<vmem>>, vector<8x1024xbf16>
    %c1_32 = arith.constant 1 : index
    %c0_33 = arith.constant 0 : index
    %c0_34 = arith.constant 0 : index
    %35 = vector.load %arg6[%c1_32, %c0_33, %c0_34] : memref<9x8x8xbf16, #tpu.memory_space<vmem>>, vector<1x8x8xbf16>
    %36 = vector.shape_cast %35 : vector<1x8x8xbf16> to vector<8x8xbf16>
    %cst_35 = arith.constant dense<0.000000e+00> : vector<8x1024xf32>
    %37 = tpu.matmul %36, %34, %cst_35 {dimension_numbers = #tpu.dot_dimension_numbers<[1], [0], [0], [1], [0, 0, 1, 1], [], []>} : vector<8x8xbf16>, vector<8x1024xbf16>, vector<8x1024xf32> -> vector<8x1024xf32>
    %c0_36 = arith.constant 0 : index
    %c0_37 = arith.constant 0 : index
    %38 = vector.load %arg10[%c0_36, %c0_37] : memref<8x1024xf32, #tpu.memory_space<vmem>>, vector<8x1024xf32>
    %39 = arith.addf %38, %37 : vector<8x1024xf32>
    %c0_38 = arith.constant 0 : index
    %c0_39 = arith.constant 0 : index
    %40 = vector.load %arg10[%c0_38, %c0_39] : memref<8x1024xf32, #tpu.memory_space<vmem>>, vector<8x1024xf32>
    tpu.vector_store %arg10[%c0_38, %c0_39], %39 {strides = array<i32>} : memref<8x1024xf32, #tpu.memory_space<vmem>>, vector<8x1024xf32>,
    %c0_40 = arith.constant 0 : index
    %c97 = arith.constant 97 : index
    %41 = vector.load %arg9[%c0_40, %c97] : memref<8x1280xbf16, #tpu.memory_space<vmem>>, vector<8x1024xbf16>
    %c2 = arith.constant 2 : index
    %c0_41 = arith.constant 0 : index
    %c0_42 = arith.constant 0 : index
    %42 = vector.load %arg6[%c2, %c0_41, %c0_42] : memref<9x8x8xbf16, #tpu.memory_space<vmem>>, vector<1x8x8xbf16>
    %43 = vector.shape_cast %42 : vector<1x8x8xbf16> to vector<8x8xbf16>
    %cst_43 = arith.constant dense<0.000000e+00> : vector<8x1024xf32>
    %44 = tpu.matmul %43, %41, %cst_43 {dimension_numbers = #tpu.dot_dimension_numbers<[1], [0], [0], [1], [0, 0, 1, 1], [], []>} : vector<8x8xbf16>, vector<8x1024xbf16>, vector<8x1024xf32> -> vector<8x1024xf32>
    %45 = arith.mulf %44, %23 : vector<8x1024xf32>
    %c0_44 = arith.constant 0 : index
    %c0_45 = arith.constant 0 : index
    %46 = vector.load %arg10[%c0_44, %c0_45] : memref<8x1024xf32, #tpu.memory_space<vmem>>, vector<8x1024xf32>
    %47 = arith.addf %46, %45 : vector<8x1024xf32>
    %c0_46 = arith.constant 0 : index
    %c0_47 = arith.constant 0 : index
    %48 = vector.load %arg10[%c0_46, %c0_47] : memref<8x1024xf32, #tpu.memory_space<vmem>>, vector<8x1024xf32>
    tpu.vector_store %arg10[%c0_46, %c0_47], %47 {strides = array<i32>} : memref<8x1024xf32, #tpu.memory_space<vmem>>, vector<8x1024xf32>,
    %c0_48 = arith.constant 0 : index
    %c127 = arith.constant 127 : index
    %49 = vector.load %arg9[%c0_48, %c127] : memref<8x1280xbf16, #tpu.memory_space<vmem>>, vector<8x1024xbf16>
    %c3 = arith.constant 3 : index
    %c0_49 = arith.constant 0 : index
    %c0_50 = arith.constant 0 : index
    %50 = vector.load %arg6[%c3, %c0_49, %c0_50] : memref<9x8x8xbf16, #tpu.memory_space<vmem>>, vector<1x8x8xbf16>
    %51 = vector.shape_cast %50 : vector<1x8x8xbf16> to vector<8x8xbf16>
    %cst_51 = arith.constant dense<0.000000e+00> : vector<8x1024xf32>
    %52 = tpu.matmul %51, %49, %cst_51 {dimension_numbers = #tpu.dot_dimension_numbers<[1], [0], [0], [1], [0, 0, 1, 1], [], []>} : vector<8x8xbf16>, vector<8x1024xbf16>, vector<8x1024xf32> -> vector<8x1024xf32>
    %53 = arith.mulf %52, %20 : vector<8x1024xf32>
    %c0_52 = arith.constant 0 : index
    %c0_53 = arith.constant 0 : index
    %54 = vector.load %arg10[%c0_52, %c0_53] : memref<8x1024xf32, #tpu.memory_space<vmem>>, vector<8x1024xf32>
    %55 = arith.addf %54, %53 : vector<8x1024xf32>
    %c0_54 = arith.constant 0 : index
    %c0_55 = arith.constant 0 : index
    %56 = vector.load %arg10[%c0_54, %c0_55] : memref<8x1024xf32, #tpu.memory_space<vmem>>, vector<8x1024xf32>
    tpu.vector_store %arg10[%c0_54, %c0_55], %55 {strides = array<i32>} : memref<8x1024xf32, #tpu.memory_space<vmem>>, vector<8x1024xf32>,
    %c0_56 = arith.constant 0 : index
    %c128_57 = arith.constant 128 : index
    %57 = vector.load %arg9[%c0_56, %c128_57] : memref<8x1280xbf16, #tpu.memory_space<vmem>>, vector<8x1024xbf16>
    %c4_58 = arith.constant 4 : index
    %c0_59 = arith.constant 0 : index
    %c0_60 = arith.constant 0 : index
    %58 = vector.load %arg6[%c4_58, %c0_59, %c0_60] : memref<9x8x8xbf16, #tpu.memory_space<vmem>>, vector<1x8x8xbf16>
    %59 = vector.shape_cast %58 : vector<1x8x8xbf16> to vector<8x8xbf16>
    %cst_61 = arith.constant dense<0.000000e+00> : vector<8x1024xf32>
    %60 = tpu.matmul %59, %57, %cst_61 {dimension_numbers = #tpu.dot_dimension_numbers<[1], [0], [0], [1], [0, 0, 1, 1], [], []>} : vector<8x8xbf16>, vector<8x1024xbf16>, vector<8x1024xf32> -> vector<8x1024xf32>
    %c0_62 = arith.constant 0 : index
    %c0_63 = arith.constant 0 : index
    %61 = vector.load %arg10[%c0_62, %c0_63] : memref<8x1024xf32, #tpu.memory_space<vmem>>, vector<8x1024xf32>
    %62 = arith.addf %61, %60 : vector<8x1024xf32>
    %c0_64 = arith.constant 0 : index
    %c0_65 = arith.constant 0 : index
    %63 = vector.load %arg10[%c0_64, %c0_65] : memref<8x1024xf32, #tpu.memory_space<vmem>>, vector<8x1024xf32>
    tpu.vector_store %arg10[%c0_64, %c0_65], %62 {strides = array<i32>} : memref<8x1024xf32, #tpu.memory_space<vmem>>, vector<8x1024xf32>,
    %c0_66 = arith.constant 0 : index
    %c129 = arith.constant 129 : index
    %64 = vector.load %arg9[%c0_66, %c129] : memref<8x1280xbf16, #tpu.memory_space<vmem>>, vector<8x1024xbf16>
    %c5 = arith.constant 5 : index
    %c0_67 = arith.constant 0 : index
    %c0_68 = arith.constant 0 : index
    %65 = vector.load %arg6[%c5, %c0_67, %c0_68] : memref<9x8x8xbf16, #tpu.memory_space<vmem>>, vector<1x8x8xbf16>
    %66 = vector.shape_cast %65 : vector<1x8x8xbf16> to vector<8x8xbf16>
    %cst_69 = arith.constant dense<0.000000e+00> : vector<8x1024xf32>
    %67 = tpu.matmul %66, %64, %cst_69 {dimension_numbers = #tpu.dot_dimension_numbers<[1], [0], [0], [1], [0, 0, 1, 1], [], []>} : vector<8x8xbf16>, vector<8x1024xbf16>, vector<8x1024xf32> -> vector<8x1024xf32>
    %68 = arith.mulf %67, %23 : vector<8x1024xf32>
    %c0_70 = arith.constant 0 : index
    %c0_71 = arith.constant 0 : index
    %69 = vector.load %arg10[%c0_70, %c0_71] : memref<8x1024xf32, #tpu.memory_space<vmem>>, vector<8x1024xf32>
    %70 = arith.addf %69, %68 : vector<8x1024xf32>
    %c0_72 = arith.constant 0 : index
    %c0_73 = arith.constant 0 : index
    %71 = vector.load %arg10[%c0_72, %c0_73] : memref<8x1024xf32, #tpu.memory_space<vmem>>, vector<8x1024xf32>
    tpu.vector_store %arg10[%c0_72, %c0_73], %70 {strides = array<i32>} : memref<8x1024xf32, #tpu.memory_space<vmem>>, vector<8x1024xf32>,
    %c0_74 = arith.constant 0 : index
    %c159 = arith.constant 159 : index
    %72 = vector.load %arg9[%c0_74, %c159] : memref<8x1280xbf16, #tpu.memory_space<vmem>>, vector<8x1024xbf16>
    %c6 = arith.constant 6 : index
    %c0_75 = arith.constant 0 : index
    %c0_76 = arith.constant 0 : index
    %73 = vector.load %arg6[%c6, %c0_75, %c0_76] : memref<9x8x8xbf16, #tpu.memory_space<vmem>>, vector<1x8x8xbf16>
    %74 = vector.shape_cast %73 : vector<1x8x8xbf16> to vector<8x8xbf16>
    %cst_77 = arith.constant dense<0.000000e+00> : vector<8x1024xf32>
    %75 = tpu.matmul %74, %72, %cst_77 {dimension_numbers = #tpu.dot_dimension_numbers<[1], [0], [0], [1], [0, 0, 1, 1], [], []>} : vector<8x8xbf16>, vector<8x1024xbf16>, vector<8x1024xf32> -> vector<8x1024xf32>
    %76 = arith.mulf %75, %20 : vector<8x1024xf32>
    %c0_78 = arith.constant 0 : index
    %c0_79 = arith.constant 0 : index
    %77 = vector.load %arg10[%c0_78, %c0_79] : memref<8x1024xf32, #tpu.memory_space<vmem>>, vector<8x1024xf32>
    %78 = arith.addf %77, %76 : vector<8x1024xf32>
    %c0_80 = arith.constant 0 : index
    %c0_81 = arith.constant 0 : index
    %79 = vector.load %arg10[%c0_80, %c0_81] : memref<8x1024xf32, #tpu.memory_space<vmem>>, vector<8x1024xf32>
    tpu.vector_store %arg10[%c0_80, %c0_81], %78 {strides = array<i32>} : memref<8x1024xf32, #tpu.memory_space<vmem>>, vector<8x1024xf32>,
    %c0_82 = arith.constant 0 : index
    %c160 = arith.constant 160 : index
    %80 = vector.load %arg9[%c0_82, %c160] : memref<8x1280xbf16, #tpu.memory_space<vmem>>, vector<8x1024xbf16>
    %c7 = arith.constant 7 : index
    %c0_83 = arith.constant 0 : index
    %c0_84 = arith.constant 0 : index
    %81 = vector.load %arg6[%c7, %c0_83, %c0_84] : memref<9x8x8xbf16, #tpu.memory_space<vmem>>, vector<1x8x8xbf16>
    %82 = vector.shape_cast %81 : vector<1x8x8xbf16> to vector<8x8xbf16>
    %cst_85 = arith.constant dense<0.000000e+00> : vector<8x1024xf32>
    %83 = tpu.matmul %82, %80, %cst_85 {dimension_numbers = #tpu.dot_dimension_numbers<[1], [0], [0], [1], [0, 0, 1, 1], [], []>} : vector<8x8xbf16>, vector<8x1024xbf16>, vector<8x1024xf32> -> vector<8x1024xf32>
    %c0_86 = arith.constant 0 : index
    %c0_87 = arith.constant 0 : index
    %84 = vector.load %arg10[%c0_86, %c0_87] : memref<8x1024xf32, #tpu.memory_space<vmem>>, vector<8x1024xf32>
    %85 = arith.addf %84, %83 : vector<8x1024xf32>
    %c0_88 = arith.constant 0 : index
    %c0_89 = arith.constant 0 : index
    %86 = vector.load %arg10[%c0_88, %c0_89] : memref<8x1024xf32, #tpu.memory_space<vmem>>, vector<8x1024xf32>
    tpu.vector_store %arg10[%c0_88, %c0_89], %85 {strides = array<i32>} : memref<8x1024xf32, #tpu.memory_space<vmem>>, vector<8x1024xf32>,
    %c0_90 = arith.constant 0 : index
    %c161 = arith.constant 161 : index
    %87 = vector.load %arg9[%c0_90, %c161] : memref<8x1280xbf16, #tpu.memory_space<vmem>>, vector<8x1024xbf16>
    %c8 = arith.constant 8 : index
    %c0_91 = arith.constant 0 : index
    %c0_92 = arith.constant 0 : index
    %88 = vector.load %arg6[%c8, %c0_91, %c0_92] : memref<9x8x8xbf16, #tpu.memory_space<vmem>>, vector<1x8x8xbf16>
    %89 = vector.shape_cast %88 : vector<1x8x8xbf16> to vector<8x8xbf16>
    %cst_93 = arith.constant dense<0.000000e+00> : vector<8x1024xf32>
    %90 = tpu.matmul %89, %87, %cst_93 {dimension_numbers = #tpu.dot_dimension_numbers<[1], [0], [0], [1], [0, 0, 1, 1], [], []>} : vector<8x8xbf16>, vector<8x1024xbf16>, vector<8x1024xf32> -> vector<8x1024xf32>
    %91 = arith.mulf %90, %23 : vector<8x1024xf32>
    %c0_94 = arith.constant 0 : index
    %c0_95 = arith.constant 0 : index
    %92 = vector.load %arg10[%c0_94, %c0_95] : memref<8x1024xf32, #tpu.memory_space<vmem>>, vector<8x1024xf32>
    %93 = arith.addf %92, %91 : vector<8x1024xf32>
    %c0_96 = arith.constant 0 : index
    %c0_97 = arith.constant 0 : index
    %94 = vector.load %arg10[%c0_96, %c0_97] : memref<8x1024xf32, #tpu.memory_space<vmem>>, vector<8x1024xf32>
    tpu.vector_store %arg10[%c0_96, %c0_97], %93 {strides = array<i32>} : memref<8x1024xf32, #tpu.memory_space<vmem>>, vector<8x1024xf32>,
    %c0_98 = arith.constant 0 : index
    %c0_99 = arith.constant 0 : index
    %95 = vector.load %arg10[%c0_98, %c0_99] : memref<8x1024xf32, #tpu.memory_space<vmem>>, vector<8x1024xf32>
    %c0_100 = arith.constant 0 : index
    %c0_101 = arith.constant 0 : index
    %96 = vector.load %arg7[%c0_100, %c0_101] : memref<8x1xf32, #tpu.memory_space<vmem>>, vector<8x1xf32>
    %97 = vector.broadcast %96 : vector<8x1xf32> to vector<8x1024xf32>
    %98 = arith.addf %95, %97 : vector<8x1024xf32>
    %cst_102 = arith.constant 0.000000e+00 : f32
    %99 = vector.broadcast %cst_102 : f32 to vector<8x1024xf32>
    %100 = arith.maximumf %98, %99 : vector<8x1024xf32>
    %c0_103 = arith.constant 0 : index
    %c0_104 = arith.constant 0 : index
    %c0_105 = arith.constant 0 : index
    %101 = vector.load %arg8[%c0_103, %c0_104, %c0_105] : memref<1x8x1024xf32, #tpu.memory_space<vmem>>, vector<1x8x1024xf32>
    %102 = vector.shape_cast %101 : vector<1x8x1024xf32> to vector<8x1024xf32>
    %103 = vector.shape_cast %100 : vector<8x1024xf32> to vector<1x8x1024xf32>
    tpu.vector_store %arg8[%c0_103, %c0_104, %c0_105], %103 {strides = array<i32>} : memref<1x8x1024xf32, #tpu.memory_space<vmem>>, vector<1x8x1024xf32>,
    return
  }
  func.func @transform_0(%arg0: i32) -> (i32, i32) {
    %c0_i32 = arith.constant 0 : i32
    %c0_i32_0 = arith.constant 0 : i32
    %c0_i32_1 = arith.constant 0 : i32
    return %c0_i32, %c0_i32_0 : i32, i32
  }
  func.func @transform_1(%arg0: i32) -> (i32, i32, i32) {
    %c0_i32 = arith.constant 0 : i32
    %c0_i32_0 = arith.constant 0 : i32
    %c0_i32_1 = arith.constant 0 : i32
    return %arg0, %c0_i32, %c0_i32_0 : i32, i32, i32
  }
  func.func @transform_2(%arg0: i32) -> (i32, i32, i32) {
    %c0_i32 = arith.constant 0 : i32
    %c0_i32_0 = arith.constant 0 : i32
    %c0_i32_1 = arith.constant 0 : i32
    return %arg0, %c0_i32, %c0_i32_0 : i32, i32, i32
  }
  func.func @transform_3(%arg0: i32) -> (i32, i32) {
    %c0_i32 = arith.constant 0 : i32
    %c0_i32_0 = arith.constant 0 : i32
    %c0_i32_1 = arith.constant 0 : i32
    return %c0_i32, %c0_i32_0 : i32, i32
  }
  func.func @transform_4(%arg0: i32) -> (i32, i32) {
    %c0_i32 = arith.constant 0 : i32
    %c0_i32_0 = arith.constant 0 : i32
    %c0_i32_1 = arith.constant 0 : i32
    return %c0_i32, %c0_i32_0 : i32, i32
  }
  func.func @transform_5(%arg0: i32) -> (i32, i32, i32) {
    %c0_i32 = arith.constant 0 : i32
    %c0_i32_0 = arith.constant 0 : i32
    %c0_i32_1 = arith.constant 0 : i32
    %c0_i32_2 = arith.constant 0 : i32
    return %c0_i32, %c0_i32_0, %c0_i32_1 : i32, i32, i32
  }
  func.func @transform_6(%arg0: i32) -> (i32, i32) {
    %c0_i32 = arith.constant 0 : i32
    %c0_i32_0 = arith.constant 0 : i32
    %c0_i32_1 = arith.constant 0 : i32
    return %c0_i32, %c0_i32_0 : i32, i32
  }
  func.func @transform_7(%arg0: i32) -> (i32, i32, i32) {
    %c0_i32 = arith.constant 0 : i32
    %c0_i32_0 = arith.constant 0 : i32
    %c0_i32_1 = arith.constant 0 : i32
    return %arg0, %c0_i32, %c0_i32_0 : i32, i32, i32
  }
}

</mosaic_0001>

<llo_original>
// kernel: tile.0
$region0: #{tile.0}
  %s0 = inlined_call_operand.vmem [shape: f32[4,4], index: 0, kind: input, shape index: {}]
  %s1 = inlined_call_operand.vmem [shape: f32[16,1], index: 1, kind: output, shape index: {}]
  $region1: #{tile.0} parent=0
    #allocation0 [shape = 'u8[4096]{0}', space=vmem, size = 0x1000, scoped, tag = 'scoped mem for input reshape']
    %s3 = sshllo.u32 0, 4
    %v4 = vld [vmem:[%s0] sm:%s3]
    %5 = vst [vmem:[#allocation0] sm:%s3] %v4
    %v6 = vld [vmem:[#allocation0] sm:$0xf]
    %vm7 = vcmask 7168
    %8 = vst.msk [vmem:[%s1] ss:$4 sm:$0xf] %vm7, %v6
    %v9 = vld [vmem:[#allocation0] sm:$0xf]
    %10 = vrot.lane.b32.xlu0 %v9, 127
    %v11 = vpop.permute.xlu0 %10
    %vm12 = vcmask 7168
    %s13 = scalar_lea.vmem %s1, 1
    %14 = vst.msk [vmem:[%s13] ss:$4 sm:$0xf] %vm12, %v11
    %v15 = vld [vmem:[#allocation0] sm:$0xf]
    %16 = vrot.lane.b32.xlu0 %v15, 126
    %v17 = vpop.permute.xlu0 %16
    %vm18 = vcmask 7168
    %s19 = scalar_lea.vmem %s1, 2
    %20 = vst.msk [vmem:[%s19] ss:$4 sm:$0xf] %vm18, %v17
    %v21 = vld [vmem:[#allocation0] sm:$0xf]
    %22 = vrot.lane.b32.xlu0 %v21, 125
    %v23 = vpop.permute.xlu0 %22
    %vm24 = vcmask 7168
    %s25 = scalar_lea.vmem %s1, 3
    %26 = vst.msk [vmem:[%s25] ss:$4 sm:$0xf] %vm24, %v23

// kernel: tile.8
$region0: #{tile.8}
  #allocation0 [shape = 's32[1]{0}', space=sflag, size = 0x4, scoped, tag = 'scoped memory for tile.8']
  %s0 = inlined_call_operand.vmem [shape: f32[4], index: 0, kind: input, shape index: {}]
  %s1 = inlined_call_operand.vmem [shape: f32[4,4], index: 1, kind: output, shape index: {}]
  // Predicated region
  $region2: #{tile.8} parent=0 // pred_check
    _
  $region3: #{tile.8} parent=0 // pred_check_branch
    %3 = sbr.rel (0) target = $region5
  $region4: #{tile.8} parent=0 // pred_region
    _
  $region5: #{tile.8} parent=0 // pred_fallthru
    _
  %v4 = vld [vmem:[%s0] ss:$0 sm:$0xff]
  %5 = vst [vmem:[%s1] sm:$0xf] %v4

// kernel: decoder_block_forward.2
$region0: #{decoder_block_forward.2}
  #allocation0 [shape = 'u32[]', space=smem, size = 0x4, offset = 0x4, fixed_abs, tag = 'smem constant byte address 0x4 - core index']
  #allocation1 [shape = 'u32[144,128]{1,0:T(1,128)}', space=vmem, size = 0x12000, scoped, tag = 'internal scratch']
  %s0 = inlined_call_operand.vmem [shape: f32[2,4,256], index: 0, kind: input, shape index: {}]
  %s1 = inlined_call_operand.vmem [shape: bf16[16,4], index: 1, kind: input, shape index: {}]
  %s2 = inlined_call_operand.vmem [shape: f32[16,1], index: 2, kind: input, shape index: {}]
  %s3 = inlined_call_operand.vmem [shape: bf16[2,16,256], index: 3, kind: output, shape index: {}]
  %s4 = sld [smem:[#allocation0]]
  $region45: #{decoder_block_forward.2} parent=0
    _
  %s6 = ssub.s32 1, %s4
  %s7 = scalar_select 0, %s6, %s4
  loop: start=0, step=1, limit=4
  $region2: #{decoder_block_forward.2} parent=0 // loop_pre_header
    _
  $region3: #{decoder_block_forward.2} parent=0 // loop_header
    %s9 = sphi 0, %s13
    %p10 = scmp.ge.s32.totalorder %s9, 4
    %s19 = sphi 0, %s21
    %s22 = sphi 0, %s19
    %s23 = sphi 0, %s22
    %s39 = sphi 0, %s23
    %s43 = sphi 0, %s43
    %s45 = sphi 0, %s43
    %s46 = sphi 0, %s45
    %s60 = sphi 0, %s46
    %s64 = sphi 0, %s64
    %s66 = sphi 0, %s64
    %s67 = sphi 0, %s66
    %s81 = sphi 0, %s67
    %s87 = sphi 0, %s89
    %s90 = sphi 0, %s87
    %s91 = sphi 0, %s90
    %s107 = sphi 0, %s91
  $region4: #{decoder_block_forward.2} parent=0 // loop_header_branch
    %12 = sbr.rel (%p10) target = $region8
  $region5: #{decoder_block_forward.2} parent=0 // loop_body
    %s14 = ssub.s32 %s9, 1
    %s15 = ssub.s32 %s9, 2
    %s16 = sadd.s32 %s9, 1
    %s17 = ssub.s32 %s9, %s16
    %p18 = scmp.eq.s32.totalorder %s17, 0
    %s20 = sadd.s32 %s19, 1
    %s21 = scalar_select %p18, %s19, %s20
    %p24 = pneg %p18
    %p25 = scmp.eq.s32.totalorder %s9, 1
    %p26 = por %p24, %p25
    %p27 = scmp.ne.s32.totalorder %s19, %s22
    %p28 = scmp.eq.s32.totalorder %s9, 0
    %p29 = por %p27, %p28
    %p30 = scmp.ne.s32.totalorder %s19, %s22
    %p31 = scmp.eq.s32.totalorder %s14, 1
    %p32 = por %p30, %p31
    %p33 = scmp.ne.s32.totalorder %s22, %s23
    %p34 = scmp.eq.s32.totalorder %s14, 0
    %p35 = por %p33, %p34
    %p36 = scmp.ne.s32.totalorder %s22, %s23
    %p37 = scmp.eq.s32.totalorder %s15, 1
    %p38 = por %p36, %p37
    %p40 = scmp.ne.s32.totalorder %s23, %s39
    %p41 = scmp.eq.s32.totalorder %s15, 0
    %p42 = por %p40, %p41
    %s44 = sadd.s32 %s43, 1
    %p47 = scmp.eq.s32.totalorder %s9, 1
    %p48 = scmp.ne.s32.totalorder %s43, %s45
    %p49 = scmp.eq.s32.totalorder %s9, 0
    %p50 = por %p48, %p49
    %p51 = scmp.ne.s32.totalorder %s43, %s45
    %p52 = scmp.eq.s32.totalorder %s14, 1
    %p53 = por %p51, %p52
    %p54 = scmp.ne.s32.totalorder %s45, %s46
    %p55 = scmp.eq.s32.totalorder %s14, 0
    %p56 = por %p54, %p55
    %p57 = scmp.ne.s32.totalorder %s45, %s46
    %p58 = scmp.eq.s32.totalorder %s15, 1
    %p59 = por %p57, %p58
    %p61 = scmp.ne.s32.totalorder %s46, %s60
    %p62 = scmp.eq.s32.totalorder %s15, 0
    %p63 = por %p61, %p62
    %s65 = sadd.s32 %s64, 1
    %p68 = scmp.eq.s32.totalorder %s9, 1
    %p69 = scmp.ne.s32.totalorder %s64, %s66
    %p70 = scmp.eq.s32.totalorder %s9, 0
    %p71 = por %p69, %p70
    %p72 = scmp.ne.s32.totalorder %s64, %s66
    %p73 = scmp.eq.s32.totalorder %s14, 1
    %p74 = por %p72, %p73
    %p75 = scmp.ne.s32.totalorder %s66, %s67
    %p76 = scmp.eq.s32.totalorder %s14, 0
    %p77 = por %p75, %p76
    %p78 = scmp.ne.s32.totalorder %s66, %s67
    %p79 = scmp.eq.s32.totalorder %s15, 1
    %p80 = por %p78, %p79
    %p82 = scmp.ne.s32.totalorder %s67, %s81
    %p83 = scmp.eq.s32.totalorder %s15, 0
    %p84 = por %p82, %p83
    %s85 = ssub.s32 %s9, %s16
    %p86 = scmp.eq.s32.totalorder %s85, 0
    %s88 = sadd.s32 %s87, 1
    %s89 = scalar_select %p86, %s87, %s88
    %p92 = pneg %p86
    %p93 = scmp.eq.s32.totalorder %s9, 1
    %p94 = por %p92, %p93
    %p95 = scmp.ne.s32.totalorder %s87, %s90
    %p96 = scmp.eq.s32.totalorder %s9, 0
    %p97 = por %p95, %p96
    %p98 = scmp.ne.s32.totalorder %s87, %s90
    %p99 = scmp.eq.s32.totalorder %s14, 1
    %p100 = por %p98, %p99
    %p101 = scmp.ne.s32.totalorder %s90, %s91
    %p102 = scmp.eq.s32.totalorder %s14, 0
    %p103 = por %p101, %p102
    %p104 = scmp.ne.s32.totalorder %s90, %s91
    %p105 = scmp.eq.s32.totalorder %s15, 1
    %p106 = por %p104, %p105
    %p108 = scmp.ne.s32.totalorder %s91, %s107
    %p109 = scmp.eq.s32.totalorder %s15, 0
    %p110 = por %p108, %p109
    %p111 = scmp.le.s32.totalorder 1, %s9
    %p112 = scmp.lt.s32.totalorder %s9, 3
    %p113 = pnand %p111, %p112
    %p114 = pneg %p113
    // Predicated region
    $region9: #{decoder_block_forward.2} parent=5 // pred_check
      _
    $region10: #{decoder_block_forward.2} parent=5 // pred_check_branch
      %116 = sbr.rel (%p113) target = $region12
    $region11: #{decoder_block_forward.2} parent=5 // pred_region
      %s117 = ssub.s32 %s9, 1
      // Predicated region
      $region13: #{decoder_block_forward.2} parent=11 // pred_check
        %p118 = pneg %p56
      $region14: #{decoder_block_forward.2} parent=11 // pred_check_branch
        %120 = sbr.rel (%p118) target = $region16
      $region15: #{decoder_block_forward.2} parent=11 // pred_region
        _
      $region16: #{decoder_block_forward.2} parent=11 // pred_fallthru
        _
      // Predicated region
      $region17: #{decoder_block_forward.2} parent=11 // pred_check
        %p121 = pneg %p77
      $region18: #{decoder_block_forward.2} parent=11 // pred_check_branch
        %123 = sbr.rel (%p121) target = $region20
      $region19: #{decoder_block_forward.2} parent=11 // pred_region
        _
      $region20: #{decoder_block_forward.2} parent=11 // pred_fallthru
        _
    $region12: #{decoder_block_forward.2} parent=5 // pred_fallthru
      _
    %p124 = scmp.lt.s32.totalorder %s9, 2
    // Predicated region
    $region21: #{decoder_block_forward.2} parent=5 // pred_check
      %p125 = pneg %p124
    $region22: #{decoder_block_forward.2} parent=5 // pred_check_branch
      %127 = sbr.rel (%p125) target = $region24
    $region23: #{decoder_block_forward.2} parent=5 // pred_region
      // Predicated region
      $region25: #{decoder_block_forward.2} parent=23 // pred_check
        %p128 = pneg %p29
      $region26: #{decoder_block_forward.2} parent=23 // pred_check_branch
        %130 = sbr.rel (%p128) target = $region28
      $region27: #{decoder_block_forward.2} parent=23 // pred_region
        %p131 = scmp.lt.s32.totalorder %s9, 1
        %s132 = scalar_select %p131, %s9, 1
        %s133 = smul.addr %s132, 2
        %s134 = smul.addr %s133, 4
        %s135 = scalar_lea.vmem %s0, %s134
      $region28: #{decoder_block_forward.2} parent=23 // pred_fallthru
        _
    $region24: #{decoder_block_forward.2} parent=5 // pred_fallthru
      _
    %p136 = scmp.le.s32.totalorder 1, %s9
    %p137 = scmp.lt.s32.totalorder %s9, 3
    %p138 = pnand %p136, %p137
    %p139 = pneg %p138
    // Predicated region
    $region29: #{decoder_block_forward.2} parent=5 // pred_check
      _
    $region30: #{decoder_block_forward.2} parent=5 // pred_check_branch
      %141 = sbr.rel (%p138) target = $region32
    $region31: #{decoder_block_forward.2} parent=5 // pred_region
      %s142 = ssub.s32 %s9, 1
      %p143 = scmp.lt.s32.totalorder %s14, 1
      %s144 = scalar_select %p143, %s14, 1
      %s145 = smul.addr %s144, 2
      %s146 = smul.addr %s145, 4
      %s147 = scalar_lea.vmem %s0, %s146
      %p148 = pneg %p35
      %p149 = pneg %p32
      %p150 = pneg %p56
      %p151 = pneg %p53
      %p152 = pneg %p77
      %p153 = pneg %p74
      %p154 = pneg %p103
      %p155 = pneg %p100
      %p156 = scmp.lt.s32.totalorder %s14, 1
      %s157 = scalar_select %p156, %s14, 1
      %s158 = smul.addr %s157, 4
      %s159 = smul.addr %s158, 4
      %s160 = scalar_lea.vmem %s3, %s159
      %p161 = scmp.lt.s32.totalorder %s14, 1
      %s162 = scalar_select %p161, %s14, 1
      %s163 = smul.addr %s162, 2
      %s164 = smul.addr %s163, 4
      %s165 = scalar_lea.vmem %s0, %s164
      %p166 = scmp.lt.s32.totalorder %s14, 1
      %s167 = scalar_select %p166, %s14, 1
      %s168 = smul.addr %s167, 4
      %s169 = smul.addr %s168, 4
      %s170 = scalar_lea.vmem %s3, %s169
      %v172 = vld [vmem:[%s165] sm:$0xff]
      %v174 = vcombine.high %v172, %v172
      %v176 = vpack.c.bf16 %v172, %v172
      %v177 = vpack.c.bf16 %v174, %v174
      %v178 = vld [vmem:[%s1] sm:$0xf]
      %v179 = vld [vmem:[%s1 + $0x4] sm:$0xf]
      %v180 = vld [vmem:[%s2] sm:$0xff]
      %v181 = vld [vmem:[%s2 + $0x8] sm:$0xff]
      %183 = vset.pattern.permute.xlu0 0
      %184 = vperm.xlu0 %183, %v180
      %v185 = vpop.permute.xlu0 %184
      %188 = vset.pattern.permute.xlu0 0
      %189 = vperm.xlu0 %188, %v181
      %v190 = vpop.permute.xlu0 %189
      %v194 = vunpack.c.l.b16 %v178
      %v195 = vunpack.c.l.b16 %v179
      %v196 = vpack.c.b16 %v195, %v194
      %vm197 = vcmask 31744
      %v199 = vsel %vm197, %v196, 0
      %vm201 = vcmask 1041408
      %v203 = vsel %vm201, %v176, 0
      %v206 = vsel %vm201, %v177, 0
      %208 = vmatprep.subr.bf16.mxu0 %v206
      %209 = vmatpush1.bf16.msra.mxu0 %v203
      %210 = vmatprep.subr.bf16.mxu0 0
      %211 = vmatpush1.bf16.msra.mxu0 0
      %212 = vmatprep.subr.bf16.mxu0 0
      %213 = vmatpush1.bf16.msra.mxu0 0
      %214 = vmatprep.subr.bf16.mxu0 0
      %215 = vmatpush1.bf16.msra.mxu0 0
      %216 = vmatprep.subr.bf16.mxu0 0
      %217 = vmatpush1.bf16.msra.mxu0 0
      %218 = vmatprep.subr.bf16.mxu0 0
      %219 = vmatpush1.bf16.msra.mxu0 0
      %220 = vmatprep.subr.bf16.mxu0 0
      %221 = vmatpush1.bf16.msra.mxu0 0
      %222 = vmatprep.subr.bf16.mxu0 0
      %223 = vmatpush1.bf16.msra.mxu0 0
      %224 = vmatprep.subr.bf16.mxu0 0
      %225 = vmatpush1.bf16.msra.mxu0 0
      %226 = vmatprep.subr.bf16.mxu0 0
      %227 = vmatpush1.bf16.msra.mxu0 0
      %228 = vmatprep.subr.bf16.mxu0 0
      %229 = vmatpush1.bf16.msra.mxu0 0
      %230 = vmatprep.subr.bf16.mxu0 0
      %231 = vmatpush1.bf16.msra.mxu0 0
      %232 = vmatprep.subr.bf16.mxu0 0
      %233 = vmatpush1.bf16.msra.mxu0 0
      %234 = vmatprep.subr.bf16.mxu0 0
      %235 = vmatpush1.bf16.msra.mxu0 0
      %236 = vmatprep.subr.bf16.mxu0 0
      %237 = vmatpush1.bf16.msra.mxu0 0
      %238 = vmatprep.subr.bf16.mxu0 0
      %239 = vmatpush1.bf16.msra.mxu0 0
      %240 = vmatprep.mubr.bf16.mxu0 0
      %241 = vmatmul.mubr.bf16.gmra.mrb[0].mxu0 %v199
      %v242 = vpop.f32.mrb[0].mxu0
      %v243 = vadd.f32 %v185, %v242
      %v244 = vpop.f32.mrb[0].mxu0
      %v245 = vadd.f32 %v185, %v244
      %v246 = vpop.f32.mrb[0].mxu0
      %v247 = vadd.f32 %v190, %v246
      %v248 = vpop.f32.mrb[0].mxu0
      %v249 = vadd.f32 %v190, %v248
      %250 = vdwg.mxu0
      %v251 = vpack.c.bf16 %v247, %v243
      %v252 = vpack.c.bf16 %v249, %v245
      %v255 = vunpack.c.l.b16 %v251
      %v256 = vunpack.c.l.b16 %v252
      %v257 = vunpack.c.h.b16 %v251
      %v258 = vunpack.c.h.b16 %v252
      %v259 = vpack.c.b16 %v256, %v255
      %v260 = vpack.c.b16 %v258, %v257
      %263 = vst [vmem:[%s170] sm:$0xff] %v259
      %264 = vst [vmem:[%s170 + $0x8] sm:$0xff] %v260
      %p265 = scmp.lt.s32.totalorder %s14, 1
      %s266 = scalar_select %p265, %s14, 1
      %s267 = smul.addr %s266, 4
      %s268 = smul.addr %s267, 4
      %s269 = scalar_lea.vmem %s3, %s268
      // Predicated region
      $region33: #{decoder_block_forward.2} parent=31 // pred_check
        %p270 = pneg %p100
      $region34: #{decoder_block_forward.2} parent=31 // pred_check_branch
        %272 = sbr.rel (%p270) target = $region36
      $region35: #{decoder_block_forward.2} parent=31 // pred_region
        _
      $region36: #{decoder_block_forward.2} parent=31 // pred_fallthru
        _
    $region32: #{decoder_block_forward.2} parent=5 // pred_fallthru
      _
    %p273 = scmp.le.s32.totalorder 2, %s9
    // Predicated region
    $region37: #{decoder_block_forward.2} parent=5 // pred_check
      %p274 = pneg %p273
    $region38: #{decoder_block_forward.2} parent=5 // pred_check_branch
      %276 = sbr.rel (%p274) target = $region40
    $region39: #{decoder_block_forward.2} parent=5 // pred_region
      %s277 = ssub.s32 %s9, 2
      // Predicated region
      $region41: #{decoder_block_forward.2} parent=39 // pred_check
        %p278 = pneg %p106
      $region42: #{decoder_block_forward.2} parent=39 // pred_check_branch
        %280 = sbr.rel (%p278) target = $region44
      $region43: #{decoder_block_forward.2} parent=39 // pred_region
        %p281 = scmp.lt.s32.totalorder %s15, 1
        %s282 = scalar_select %p281, %s15, 1
        %s283 = smul.addr %s282, 4
        %s284 = smul.addr %s283, 4
        %s285 = scalar_lea.vmem %s3, %s284
      $region44: #{decoder_block_forward.2} parent=39 // pred_fallthru
        _
    $region40: #{decoder_block_forward.2} parent=5 // pred_fallthru
      _
  $region6: #{decoder_block_forward.2} parent=0 // loop_footer
    %s13 = sadd.s32 1, %s9
  $region7: #{decoder_block_forward.2} parent=0 // loop_footer_branch
    %8 = sbr.rel target = $region3
  $region8: #{decoder_block_forward.2} parent=0 // loop_exit
    _

// kernel: decoder_block_forward.3
$region0: #{decoder_block_forward.3}
  #allocation0 [shape = 'u32[]', space=smem, size = 0x4, offset = 0x4, fixed_abs, tag = 'smem constant byte address 0x4 - core index']
  #allocation1 [shape = 'u32[144,128]{1,0:T(1,128)}', space=vmem, size = 0x12000, scoped, tag = 'internal scratch']
  #allocation2 [shape = 'bf16[8,1280]{1,0:T(8,128)(2,1)}', space=vmem, size = 0x5000, scoped, tag = 'scratch operand']
  #allocation3 [shape = 'f32[8,1024]{1,0:T(8,128)}', space=vmem, size = 0x8000, scoped, tag = 'scratch operand']
  %s0 = inlined_call_operand.vmem [shape: f32[2,1024], index: 0, kind: input, shape index: {}]
  %s1 = inlined_call_operand.vmem [shape: bf16[2,4,1024], index: 1, kind: input, shape index: {}]
  %s2 = inlined_call_operand.vmem [shape: f32[2,8,1024], index: 2, kind: input, shape index: {}]
  %s3 = inlined_call_operand.vmem [shape: bf16[4,8], index: 3, kind: input, shape index: {}]
  %s4 = inlined_call_operand.vmem [shape: f32[4,1], index: 4, kind: input, shape index: {}]
  %s5 = inlined_call_operand.vmem [shape: bf16[9,8,8], index: 5, kind: input, shape index: {}]
  %s6 = inlined_call_operand.vmem [shape: f32[8,1], index: 6, kind: input, shape index: {}]
  %s7 = inlined_call_operand.vmem [shape: f32[2,8,1024], index: 7, kind: output, shape index: {}]
  %s8 = sld [smem:[#allocation0]]
  $region61: #{decoder_block_forward.3} parent=0
    _
  %s10 = ssub.s32 1, %s8
  %s11 = scalar_select 0, %s10, %s8
  loop: start=0, step=1, limit=4
  $region2: #{decoder_block_forward.3} parent=0 // loop_pre_header
    _
  $region3: #{decoder_block_forward.3} parent=0 // loop_header
    %s13 = sphi 0, %s17
    %p14 = scmp.ge.s32.totalorder %s13, 4
    %s21 = sphi 0, %s21
    %s23 = sphi 0, %s21
    %s24 = sphi 0, %s23
    %s38 = sphi 0, %s24
    %s44 = sphi 0, %s46
    %s47 = sphi 0, %s44
    %s48 = sphi 0, %s47
    %s64 = sphi 0, %s48
    %s70 = sphi 0, %s72
    %s73 = sphi 0, %s70
    %s74 = sphi 0, %s73
    %s90 = sphi 0, %s74
    %s94 = sphi 0, %s94
    %s96 = sphi 0, %s94
    %s97 = sphi 0, %s96
    %s111 = sphi 0, %s97
    %s115 = sphi 0, %s115
    %s117 = sphi 0, %s115
    %s118 = sphi 0, %s117
    %s132 = sphi 0, %s118
    %s136 = sphi 0, %s136
    %s138 = sphi 0, %s136
    %s139 = sphi 0, %s138
    %s153 = sphi 0, %s139
    %s157 = sphi 0, %s157
    %s159 = sphi 0, %s157
    %s160 = sphi 0, %s159
    %s174 = sphi 0, %s160
    %s180 = sphi 0, %s182
    %s183 = sphi 0, %s180
    %s184 = sphi 0, %s183
    %s200 = sphi 0, %s184
  $region4: #{decoder_block_forward.3} parent=0 // loop_header_branch
    %16 = sbr.rel (%p14) target = $region8
  $region5: #{decoder_block_forward.3} parent=0 // loop_body
    %s18 = ssub.s32 %s13, 1
    %s19 = ssub.s32 %s13, 2
    %s20 = sadd.s32 %s13, 1
    %s22 = sadd.s32 %s21, 1
    %p25 = scmp.eq.s32.totalorder %s13, 1
    %p26 = scmp.ne.s32.totalorder %s21, %s23
    %p27 = scmp.eq.s32.totalorder %s13, 0
    %p28 = por %p26, %p27
    %p29 = scmp.ne.s32.totalorder %s21, %s23
    %p30 = scmp.eq.s32.totalorder %s18, 1
    %p31 = por %p29, %p30
    %p32 = scmp.ne.s32.totalorder %s23, %s24
    %p33 = scmp.eq.s32.totalorder %s18, 0
    %p34 = por %p32, %p33
    %p35 = scmp.ne.s32.totalorder %s23, %s24
    %p36 = scmp.eq.s32.totalorder %s19, 1
    %p37 = por %p35, %p36
    %p39 = scmp.ne.s32.totalorder %s24, %s38
    %p40 = scmp.eq.s32.totalorder %s19, 0
    %p41 = por %p39, %p40
    %s42 = ssub.s32 %s13, %s20
    %p43 = scmp.eq.s32.totalorder %s42, 0
    %s45 = sadd.s32 %s44, 1
    %s46 = scalar_select %p43, %s44, %s45
    %p49 = pneg %p43
    %p50 = scmp.eq.s32.totalorder %s13, 1
    %p51 = por %p49, %p50
    %p52 = scmp.ne.s32.totalorder %s44, %s47
    %p53 = scmp.eq.s32.totalorder %s13, 0
    %p54 = por %p52, %p53
    %p55 = scmp.ne.s32.totalorder %s44, %s47
    %p56 = scmp.eq.s32.totalorder %s18, 1
    %p57 = por %p55, %p56
    %p58 = scmp.ne.s32.totalorder %s47, %s48
    %p59 = scmp.eq.s32.totalorder %s18, 0
    %p60 = por %p58, %p59
    %p61 = scmp.ne.s32.totalorder %s47, %s48
    %p62 = scmp.eq.s32.totalorder %s19, 1
    %p63 = por %p61, %p62
    %p65 = scmp.ne.s32.totalorder %s48, %s64
    %p66 = scmp.eq.s32.totalorder %s19, 0
    %p67 = por %p65, %p66
    %s68 = ssub.s32 %s13, %s20
    %p69 = scmp.eq.s32.totalorder %s68, 0
    %s71 = sadd.s32 %s70, 1
    %s72 = scalar_select %p69, %s70, %s71
    %p75 = pneg %p69
    %p76 = scmp.eq.s32.totalorder %s13, 1
    %p77 = por %p75, %p76
    %p78 = scmp.ne.s32.totalorder %s70, %s73
    %p79 = scmp.eq.s32.totalorder %s13, 0
    %p80 = por %p78, %p79
    %p81 = scmp.ne.s32.totalorder %s70, %s73
    %p82 = scmp.eq.s32.totalorder %s18, 1
    %p83 = por %p81, %p82
    %p84 = scmp.ne.s32.totalorder %s73, %s74
    %p85 = scmp.eq.s32.totalorder %s18, 0
    %p86 = por %p84, %p85
    %p87 = scmp.ne.s32.totalorder %s73, %s74
    %p88 = scmp.eq.s32.totalorder %s19, 1
    %p89 = por %p87, %p88
    %p91 = scmp.ne.s32.totalorder %s74, %s90
    %p92 = scmp.eq.s32.totalorder %s19, 0
    %p93 = por %p91, %p92
    %s95 = sadd.s32 %s94, 1
    %p98 = scmp.eq.s32.totalorder %s13, 1
    %p99 = scmp.ne.s32.totalorder %s94, %s96
    %p100 = scmp.eq.s32.totalorder %s13, 0
    %p101 = por %p99, %p100
    %p102 = scmp.ne.s32.totalorder %s94, %s96
    %p103 = scmp.eq.s32.totalorder %s18, 1
    %p104 = por %p102, %p103
    %p105 = scmp.ne.s32.totalorder %s96, %s97
    %p106 = scmp.eq.s32.totalorder %s18, 0
    %p107 = por %p105, %p106
    %p108 = scmp.ne.s32.totalorder %s96, %s97
    %p109 = scmp.eq.s32.totalorder %s19, 1
    %p110 = por %p108, %p109
    %p112 = scmp.ne.s32.totalorder %s97, %s111
    %p113 = scmp.eq.s32.totalorder %s19, 0
    %p114 = por %p112, %p113
    %s116 = sadd.s32 %s115, 1
    %p119 = scmp.eq.s32.totalorder %s13, 1
    %p120 = scmp.ne.s32.totalorder %s115, %s117
    %p121 = scmp.eq.s32.totalorder %s13, 0
    %p122 = por %p120, %p121
    %p123 = scmp.ne.s32.totalorder %s115, %s117
    %p124 = scmp.eq.s32.totalorder %s18, 1
    %p125 = por %p123, %p124
    %p126 = scmp.ne.s32.totalorder %s117, %s118
    %p127 = scmp.eq.s32.totalorder %s18, 0
    %p128 = por %p126, %p127
    %p129 = scmp.ne.s32.totalorder %s117, %s118
    %p130 = scmp.eq.s32.totalorder %s19, 1
    %p131 = por %p129, %p130
    %p133 = scmp.ne.s32.totalorder %s118, %s132
    %p134 = scmp.eq.s32.totalorder %s19, 0
    %p135 = por %p133, %p134
    %s137 = sadd.s32 %s136, 1
    %p140 = scmp.eq.s32.totalorder %s13, 1
    %p141 = scmp.ne.s32.totalorder %s136, %s138
    %p142 = scmp.eq.s32.totalorder %s13, 0
    %p143 = por %p141, %p142
    %p144 = scmp.ne.s32.totalorder %s136, %s138
    %p145 = scmp.eq.s32.totalorder %s18, 1
    %p146 = por %p144, %p145
    %p147 = scmp.ne.s32.totalorder %s138, %s139
    %p148 = scmp.eq.s32.totalorder %s18, 0
    %p149 = por %p147, %p148
    %p150 = scmp.ne.s32.totalorder %s138, %s139
    %p151 = scmp.eq.s32.totalorder %s19, 1
    %p152 = por %p150, %p151
    %p154 = scmp.ne.s32.totalorder %s139, %s153
    %p155 = scmp.eq.s32.totalorder %s19, 0
    %p156 = por %p154, %p155
    %s158 = sadd.s32 %s157, 1
    %p161 = scmp.eq.s32.totalorder %s13, 1
    %p162 = scmp.ne.s32.totalorder %s157, %s159
    %p163 = scmp.eq.s32.totalorder %s13, 0
    %p164 = por %p162, %p163
    %p165 = scmp.ne.s32.totalorder %s157, %s159
    %p166 = scmp.eq.s32.totalorder %s18, 1
    %p167 = por %p165, %p166
    %p168 = scmp.ne.s32.totalorder %s159, %s160
    %p169 = scmp.eq.s32.totalorder %s18, 0
    %p170 = por %p168, %p169
    %p171 = scmp.ne.s32.totalorder %s159, %s160
    %p172 = scmp.eq.s32.totalorder %s19, 1
    %p173 = por %p171, %p172
    %p175 = scmp.ne.s32.totalorder %s160, %s174
    %p176 = scmp.eq.s32.totalorder %s19, 0
    %p177 = por %p175, %p176
    %s178 = ssub.s32 %s13, %s20
    %p179 = scmp.eq.s32.totalorder %s178, 0
    %s181 = sadd.s32 %s180, 1
    %s182 = scalar_select %p179, %s180, %s181
    %p185 = pneg %p179
    %p186 = scmp.eq.s32.totalorder %s13, 1
    %p187 = por %p185, %p186
    %p188 = scmp.ne.s32.totalorder %s180, %s183
    %p189 = scmp.eq.s32.totalorder %s13, 0
    %p190 = por %p188, %p189
    %p191 = scmp.ne.s32.totalorder %s180, %s183
    %p192 = scmp.eq.s32.totalorder %s18, 1
    %p193 = por %p191, %p192
    %p194 = scmp.ne.s32.totalorder %s183, %s184
    %p195 = scmp.eq.s32.totalorder %s18, 0
    %p196 = por %p194, %p195
    %p197 = scmp.ne.s32.totalorder %s183, %s184
    %p198 = scmp.eq.s32.totalorder %s19, 1
    %p199 = por %p197, %p198
    %p201 = scmp.ne.s32.totalorder %s184, %s200
    %p202 = scmp.eq.s32.totalorder %s19, 0
    %p203 = por %p201, %p202
    %p204 = scmp.le.s32.totalorder 1, %s13
    %p205 = scmp.lt.s32.totalorder %s13, 3
    %p206 = pnand %p204, %p205
    %p207 = pneg %p206
    // Predicated region
    $region9: #{decoder_block_forward.3} parent=5 // pred_check
      _
    $region10: #{decoder_block_forward.3} parent=5 // pred_check_branch
      %209 = sbr.rel (%p206) target = $region12
    $region11: #{decoder_block_forward.3} parent=5 // pred_region
      %s210 = ssub.s32 %s13, 1
      // Predicated region
      $region13: #{decoder_block_forward.3} parent=11 // pred_check
        %p211 = pneg %p34
      $region14: #{decoder_block_forward.3} parent=11 // pred_check_branch
        %213 = sbr.rel (%p211) target = $region16
      $region15: #{decoder_block_forward.3} parent=11 // pred_region
        _
      $region16: #{decoder_block_forward.3} parent=11 // pred_fallthru
        _
      // Predicated region
      $region17: #{decoder_block_forward.3} parent=11 // pred_check
        %p214 = pneg %p107
      $region18: #{decoder_block_forward.3} parent=11 // pred_check_branch
        %216 = sbr.rel (%p214) target = $region20
      $region19: #{decoder_block_forward.3} parent=11 // pred_region
        _
      $region20: #{decoder_block_forward.3} parent=11 // pred_fallthru
        _
      // Predicated region
      $region21: #{decoder_block_forward.3} parent=11 // pred_check
        %p217 = pneg %p128
      $region22: #{decoder_block_forward.3} parent=11 // pred_check_branch
        %219 = sbr.rel (%p217) target = $region24
      $region23: #{decoder_block_forward.3} parent=11 // pred_region
        _
      $region24: #{decoder_block_forward.3} parent=11 // pred_fallthru
        _
      // Predicated region
      $region25: #{decoder_block_forward.3} parent=11 // pred_check
        %p220 = pneg %p149
      $region26: #{decoder_block_forward.3} parent=11 // pred_check_branch
        %222 = sbr.rel (%p220) target = $region28
      $region27: #{decoder_block_forward.3} parent=11 // pred_region
        _
      $region28: #{decoder_block_forward.3} parent=11 // pred_fallthru
        _
      // Predicated region
      $region29: #{decoder_block_forward.3} parent=11 // pred_check
        %p223 = pneg %p170
      $region30: #{decoder_block_forward.3} parent=11 // pred_check_branch
        %225 = sbr.rel (%p223) target = $region32
      $region31: #{decoder_block_forward.3} parent=11 // pred_region
        _
      $region32: #{decoder_block_forward.3} parent=11 // pred_fallthru
        _
    $region12: #{decoder_block_forward.3} parent=5 // pred_fallthru
      _
    %p226 = scmp.lt.s32.totalorder %s13, 2
    // Predicated region
    $region33: #{decoder_block_forward.3} parent=5 // pred_check
      %p227 = pneg %p226
    $region34: #{decoder_block_forward.3} parent=5 // pred_check_branch
      %229 = sbr.rel (%p227) target = $region36
    $region35: #{decoder_block_forward.3} parent=5 // pred_region
      // Predicated region
      $region37: #{decoder_block_forward.3} parent=35 // pred_check
        %p230 = pneg %p54
      $region38: #{decoder_block_forward.3} parent=35 // pred_check_branch
        %232 = sbr.rel (%p230) target = $region40
      $region39: #{decoder_block_forward.3} parent=35 // pred_region
        %p233 = scmp.lt.s32.totalorder %s13, 1
        %s234 = scalar_select %p233, %s13, 1
        %s235 = smul.addr %s234, 8
        %s236 = smul.addr %s235, 2
        %s237 = scalar_lea.vmem %s1, %s236
      $region40: #{decoder_block_forward.3} parent=35 // pred_fallthru
        _
      // Predicated region
      $region41: #{decoder_block_forward.3} parent=35 // pred_check
        %p238 = pneg %p80
      $region42: #{decoder_block_forward.3} parent=35 // pred_check_branch
        %240 = sbr.rel (%p238) target = $region44
      $region43: #{decoder_block_forward.3} parent=35 // pred_region
        %p241 = scmp.lt.s32.totalorder %s13, 1
        %s242 = scalar_select %p241, %s13, 1
        %s243 = smul.addr %s242, 8
        %s244 = smul.addr %s243, 8
        %s245 = scalar_lea.vmem %s2, %s244
      $region44: #{decoder_block_forward.3} parent=35 // pred_fallthru
        _
    $region36: #{decoder_block_forward.3} parent=5 // pred_fallthru
      _
    %p246 = scmp.le.s32.totalorder 1, %s13
    %p247 = scmp.lt.s32.totalorder %s13, 3
    %p248 = pnand %p246, %p247
    %p249 = pneg %p248
    // Predicated region
    $region45: #{decoder_block_forward.3} parent=5 // pred_check
      _
    $region46: #{decoder_block_forward.3} parent=5 // pred_check_branch
      %251 = sbr.rel (%p248) target = $region48
    $region47: #{decoder_block_forward.3} parent=5 // pred_region
      %s252 = ssub.s32 %s13, 1
      %p253 = pneg %p34
      %p254 = pneg %p31
      %p255 = scmp.lt.s32.totalorder %s18, 1
      %s256 = scalar_select %p255, %s18, 1
      %s257 = smul.addr %s256, 8
      %s258 = smul.addr %s257, 2
      %s259 = scalar_lea.vmem %s1, %s258
      %p260 = pneg %p60
      %p261 = pneg %p57
      %p262 = scmp.lt.s32.totalorder %s18, 1
      %s263 = scalar_select %p262, %s18, 1
      %s264 = smul.addr %s263, 8
      %s265 = smul.addr %s264, 8
      %s266 = scalar_lea.vmem %s2, %s265
      %p267 = pneg %p86
      %p268 = pneg %p83
      %p269 = pneg %p107
      %p270 = pneg %p104
      %p271 = pneg %p128
      %p272 = pneg %p125
      %p273 = pneg %p149
      %p274 = pneg %p146
      %p275 = pneg %p170
      %p276 = pneg %p167
      %p277 = pneg %p196
      %p278 = pneg %p193
      %p279 = scmp.lt.s32.totalorder %s18, 1
      %s280 = scalar_select %p279, %s18, 1
      %s281 = smul.addr %s280, 8
      %s282 = smul.addr %s281, 8
      %s283 = scalar_lea.vmem %s7, %s282
      %p284 = scmp.lt.s32.totalorder %s18, 1
      %s285 = scalar_select %p284, %s18, 1
      %s286 = smul.addr %s285, 8
      %s287 = smul.addr %s286, 2
      %s288 = scalar_lea.vmem %s1, %s287
      %p289 = scmp.lt.s32.totalorder %s18, 1
      %s290 = scalar_select %p289, %s18, 1
      %s291 = smul.addr %s290, 8
      %s292 = smul.addr %s291, 8
      %s293 = scalar_lea.vmem %s2, %s292
      %p294 = scmp.lt.s32.totalorder %s18, 1
      %s295 = scalar_select %p294, %s18, 1
      %s296 = smul.addr %s295, 8
      %s297 = smul.addr %s296, 8
      %s298 = scalar_lea.vmem %s7, %s297
      %300 = vst [vmem:[#allocation2] sm:$0xf] 0
      %301 = vst [vmem:[#allocation2 + $0x24] sm:$0xf] 0
      %v302 = vld [vmem:[%s288] sm:$0xff]
      %v303 = vld [vmem:[%s288 + $0x8] sm:$0xff]
      %v306 = vcombine.high %v302, %v302
      %v308 = vunpack.c.l.s4 1983009808
      %v309 = vunpack.c.0.s8 %v308
      %v310 = vlaneseq
      %v311 = vshrl.u32 %v310, 7
      %v312 = vsub.s32 %v309, %v311
      %v313 = vrot.slane %v302, %v312
      %v315 = vunpack.c.l.s4 1983009808
      %v316 = vunpack.c.0.s8 %v315
      %v317 = vlaneseq
      %v318 = vshrl.u32 %v317, 7
      %v319 = vsub.s32 %v316, %v318
      %v320 = vrot.slane %v306, %v319
      %v321 = vcombine.high %v303, %v303
      %v323 = vunpack.c.l.s4 1983009808
      %v324 = vunpack.c.0.s8 %v323
      %v325 = vlaneseq
      %v326 = vshrl.u32 %v325, 7
      %v327 = vsub.s32 %v324, %v326
      %v328 = vrot.slane %v303, %v327
      %v330 = vunpack.c.l.s4 1983009808
      %v331 = vunpack.c.0.s8 %v330
      %v332 = vlaneseq
      %v333 = vshrl.u32 %v332, 7
      %v334 = vsub.s32 %v331, %v333
      %v335 = vrot.slane %v321, %v334
      %340 = vst [vmem:[#allocation2 + $0x4] sm:$0x33] %v313
      %341 = vst [vmem:[#allocation2 + $0xc] sm:$0x33] %v320
      %342 = vst [vmem:[#allocation2 + $0x14] sm:$0x33] %v328
      %343 = vst [vmem:[#allocation2 + $0x1c] sm:$0x33] %v335
      %v344 = vld [vmem:[%s3] sm:$0x3]
      %v345 = vld [vmem:[%s293] sm:$0xff]
      %v346 = vld [vmem:[%s293 + $0x8] sm:$0xff]
      %v347 = vld [vmem:[%s293 + $0x10] sm:$0xff]
      %v348 = vld [vmem:[%s293 + $0x18] sm:$0xff]
      %v349 = vld [vmem:[%s293 + $0x20] sm:$0xff]
      %v350 = vld [vmem:[%s293 + $0x28] sm:$0xff]
      %v351 = vld [vmem:[%s293 + $0x30] sm:$0xff]
      %v352 = vld [vmem:[%s293 + $0x38] sm:$0xff]
      %v353 = vpack.c.bf16 %v345, %v345
      %v354 = vpack.c.bf16 %v346, %v346
      %v355 = vpack.c.bf16 %v347, %v347
      %v356 = vpack.c.bf16 %v348, %v348
      %v357 = vpack.c.bf16 %v349, %v349
      %v358 = vpack.c.bf16 %v350, %v350
      %v359 = vpack.c.bf16 %v351, %v351
      %v360 = vpack.c.bf16 %v352, %v352
      %v361 = vld [vmem:[%s4] sm:$0xf]
      %363 = vset.pattern.permute.xlu0 0
      %364 = vperm.xlu0 %363, %v361
      %v365 = vpop.permute.xlu0 %364
      %vm367 = vcmask 64512
      %v369 = vsel %vm367, %v344, 0
      %vm371 = vcmask 1043456
      %v373 = vsel %vm371, %v353, 0
      %v376 = vsel %vm371, %v354, 0
      %v379 = vsel %vm371, %v355, 0
      %v382 = vsel %vm371, %v356, 0
      %v385 = vsel %vm371, %v357, 0
      %v388 = vsel %vm371, %v358, 0
      %v391 = vsel %vm371, %v359, 0
      %v394 = vsel %vm371, %v360, 0
      %396 = vmatprep.subr.bf16.mxu0 %v376
      %397 = vmatpush1.bf16.msra.mxu0 %v373
      %398 = vmatprep.subr.bf16.mxu0 0
      %399 = vmatpush1.bf16.msra.mxu0 0
      %400 = vmatprep.subr.bf16.mxu0 0
      %401 = vmatpush1.bf16.msra.mxu0 0
      %402 = vmatprep.subr.bf16.mxu0 0
      %403 = vmatpush1.bf16.msra.mxu0 0
      %404 = vmatprep.subr.bf16.mxu0 0
      %405 = vmatpush1.bf16.msra.mxu0 0
      %406 = vmatprep.subr.bf16.mxu0 0
      %407 = vmatpush1.bf16.msra.mxu0 0
      %408 = vmatprep.subr.bf16.mxu0 0
      %409 = vmatpush1.bf16.msra.mxu0 0
      %410 = vmatprep.subr.bf16.mxu0 0
      %411 = vmatpush1.bf16.msra.mxu0 0
      %412 = vmatprep.subr.bf16.mxu0 0
      %413 = vmatpush1.bf16.msra.mxu0 0
      %414 = vmatprep.subr.bf16.mxu0 0
      %415 = vmatpush1.bf16.msra.mxu0 0
      %416 = vmatprep.subr.bf16.mxu0 0
      %417 = vmatpush1.bf16.msra.mxu0 0
      %418 = vmatprep.subr.bf16.mxu0 0
      %419 = vmatpush1.bf16.msra.mxu0 0
      %420 = vmatprep.subr.bf16.mxu0 0
      %421 = vmatpush1.bf16.msra.mxu0 0
      %422 = vmatprep.subr.bf16.mxu0 0
      %423 = vmatpush1.bf16.msra.mxu0 0
      %424 = vmatprep.subr.bf16.mxu0 0
      %425 = vmatpush1.bf16.msra.mxu0 0
      %426 = vmatprep.subr.bf16.mxu0 0
      %427 = vmatpush1.bf16.msra.mxu0 0
      %428 = vmatprep.mubr.bf16.mxu0 0
      %429 = vmatmul.mubr.bf16.gmra.mrb[0].mxu0 %v369
      %v430 = vpop.f32.mrb[0].mxu0
      %v431 = vadd.f32 %v365, %v430
      %v432 = vpop.f32.mrb[0].mxu0
      %v433 = vadd.f32 %v365, %v432
      %v434 = vpop.f32.mrb[0].mxu0
      %v435 = vpop.f32.mrb[0].mxu0
      %436 = vdwg.mxu0
      %437 = vmatprep.subr.bf16.mxu0 %v382
      %438 = vmatpush1.bf16.msra.mxu0 %v379
      %439 = vmatprep.subr.bf16.mxu0 0
      %440 = vmatpush1.bf16.msra.mxu0 0
      %441 = vmatprep.subr.bf16.mxu0 0
      %442 = vmatpush1.bf16.msra.mxu0 0
      %443 = vmatprep.subr.bf16.mxu0 0
      %444 = vmatpush1.bf16.msra.mxu0 0
      %445 = vmatprep.subr.bf16.mxu0 0
      %446 = vmatpush1.bf16.msra.mxu0 0
      %447 = vmatprep.subr.bf16.mxu0 0
      %448 = vmatpush1.bf16.msra.mxu0 0
      %449 = vmatprep.subr.bf16.mxu0 0
      %450 = vmatpush1.bf16.msra.mxu0 0
      %451 = vmatprep.subr.bf16.mxu0 0
      %452 = vmatpush1.bf16.msra.mxu0 0
      %453 = vmatprep.subr.bf16.mxu0 0
      %454 = vmatpush1.bf16.msra.mxu0 0
      %455 = vmatprep.subr.bf16.mxu0 0
      %456 = vmatpush1.bf16.msra.mxu0 0
      %457 = vmatprep.subr.bf16.mxu0 0
      %458 = vmatpush1.bf16.msra.mxu0 0
      %459 = vmatprep.subr.bf16.mxu0 0
      %460 = vmatpush1.bf16.msra.mxu0 0
      %461 = vmatprep.subr.bf16.mxu0 0
      %462 = vmatpush1.bf16.msra.mxu0 0
      %463 = vmatprep.subr.bf16.mxu0 0
      %464 = vmatpush1.bf16.msra.mxu0 0
      %465 = vmatprep.subr.bf16.mxu0 0
      %466 = vmatpush1.bf16.msra.mxu0 0
      %467 = vmatprep.subr.bf16.mxu0 0
      %468 = vmatpush1.bf16.msra.mxu0 0
      %469 = vmatprep.mubr.bf16.mxu0 0
      %470 = vmatmul.mubr.bf16.gmra.mrb[0].mxu0 %v369
      %v471 = vpop.f32.mrb[0].mxu0
      %v472 = vadd.f32 %v365, %v471
      %v473 = vpop.f32.mrb[0].mxu0
      %v474 = vadd.f32 %v365, %v473
      %v475 = vpop.f32.mrb[0].mxu0
      %v476 = vpop.f32.mrb[0].mxu0
      %477 = vdwg.mxu0
      %478 = vmatprep.subr.bf16.mxu0 %v388
      %479 = vmatpush1.bf16.msra.mxu0 %v385
      %480 = vmatprep.subr.bf16.mxu0 0
      %481 = vmatpush1.bf16.msra.mxu0 0
      %482 = vmatprep.subr.bf16.mxu0 0
      %483 = vmatpush1.bf16.msra.mxu0 0
      %484 = vmatprep.subr.bf16.mxu0 0
      %485 = vmatpush1.bf16.msra.mxu0 0
      %486 = vmatprep.subr.bf16.mxu0 0
      %487 = vmatpush1.bf16.msra.mxu0 0
      %488 = vmatprep.subr.bf16.mxu0 0
      %489 = vmatpush1.bf16.msra.mxu0 0
      %490 = vmatprep.subr.bf16.mxu0 0
      %491 = vmatpush1.bf16.msra.mxu0 0
      %492 = vmatprep.subr.bf16.mxu0 0
      %493 = vmatpush1.bf16.msra.mxu0 0
      %494 = vmatprep.subr.bf16.mxu0 0
      %495 = vmatpush1.bf16.msra.mxu0 0
      %496 = vmatprep.subr.bf16.mxu0 0
      %497 = vmatpush1.bf16.msra.mxu0 0
      %498 = vmatprep.subr.bf16.mxu0 0
      %499 = vmatpush1.bf16.msra.mxu0 0
      %500 = vmatprep.subr.bf16.mxu0 0
      %501 = vmatpush1.bf16.msra.mxu0 0
      %502 = vmatprep.subr.bf16.mxu0 0
      %503 = vmatpush1.bf16.msra.mxu0 0
      %504 = vmatprep.subr.bf16.mxu0 0
      %505 = vmatpush1.bf16.msra.mxu0 0
      %506 = vmatprep.subr.bf16.mxu0 0
      %507 = vmatpush1.bf16.msra.mxu0 0
      %508 = vmatprep.subr.bf16.mxu0 0
      %509 = vmatpush1.bf16.msra.mxu0 0
      %510 = vmatprep.mubr.bf16.mxu0 0
      %511 = vmatmul.mubr.bf16.gmra.mrb[0].mxu0 %v369
      %v512 = vpop.f32.mrb[0].mxu0
      %v513 = vadd.f32 %v365, %v512
      %v514 = vpop.f32.mrb[0].mxu0
      %v515 = vadd.f32 %v365, %v514
      %v516 = vpop.f32.mrb[0].mxu0
      %v517 = vpop.f32.mrb[0].mxu0
      %518 = vdwg.mxu0
      %519 = vmatprep.subr.bf16.mxu0 %v394
      %520 = vmatpush1.bf16.msra.mxu0 %v391
      %521 = vmatprep.subr.bf16.mxu0 0
      %522 = vmatpush1.bf16.msra.mxu0 0
      %523 = vmatprep.subr.bf16.mxu0 0
      %524 = vmatpush1.bf16.msra.mxu0 0
      %525 = vmatprep.subr.bf16.mxu0 0
      %526 = vmatpush1.bf16.msra.mxu0 0
      %527 = vmatprep.subr.bf16.mxu0 0
      %528 = vmatpush1.bf16.msra.mxu0 0
      %529 = vmatprep.subr.bf16.mxu0 0
      %530 = vmatpush1.bf16.msra.mxu0 0
      %531 = vmatprep.subr.bf16.mxu0 0
      %532 = vmatpush1.bf16.msra.mxu0 0
      %533 = vmatprep.subr.bf16.mxu0 0
      %534 = vmatpush1.bf16.msra.mxu0 0
      %535 = vmatprep.subr.bf16.mxu0 0
      %536 = vmatpush1.bf16.msra.mxu0 0
      %537 = vmatprep.subr.bf16.mxu0 0
      %538 = vmatpush1.bf16.msra.mxu0 0
      %539 = vmatprep.subr.bf16.mxu0 0
      %540 = vmatpush1.bf16.msra.mxu0 0
      %541 = vmatprep.subr.bf16.mxu0 0
      %542 = vmatpush1.bf16.msra.mxu0 0
      %543 = vmatprep.subr.bf16.mxu0 0
      %544 = vmatpush1.bf16.msra.mxu0 0
      %545 = vmatprep.subr.bf16.mxu0 0
      %546 = vmatpush1.bf16.msra.mxu0 0
      %547 = vmatprep.subr.bf16.mxu0 0
      %548 = vmatpush1.bf16.msra.mxu0 0
      %549 = vmatprep.subr.bf16.mxu0 0
      %550 = vmatpush1.bf16.msra.mxu0 0
      %551 = vmatprep.mubr.bf16.mxu0 0
      %552 = vmatmul.mubr.bf16.gmra.mrb[0].mxu0 %v369
      %v553 = vpop.f32.mrb[0].mxu0
      %v554 = vadd.f32 %v365, %v553
      %v555 = vpop.f32.mrb[0].mxu0
      %v556 = vadd.f32 %v365, %v555
      %v557 = vpop.f32.mrb[0].mxu0
      %v558 = vpop.f32.mrb[0].mxu0
      %559 = vdwg.mxu0
      %v560 = vmax.f32 %v431, 0.0
      %v561 = vmax.f32 %v433, 0.0
      %v562 = vmax.f32 %v472, 0.0
      %v563 = vmax.f32 %v474, 0.0
      %v564 = vmax.f32 %v513, 0.0
      %v565 = vmax.f32 %v515, 0.0
      %v566 = vmax.f32 %v554, 0.0
      %v567 = vmax.f32 %v556, 0.0
      %v568 = vpack.c.bf16 %v560, %v560
      %v569 = vpack.c.bf16 %v561, %v561
      %v570 = vpack.c.bf16 %v562, %v562
      %v571 = vpack.c.bf16 %v563, %v563
      %v572 = vpack.c.bf16 %v564, %v564
      %v573 = vpack.c.bf16 %v565, %v565
      %v574 = vpack.c.bf16 %v566, %v566
      %v575 = vpack.c.bf16 %v567, %v567
      %v584 = vunpack.c.l.b16 %v568
      %v585 = vunpack.c.l.b16 %v569
      %v586 = vunpack.c.l.b16 %v570
      %v587 = vunpack.c.l.b16 %v571
      %v588 = vunpack.c.l.b16 %v572
      %v589 = vunpack.c.l.b16 %v573
      %v590 = vunpack.c.l.b16 %v574
      %v591 = vunpack.c.l.b16 %v575
      %v592 = vpack.c.b16 %v585, %v584
      %v593 = vpack.c.b16 %v587, %v586
      %v594 = vpack.c.b16 %v589, %v588
      %v595 = vpack.c.b16 %v591, %v590
      %v596 = vrot.slane %v592, 6
      %v597 = vrot.slane %v593, 6
      %v598 = vrot.slane %v594, 6
      %v599 = vrot.slane %v595, 6
      %604 = vst [vmem:[#allocation2 + $0x4] sm:$0xcc] %v596
      %605 = vst [vmem:[#allocation2 + $0xc] sm:$0xcc] %v597
      %606 = vst [vmem:[#allocation2 + $0x14] sm:$0xcc] %v598
      %607 = vst [vmem:[#allocation2 + $0x1c] sm:$0xcc] %v599
      %v608 = vld [vmem:[%s0] ss:$2 sm:$0xff]
      %v610 = vlaneseq
      %v611 = vshrl.u32 %v610, 7
      %v612 = vsub.s32 0, %v611
      %v613 = vrot.slane %v608, %v612
      %v614 = vlaneseq
      %v615 = vshrl.u32 %v614, 7
      %v616 = vsub.s32 1, %v615
      %v617 = vrot.slane %v608, %v616
      %v618 = vlaneseq
      %v619 = vshrl.u32 %v618, 7
      %v620 = vsub.s32 2, %v619
      %v621 = vrot.slane %v608, %v620
      %v622 = vlaneseq
      %v623 = vshrl.u32 %v622, 7
      %v624 = vsub.s32 3, %v623
      %v625 = vrot.slane %v608, %v624
      %v626 = vlaneseq
      %v627 = vshrl.u32 %v626, 7
      %v628 = vsub.s32 4, %v627
      %v629 = vrot.slane %v608, %v628
      %v630 = vlaneseq
      %v631 = vshrl.u32 %v630, 7
      %v632 = vsub.s32 5, %v631
      %v633 = vrot.slane %v608, %v632
      %v634 = vlaneseq
      %v635 = vshrl.u32 %v634, 7
      %v636 = vsub.s32 6, %v635
      %v637 = vrot.slane %v608, %v636
      %v638 = vlaneseq
      %v639 = vshrl.u32 %v638, 7
      %v640 = vsub.s32 7, %v639
      %v641 = vrot.slane %v608, %v640
      %s650 = scalar_lea.vmem %s0, 1
      %v651 = vld [vmem:[%s650] ss:$2 sm:$0xff]
      %v653 = vlaneseq
      %v654 = vshrl.u32 %v653, 7
      %v655 = vsub.s32 0, %v654
      %v656 = vrot.slane %v651, %v655
      %v657 = vlaneseq
      %v658 = vshrl.u32 %v657, 7
      %v659 = vsub.s32 1, %v658
      %v660 = vrot.slane %v651, %v659
      %v661 = vlaneseq
      %v662 = vshrl.u32 %v661, 7
      %v663 = vsub.s32 2, %v662
      %v664 = vrot.slane %v651, %v663
      %v665 = vlaneseq
      %v666 = vshrl.u32 %v665, 7
      %v667 = vsub.s32 3, %v666
      %v668 = vrot.slane %v651, %v667
      %v669 = vlaneseq
      %v670 = vshrl.u32 %v669, 7
      %v671 = vsub.s32 4, %v670
      %v672 = vrot.slane %v651, %v671
      %v673 = vlaneseq
      %v674 = vshrl.u32 %v673, 7
      %v675 = vsub.s32 5, %v674
      %v676 = vrot.slane %v651, %v675
      %v677 = vlaneseq
      %v678 = vshrl.u32 %v677, 7
      %v679 = vsub.s32 6, %v678
      %v680 = vrot.slane %v651, %v679
      %v681 = vlaneseq
      %v682 = vshrl.u32 %v681, 7
      %v683 = vsub.s32 7, %v682
      %v684 = vrot.slane %v651, %v683
      %693 = vst [vmem:[#allocation3] sm:$0xff] 0.0
      %694 = vst [vmem:[#allocation3 + $0x8] sm:$0xff] 0.0
      %695 = vst [vmem:[#allocation3 + $0x10] sm:$0xff] 0.0
      %696 = vst [vmem:[#allocation3 + $0x18] sm:$0xff] 0.0
      %697 = vst [vmem:[#allocation3 + $0x20] sm:$0xff] 0.0
      %698 = vst [vmem:[#allocation3 + $0x28] sm:$0xff] 0.0
      %699 = vst [vmem:[#allocation3 + $0x30] sm:$0xff] 0.0
      %700 = vst [vmem:[#allocation3 + $0x38] sm:$0xff] 0.0
      %v701 = vld [vmem:[#allocation2] sm:$0xff]
      %v702 = vld [vmem:[#allocation2 + $0x8] sm:$0xff]
      %v703 = vld [vmem:[#allocation2 + $0x10] sm:$0xff]
      %v704 = vld [vmem:[#allocation2 + $0x18] sm:$0xff]
      %v705 = vld [vmem:[#allocation2 + $0x20] sm:$0xf]
      %v706 = vld [vmem:[%s5] sm:$0xf]
      %v712 = vunpack.c.l.b16 %v701
      %v713 = vunpack.c.h.b16 %v701
      %v714 = vunpack.c.l.b16 %v702
      %v715 = vunpack.c.h.b16 %v702
      %v716 = vunpack.c.l.b16 %v703
      %v717 = vunpack.c.h.b16 %v703
      %v718 = vunpack.c.l.b16 %v704
      %v719 = vunpack.c.h.b16 %v704
      %v720 = vunpack.c.l.b16 %v705
      %v721 = vpack.c.b16 %v712, %v712
      %v722 = vpack.c.b16 %v713, %v713
      %v723 = vpack.c.b16 %v714, %v714
      %v724 = vpack.c.b16 %v715, %v715
      %v725 = vpack.c.b16 %v716, %v716
      %v726 = vpack.c.b16 %v717, %v717
      %v727 = vpack.c.b16 %v718, %v718
      %v728 = vpack.c.b16 %v719, %v719
      %v729 = vpack.c.b16 %v720, %v720
      %730 = vrot.lane.b32.xlu0 %v721, 33
      %v731 = vpop.permute.xlu0 %730
      %732 = vrot.lane.b32.xlu0 %v722, 33
      %v733 = vpop.permute.xlu0 %732
      %734 = vrot.lane.b32.xlu0 %v723, 33
      %v735 = vpop.permute.xlu0 %734
      %736 = vrot.lane.b32.xlu0 %v724, 33
      %v737 = vpop.permute.xlu0 %736
      %738 = vrot.lane.b32.xlu0 %v725, 33
      %v739 = vpop.permute.xlu0 %738
      %740 = vrot.lane.b32.xlu0 %v726, 33
      %v741 = vpop.permute.xlu0 %740
      %742 = vrot.lane.b32.xlu0 %v727, 33
      %v743 = vpop.permute.xlu0 %742
      %744 = vrot.lane.b32.xlu0 %v728, 33
      %v745 = vpop.permute.xlu0 %744
      %746 = vrot.lane.b32.xlu0 %v729, 33
      %v747 = vpop.permute.xlu0 %746
      %vm748 = vcmask 269312
      %v749 = vsel %vm748, %v731, %v733
      %v750 = vsel %vm748, %v733, %v735
      %v751 = vsel %vm748, %v735, %v737
      %v752 = vsel %vm748, %v737, %v739
      %v753 = vsel %vm748, %v739, %v741
      %v754 = vsel %vm748, %v741, %v743
      %v755 = vsel %vm748, %v743, %v745
      %v756 = vsel %vm748, %v745, %v747
      %v758 = vsel %vm367, %v706, 0
      %v761 = vsel %vm371, %v749, 0
      %v764 = vsel %vm371, %v750, 0
      %v767 = vsel %vm371, %v751, 0
      %v770 = vsel %vm371, %v752, 0
      %v773 = vsel %vm371, %v753, 0
      %v776 = vsel %vm371, %v754, 0
      %v779 = vsel %vm371, %v755, 0
      %v782 = vsel %vm371, %v756, 0
      %784 = vmatprep.subr.bf16.mxu0 %v764
      %785 = vmatpush1.bf16.msra.mxu0 %v761
      %786 = vmatprep.subr.bf16.mxu0 0
      %787 = vmatpush1.bf16.msra.mxu0 0
      %788 = vmatprep.subr.bf16.mxu0 0
      %789 = vmatpush1.bf16.msra.mxu0 0
      %790 = vmatprep.subr.bf16.mxu0 0
      %791 = vmatpush1.bf16.msra.mxu0 0
      %792 = vmatprep.subr.bf16.mxu0 0
      %793 = vmatpush1.bf16.msra.mxu0 0
      %794 = vmatprep.subr.bf16.mxu0 0
      %795 = vmatpush1.bf16.msra.mxu0 0
      %796 = vmatprep.subr.bf16.mxu0 0
      %797 = vmatpush1.bf16.msra.mxu0 0
      %798 = vmatprep.subr.bf16.mxu0 0
      %799 = vmatpush1.bf16.msra.mxu0 0
      %800 = vmatprep.subr.bf16.mxu0 0
      %801 = vmatpush1.bf16.msra.mxu0 0
      %802 = vmatprep.subr.bf16.mxu0 0
      %803 = vmatpush1.bf16.msra.mxu0 0
      %804 = vmatprep.subr.bf16.mxu0 0
      %805 = vmatpush1.bf16.msra.mxu0 0
      %806 = vmatprep.subr.bf16.mxu0 0
      %807 = vmatpush1.bf16.msra.mxu0 0
      %808 = vmatprep.subr.bf16.mxu0 0
      %809 = vmatpush1.bf16.msra.mxu0 0
      %810 = vmatprep.subr.bf16.mxu0 0
      %811 = vmatpush1.bf16.msra.mxu0 0
      %812 = vmatprep.subr.bf16.mxu0 0
      %813 = vmatpush1.bf16.msra.mxu0 0
      %814 = vmatprep.subr.bf16.mxu0 0
      %815 = vmatpush1.bf16.msra.mxu0 0
      %816 = vmatprep.mubr.bf16.mxu0 0
      %817 = vmatmul.mubr.bf16.gmra.mrb[0].mxu0 %v758
      %v818 = vpop.f32.mrb[0].mxu0
      %v819 = vadd.f32 0.0, %v818
      %v820 = vpop.f32.mrb[0].mxu0
      %v821 = vadd.f32 0.0, %v820
      %v822 = vpop.f32.mrb[0].mxu0
      %v823 = vpop.f32.mrb[0].mxu0
      %824 = vdwg.mxu0
      %825 = vmatprep.subr.bf16.mxu0 %v770
      %826 = vmatpush1.bf16.msra.mxu0 %v767
      %827 = vmatprep.subr.bf16.mxu0 0
      %828 = vmatpush1.bf16.msra.mxu0 0
      %829 = vmatprep.subr.bf16.mxu0 0
      %830 = vmatpush1.bf16.msra.mxu0 0
      %831 = vmatprep.subr.bf16.mxu0 0
      %832 = vmatpush1.bf16.msra.mxu0 0
      %833 = vmatprep.subr.bf16.mxu0 0
      %834 = vmatpush1.bf16.msra.mxu0 0
      %835 = vmatprep.subr.bf16.mxu0 0
      %836 = vmatpush1.bf16.msra.mxu0 0
      %837 = vmatprep.subr.bf16.mxu0 0
      %838 = vmatpush1.bf16.msra.mxu0 0
      %839 = vmatprep.subr.bf16.mxu0 0
      %840 = vmatpush1.bf16.msra.mxu0 0
      %841 = vmatprep.subr.bf16.mxu0 0
      %842 = vmatpush1.bf16.msra.mxu0 0
      %843 = vmatprep.subr.bf16.mxu0 0
      %844 = vmatpush1.bf16.msra.mxu0 0
      %845 = vmatprep.subr.bf16.mxu0 0
      %846 = vmatpush1.bf16.msra.mxu0 0
      %847 = vmatprep.subr.bf16.mxu0 0
      %848 = vmatpush1.bf16.msra.mxu0 0
      %849 = vmatprep.subr.bf16.mxu0 0
      %850 = vmatpush1.bf16.msra.mxu0 0
      %851 = vmatprep.subr.bf16.mxu0 0
      %852 = vmatpush1.bf16.msra.mxu0 0
      %853 = vmatprep.subr.bf16.mxu0 0
      %854 = vmatpush1.bf16.msra.mxu0 0
      %855 = vmatprep.subr.bf16.mxu0 0
      %856 = vmatpush1.bf16.msra.mxu0 0
      %857 = vmatprep.mubr.bf16.mxu0 0
      %858 = vmatmul.mubr.bf16.gmra.mrb[0].mxu0 %v758
      %v859 = vpop.f32.mrb[0].mxu0
      %v860 = vadd.f32 0.0, %v859
      %v861 = vpop.f32.mrb[0].mxu0
      %v862 = vadd.f32 0.0, %v861
      %v863 = vpop.f32.mrb[0].mxu0
      %v864 = vpop.f32.mrb[0].mxu0
      %865 = vdwg.mxu0
      %866 = vmatprep.subr.bf16.mxu0 %v776
      %867 = vmatpush1.bf16.msra.mxu0 %v773
      %868 = vmatprep.subr.bf16.mxu0 0
      %869 = vmatpush1.bf16.msra.mxu0 0
      %870 = vmatprep.subr.bf16.mxu0 0
      %871 = vmatpush1.bf16.msra.mxu0 0
      %872 = vmatprep.subr.bf16.mxu0 0
      %873 = vmatpush1.bf16.msra.mxu0 0
      %874 = vmatprep.subr.bf16.mxu0 0
      %875 = vmatpush1.bf16.msra.mxu0 0
      %876 = vmatprep.subr.bf16.mxu0 0
      %877 = vmatpush1.bf16.msra.mxu0 0
      %878 = vmatprep.subr.bf16.mxu0 0
      %879 = vmatpush1.bf16.msra.mxu0 0
      %880 = vmatprep.subr.bf16.mxu0 0
      %881 = vmatpush1.bf16.msra.mxu0 0
      %882 = vmatprep.subr.bf16.mxu0 0
      %883 = vmatpush1.bf16.msra.mxu0 0
      %884 = vmatprep.subr.bf16.mxu0 0
      %885 = vmatpush1.bf16.msra.mxu0 0
      %886 = vmatprep.subr.bf16.mxu0 0
      %887 = vmatpush1.bf16.msra.mxu0 0
      %888 = vmatprep.subr.bf16.mxu0 0
      %889 = vmatpush1.bf16.msra.mxu0 0
      %890 = vmatprep.subr.bf16.mxu0 0
      %891 = vmatpush1.bf16.msra.mxu0 0
      %892 = vmatprep.subr.bf16.mxu0 0
      %893 = vmatpush1.bf16.msra.mxu0 0
      %894 = vmatprep.subr.bf16.mxu0 0
      %895 = vmatpush1.bf16.msra.mxu0 0
      %896 = vmatprep.subr.bf16.mxu0 0
      %897 = vmatpush1.bf16.msra.mxu0 0
      %898 = vmatprep.mubr.bf16.mxu0 0
      %899 = vmatmul.mubr.bf16.gmra.mrb[0].mxu0 %v758
      %v900 = vpop.f32.mrb[0].mxu0
      %v901 = vadd.f32 0.0, %v900
      %v902 = vpop.f32.mrb[0].mxu0
      %v903 = vadd.f32 0.0, %v902
      %v904 = vpop.f32.mrb[0].mxu0
      %v905 = vpop.f32.mrb[0].mxu0
      %906 = vdwg.mxu0
      %907 = vmatprep.subr.bf16.mxu0 %v782
      %908 = vmatpush1.bf16.msra.mxu0 %v779
      %909 = vmatprep.subr.bf16.mxu0 0
      %910 = vmatpush1.bf16.msra.mxu0 0
      %911 = vmatprep.subr.bf16.mxu0 0
      %912 = vmatpush1.bf16.msra.mxu0 0
      %913 = vmatprep.subr.bf16.mxu0 0
      %914 = vmatpush1.bf16.msra.mxu0 0
      %915 = vmatprep.subr.bf16.mxu0 0
      %916 = vmatpush1.bf16.msra.mxu0 0
      %917 = vmatprep.subr.bf16.mxu0 0
      %918 = vmatpush1.bf16.msra.mxu0 0
      %919 = vmatprep.subr.bf16.mxu0 0
      %920 = vmatpush1.bf16.msra.mxu0 0
      %921 = vmatprep.subr.bf16.mxu0 0
      %922 = vmatpush1.bf16.msra.mxu0 0
      %923 = vmatprep.subr.bf16.mxu0 0
      %924 = vmatpush1.bf16.msra.mxu0 0
      %925 = vmatprep.subr.bf16.mxu0 0
      %926 = vmatpush1.bf16.msra.mxu0 0
      %927 = vmatprep.subr.bf16.mxu0 0
      %928 = vmatpush1.bf16.msra.mxu0 0
      %929 = vmatprep.subr.bf16.mxu0 0
      %930 = vmatpush1.bf16.msra.mxu0 0
      %931 = vmatprep.subr.bf16.mxu0 0
      %932 = vmatpush1.bf16.msra.mxu0 0
      %933 = vmatprep.subr.bf16.mxu0 0
      %934 = vmatpush1.bf16.msra.mxu0 0
      %935 = vmatprep.subr.bf16.mxu0 0
      %936 = vmatpush1.bf16.msra.mxu0 0
      %937 = vmatprep.subr.bf16.mxu0 0
      %938 = vmatpush1.bf16.msra.mxu0 0
      %939 = vmatprep.mubr.bf16.mxu0 0
      %940 = vmatmul.mubr.bf16.gmra.mrb[0].mxu0 %v758
      %v941 = vpop.f32.mrb[0].mxu0
      %v942 = vadd.f32 0.0, %v941
      %v943 = vpop.f32.mrb[0].mxu0
      %v944 = vadd.f32 0.0, %v943
      %v945 = vpop.f32.mrb[0].mxu0
      %v946 = vpop.f32.mrb[0].mxu0
      %947 = vdwg.mxu0
      %v948 = vmul.f32 %v819, %v613
      %v949 = vmul.f32 %v821, %v617
      %v950 = vmul.f32 %v860, %v621
      %v951 = vmul.f32 %v862, %v625
      %v952 = vmul.f32 %v901, %v629
      %v953 = vmul.f32 %v903, %v633
      %v954 = vmul.f32 %v942, %v637
      %v955 = vmul.f32 %v944, %v641
      %v956 = vld [vmem:[#allocation3] sm:$0xff]
      %v957 = vld [vmem:[#allocation3 + $0x8] sm:$0xff]
      %v958 = vld [vmem:[#allocation3 + $0x10] sm:$0xff]
      %v959 = vld [vmem:[#allocation3 + $0x18] sm:$0xff]
      %v960 = vld [vmem:[#allocation3 + $0x20] sm:$0xff]
      %v961 = vld [vmem:[#allocation3 + $0x28] sm:$0xff]
      %v962 = vld [vmem:[#allocation3 + $0x30] sm:$0xff]
      %v963 = vld [vmem:[#allocation3 + $0x38] sm:$0xff]
      %v964 = vadd.f32 %v956, %v948
      %v965 = vadd.f32 %v957, %v949
      %v966 = vadd.f32 %v958, %v950
      %v967 = vadd.f32 %v959, %v951
      %v968 = vadd.f32 %v960, %v952
      %v969 = vadd.f32 %v961, %v953
      %v970 = vadd.f32 %v962, %v954
      %v971 = vadd.f32 %v963, %v955
      %972 = vst [vmem:[#allocation3] sm:$0xff] %v964
      %973 = vst [vmem:[#allocation3 + $0x8] sm:$0xff] %v965
      %974 = vst [vmem:[#allocation3 + $0x10] sm:$0xff] %v966
      %975 = vst [vmem:[#allocation3 + $0x18] sm:$0xff] %v967
      %976 = vst [vmem:[#allocation3 + $0x20] sm:$0xff] %v968
      %977 = vst [vmem:[#allocation3 + $0x28] sm:$0xff] %v969
      %978 = vst [vmem:[#allocation3 + $0x30] sm:$0xff] %v970
      %979 = vst [vmem:[#allocation3 + $0x38] sm:$0xff] %v971
      %v980 = vld [vmem:[#allocation2] sm:$0xff]
      %v981 = vld [vmem:[#allocation2 + $0x8] sm:$0xff]
      %v982 = vld [vmem:[#allocation2 + $0x10] sm:$0xff]
      %v983 = vld [vmem:[#allocation2 + $0x18] sm:$0xff]
      %v984 = vld [vmem:[#allocation2 + $0x20] sm:$0xf]
      %s985 = scalar_lea.vmem %s5, 4
      %v986 = vld [vmem:[%s985] sm:$0xf]
      %v992 = vunpack.c.l.b16 %v980
      %v993 = vunpack.c.h.b16 %v980
      %v994 = vunpack.c.l.b16 %v981
      %v995 = vunpack.c.h.b16 %v981
      %v996 = vunpack.c.l.b16 %v982
      %v997 = vunpack.c.h.b16 %v982
      %v998 = vunpack.c.l.b16 %v983
      %v999 = vunpack.c.h.b16 %v983
      %v1000 = vunpack.c.l.b16 %v984
      %v1001 = vpack.c.b16 %v992, %v992
      %v1002 = vpack.c.b16 %v993, %v993
      %v1003 = vpack.c.b16 %v994, %v994
      %v1004 = vpack.c.b16 %v995, %v995
      %v1005 = vpack.c.b16 %v996, %v996
      %v1006 = vpack.c.b16 %v997, %v997
      %v1007 = vpack.c.b16 %v998, %v998
      %v1008 = vpack.c.b16 %v999, %v999
      %v1009 = vpack.c.b16 %v1000, %v1000
      %1010 = vrot.lane.b32.xlu0 %v1001, 32
      %v1011 = vpop.permute.xlu0 %1010
      %1012 = vrot.lane.b32.xlu0 %v1002, 32
      %v1013 = vpop.permute.xlu0 %1012
      %1014 = vrot.lane.b32.xlu0 %v1003, 32
      %v1015 = vpop.permute.xlu0 %1014
      %1016 = vrot.lane.b32.xlu0 %v1004, 32
      %v1017 = vpop.permute.xlu0 %1016
      %1018 = vrot.lane.b32.xlu0 %v1005, 32
      %v1019 = vpop.permute.xlu0 %1018
      %1020 = vrot.lane.b32.xlu0 %v1006, 32
      %v1021 = vpop.permute.xlu0 %1020
      %1022 = vrot.lane.b32.xlu0 %v1007, 32
      %v1023 = vpop.permute.xlu0 %1022
      %1024 = vrot.lane.b32.xlu0 %v1008, 32
      %v1025 = vpop.permute.xlu0 %1024
      %1026 = vrot.lane.b32.xlu0 %v1009, 32
      %v1027 = vpop.permute.xlu0 %1026
      %vm1028 = vcmask 261120
      %v1029 = vsel %vm1028, %v1011, %v1013
      %v1030 = vsel %vm1028, %v1013, %v1015
      %v1031 = vsel %vm1028, %v1015, %v1017
      %v1032 = vsel %vm1028, %v1017, %v1019
      %v1033 = vsel %vm1028, %v1019, %v1021
      %v1034 = vsel %vm1028, %v1021, %v1023
      %v1035 = vsel %vm1028, %v1023, %v1025
      %v1036 = vsel %vm1028, %v1025, %v1027
      %v1038 = vsel %vm367, %v986, 0
      %v1041 = vsel %vm371, %v1029, 0
      %v1044 = vsel %vm371, %v1030, 0
      %v1047 = vsel %vm371, %v1031, 0
      %v1050 = vsel %vm371, %v1032, 0
      %v1053 = vsel %vm371, %v1033, 0
      %v1056 = vsel %vm371, %v1034, 0
      %v1059 = vsel %vm371, %v1035, 0
      %v1062 = vsel %vm371, %v1036, 0
      %1064 = vmatprep.subr.bf16.mxu0 %v1044
      %1065 = vmatpush1.bf16.msra.mxu0 %v1041
      %1066 = vmatprep.subr.bf16.mxu0 0
      %1067 = vmatpush1.bf16.msra.mxu0 0
      %1068 = vmatprep.subr.bf16.mxu0 0
      %1069 = vmatpush1.bf16.msra.mxu0 0
      %1070 = vmatprep.subr.bf16.mxu0 0
      %1071 = vmatpush1.bf16.msra.mxu0 0
      %1072 = vmatprep.subr.bf16.mxu0 0
      %1073 = vmatpush1.bf16.msra.mxu0 0
      %1074 = vmatprep.subr.bf16.mxu0 0
      %1075 = vmatpush1.bf16.msra.mxu0 0
      %1076 = vmatprep.subr.bf16.mxu0 0
      %1077 = vmatpush1.bf16.msra.mxu0 0
      %1078 = vmatprep.subr.bf16.mxu0 0
      %1079 = vmatpush1.bf16.msra.mxu0 0
      %1080 = vmatprep.subr.bf16.mxu0 0
      %1081 = vmatpush1.bf16.msra.mxu0 0
      %1082 = vmatprep.subr.bf16.mxu0 0
      %1083 = vmatpush1.bf16.msra.mxu0 0
      %1084 = vmatprep.subr.bf16.mxu0 0
      %1085 = vmatpush1.bf16.msra.mxu0 0
      %1086 = vmatprep.subr.bf16.mxu0 0
      %1087 = vmatpush1.bf16.msra.mxu0 0
      %1088 = vmatprep.subr.bf16.mxu0 0
      %1089 = vmatpush1.bf16.msra.mxu0 0
      %1090 = vmatprep.subr.bf16.mxu0 0
      %1091 = vmatpush1.bf16.msra.mxu0 0
      %1092 = vmatprep.subr.bf16.mxu0 0
      %1093 = vmatpush1.bf16.msra.mxu0 0
      %1094 = vmatprep.subr.bf16.mxu0 0
      %1095 = vmatpush1.bf16.msra.mxu0 0
      %1096 = vmatprep.mubr.bf16.mxu0 0
      %1097 = vmatmul.mubr.bf16.gmra.mrb[0].mxu0 %v1038
      %v1098 = vpop.f32.mrb[0].mxu0
      %v1099 = vadd.f32 0.0, %v1098
      %v1100 = vpop.f32.mrb[0].mxu0
      %v1101 = vadd.f32 0.0, %v1100
      %v1102 = vpop.f32.mrb[0].mxu0
      %v1103 = vpop.f32.mrb[0].mxu0
      %1104 = vdwg.mxu0
      %1105 = vmatprep.subr.bf16.mxu0 %v1050
      %1106 = vmatpush1.bf16.msra.mxu0 %v1047
      %1107 = vmatprep.subr.bf16.mxu0 0
      %1108 = vmatpush1.bf16.msra.mxu0 0
      %1109 = vmatprep.subr.bf16.mxu0 0
      %1110 = vmatpush1.bf16.msra.mxu0 0
      %1111 = vmatprep.subr.bf16.mxu0 0
      %1112 = vmatpush1.bf16.msra.mxu0 0
      %1113 = vmatprep.subr.bf16.mxu0 0
      %1114 = vmatpush1.bf16.msra.mxu0 0
      %1115 = vmatprep.subr.bf16.mxu0 0
      %1116 = vmatpush1.bf16.msra.mxu0 0
      %1117 = vmatprep.subr.bf16.mxu0 0
      %1118 = vmatpush1.bf16.msra.mxu0 0
      %1119 = vmatprep.subr.bf16.mxu0 0
      %1120 = vmatpush1.bf16.msra.mxu0 0
      %1121 = vmatprep.subr.bf16.mxu0 0
      %1122 = vmatpush1.bf16.msra.mxu0 0
      %1123 = vmatprep.subr.bf16.mxu0 0
      %1124 = vmatpush1.bf16.msra.mxu0 0
      %1125 = vmatprep.subr.bf16.mxu0 0
      %1126 = vmatpush1.bf16.msra.mxu0 0
      %1127 = vmatprep.subr.bf16.mxu0 0
      %1128 = vmatpush1.bf16.msra.mxu0 0
      %1129 = vmatprep.subr.bf16.mxu0 0
      %1130 = vmatpush1.bf16.msra.mxu0 0
      %1131 = vmatprep.subr.bf16.mxu0 0
      %1132 = vmatpush1.bf16.msra.mxu0 0
      %1133 = vmatprep.subr.bf16.mxu0 0
      %1134 = vmatpush1.bf16.msra.mxu0 0
      %1135 = vmatprep.subr.bf16.mxu0 0
      %1136 = vmatpush1.bf16.msra.mxu0 0
      %1137 = vmatprep.mubr.bf16.mxu0 0
      %1138 = vmatmul.mubr.bf16.gmra.mrb[0].mxu0 %v1038
      %v1139 = vpop.f32.mrb[0].mxu0
      %v1140 = vadd.f32 0.0, %v1139
      %v1141 = vpop.f32.mrb[0].mxu0
      %v1142 = vadd.f32 0.0, %v1141
      %v1143 = vpop.f32.mrb[0].mxu0
      %v1144 = vpop.f32.mrb[0].mxu0
      %1145 = vdwg.mxu0
      %1146 = vmatprep.subr.bf16.mxu0 %v1056
      %1147 = vmatpush1.bf16.msra.mxu0 %v1053
      %1148 = vmatprep.subr.bf16.mxu0 0
      %1149 = vmatpush1.bf16.msra.mxu0 0
      %1150 = vmatprep.subr.bf16.mxu0 0
      %1151 = vmatpush1.bf16.msra.mxu0 0
      %1152 = vmatprep.subr.bf16.mxu0 0
      %1153 = vmatpush1.bf16.msra.mxu0 0
      %1154 = vmatprep.subr.bf16.mxu0 0
      %1155 = vmatpush1.bf16.msra.mxu0 0
      %1156 = vmatprep.subr.bf16.mxu0 0
      %1157 = vmatpush1.bf16.msra.mxu0 0
      %1158 = vmatprep.subr.bf16.mxu0 0
      %1159 = vmatpush1.bf16.msra.mxu0 0
      %1160 = vmatprep.subr.bf16.mxu0 0
      %1161 = vmatpush1.bf16.msra.mxu0 0
      %1162 = vmatprep.subr.bf16.mxu0 0
      %1163 = vmatpush1.bf16.msra.mxu0 0
      %1164 = vmatprep.subr.bf16.mxu0 0
      %1165 = vmatpush1.bf16.msra.mxu0 0
      %1166 = vmatprep.subr.bf16.mxu0 0
      %1167 = vmatpush1.bf16.msra.mxu0 0
      %1168 = vmatprep.subr.bf16.mxu0 0
      %1169 = vmatpush1.bf16.msra.mxu0 0
      %1170 = vmatprep.subr.bf16.mxu0 0
      %1171 = vmatpush1.bf16.msra.mxu0 0
      %1172 = vmatprep.subr.bf16.mxu0 0
      %1173 = vmatpush1.bf16.msra.mxu0 0
      %1174 = vmatprep.subr.bf16.mxu0 0
      %1175 = vmatpush1.bf16.msra.mxu0 0
      %1176 = vmatprep.subr.bf16.mxu0 0
      %1177 = vmatpush1.bf16.msra.mxu0 0
      %1178 = vmatprep.mubr.bf16.mxu0 0
      %1179 = vmatmul.mubr.bf16.gmra.mrb[0].mxu0 %v1038
      %v1180 = vpop.f32.mrb[0].mxu0
      %v1181 = vadd.f32 0.0, %v1180
      %v1182 = vpop.f32.mrb[0].mxu0
      %v1183 = vadd.f32 0.0, %v1182
      %v1184 = vpop.f32.mrb[0].mxu0
      %v1185 = vpop.f32.mrb[0].mxu0
      %1186 = vdwg.mxu0
      %1187 = vmatprep.subr.bf16.mxu0 %v1062
      %1188 = vmatpush1.bf16.msra.mxu0 %v1059
      %1189 = vmatprep.subr.bf16.mxu0 0
      %1190 = vmatpush1.bf16.msra.mxu0 0
      %1191 = vmatprep.subr.bf16.mxu0 0
      %1192 = vmatpush1.bf16.msra.mxu0 0
      %1193 = vmatprep.subr.bf16.mxu0 0
      %1194 = vmatpush1.bf16.msra.mxu0 0
      %1195 = vmatprep.subr.bf16.mxu0 0
      %1196 = vmatpush1.bf16.msra.mxu0 0
      %1197 = vmatprep.subr.bf16.mxu0 0
      %1198 = vmatpush1.bf16.msra.mxu0 0
      %1199 = vmatprep.subr.bf16.mxu0 0
      %1200 = vmatpush1.bf16.msra.mxu0 0
      %1201 = vmatprep.subr.bf16.mxu0 0
      %1202 = vmatpush1.bf16.msra.mxu0 0
      %1203 = vmatprep.subr.bf16.mxu0 0
      %1204 = vmatpush1.bf16.msra.mxu0 0
      %1205 = vmatprep.subr.bf16.mxu0 0
      %1206 = vmatpush1.bf16.msra.mxu0 0
      %1207 = vmatprep.subr.bf16.mxu0 0
      %1208 = vmatpush1.bf16.msra.mxu0 0
      %1209 = vmatprep.subr.bf16.mxu0 0
      %1210 = vmatpush1.bf16.msra.mxu0 0
      %1211 = vmatprep.subr.bf16.mxu0 0
      %1212 = vmatpush1.bf16.msra.mxu0 0
      %1213 = vmatprep.subr.bf16.mxu0 0
      %1214 = vmatpush1.bf16.msra.mxu0 0
      %1215 = vmatprep.subr.bf16.mxu0 0
      %1216 = vmatpush1.bf16.msra.mxu0 0
      %1217 = vmatprep.subr.bf16.mxu0 0
      %1218 = vmatpush1.bf16.msra.mxu0 0
      %1219 = vmatprep.mubr.bf16.mxu0 0
      %1220 = vmatmul.mubr.bf16.gmra.mrb[0].mxu0 %v1038
      %v1221 = vpop.f32.mrb[0].mxu0
      %v1222 = vadd.f32 0.0, %v1221
      %v1223 = vpop.f32.mrb[0].mxu0
      %v1224 = vadd.f32 0.0, %v1223
      %v1225 = vpop.f32.mrb[0].mxu0
      %v1226 = vpop.f32.mrb[0].mxu0
      %1227 = vdwg.mxu0
      %v1228 = vld [vmem:[#allocation3] sm:$0xff]
      %v1229 = vld [vmem:[#allocation3 + $0x8] sm:$0xff]
      %v1230 = vld [vmem:[#allocation3 + $0x10] sm:$0xff]
      %v1231 = vld [vmem:[#allocation3 + $0x18] sm:$0xff]
      %v1232 = vld [vmem:[#allocation3 + $0x20] sm:$0xff]
      %v1233 = vld [vmem:[#allocation3 + $0x28] sm:$0xff]
      %v1234 = vld [vmem:[#allocation3 + $0x30] sm:$0xff]
      %v1235 = vld [vmem:[#allocation3 + $0x38] sm:$0xff]
      %v1236 = vadd.f32 %v1228, %v1099
      %v1237 = vadd.f32 %v1229, %v1101
      %v1238 = vadd.f32 %v1230, %v1140
      %v1239 = vadd.f32 %v1231, %v1142
      %v1240 = vadd.f32 %v1232, %v1181
      %v1241 = vadd.f32 %v1233, %v1183
      %v1242 = vadd.f32 %v1234, %v1222
      %v1243 = vadd.f32 %v1235, %v1224
      %1244 = vst [vmem:[#allocation3] sm:$0xff] %v1236
      %1245 = vst [vmem:[#allocation3 + $0x8] sm:$0xff] %v1237
      %1246 = vst [vmem:[#allocation3 + $0x10] sm:$0xff] %v1238
      %1247 = vst [vmem:[#allocation3 + $0x18] sm:$0xff] %v1239
      %1248 = vst [vmem:[#allocation3 + $0x20] sm:$0xff] %v1240
      %1249 = vst [vmem:[#allocation3 + $0x28] sm:$0xff] %v1241
      %1250 = vst [vmem:[#allocation3 + $0x30] sm:$0xff] %v1242
      %1251 = vst [vmem:[#allocation3 + $0x38] sm:$0xff] %v1243
      %v1252 = vld [vmem:[#allocation2] sm:$0xff]
      %v1253 = vld [vmem:[#allocation2 + $0x8] sm:$0xff]
      %v1254 = vld [vmem:[#allocation2 + $0x10] sm:$0xff]
      %v1255 = vld [vmem:[#allocation2 + $0x18] sm:$0xff]
      %v1256 = vld [vmem:[#allocation2 + $0x20] sm:$0xf]
      %s1257 = scalar_lea.vmem %s5, 8
      %v1258 = vld [vmem:[%s1257] sm:$0xf]
      %v1264 = vunpack.c.l.b16 %v1252
      %v1265 = vunpack.c.h.b16 %v1252
      %v1266 = vunpack.c.l.b16 %v1253
      %v1267 = vunpack.c.h.b16 %v1253
      %v1268 = vunpack.c.l.b16 %v1254
      %v1269 = vunpack.c.h.b16 %v1254
      %v1270 = vunpack.c.l.b16 %v1255
      %v1271 = vunpack.c.h.b16 %v1255
      %v1272 = vunpack.c.l.b16 %v1256
      %v1273 = vpack.c.b16 %v1264, %v1264
      %v1274 = vpack.c.b16 %v1265, %v1265
      %v1275 = vpack.c.b16 %v1266, %v1266
      %v1276 = vpack.c.b16 %v1267, %v1267
      %v1277 = vpack.c.b16 %v1268, %v1268
      %v1278 = vpack.c.b16 %v1269, %v1269
      %v1279 = vpack.c.b16 %v1270, %v1270
      %v1280 = vpack.c.b16 %v1271, %v1271
      %v1281 = vpack.c.b16 %v1272, %v1272
      %1282 = vrot.lane.b32.xlu0 %v1273, 31
      %v1283 = vpop.permute.xlu0 %1282
      %1284 = vrot.lane.b32.xlu0 %v1274, 31
      %v1285 = vpop.permute.xlu0 %1284
      %1286 = vrot.lane.b32.xlu0 %v1275, 31
      %v1287 = vpop.permute.xlu0 %1286
      %1288 = vrot.lane.b32.xlu0 %v1276, 31
      %v1289 = vpop.permute.xlu0 %1288
      %1290 = vrot.lane.b32.xlu0 %v1277, 31
      %v1291 = vpop.permute.xlu0 %1290
      %1292 = vrot.lane.b32.xlu0 %v1278, 31
      %v1293 = vpop.permute.xlu0 %1292
      %1294 = vrot.lane.b32.xlu0 %v1279, 31
      %v1295 = vpop.permute.xlu0 %1294
      %1296 = vrot.lane.b32.xlu0 %v1280, 31
      %v1297 = vpop.permute.xlu0 %1296
      %1298 = vrot.lane.b32.xlu0 %v1281, 31
      %v1299 = vpop.permute.xlu0 %1298
      %vm1300 = vcmask 252928
      %v1301 = vsel %vm1300, %v1283, %v1285
      %v1302 = vsel %vm1300, %v1285, %v1287
      %v1303 = vsel %vm1300, %v1287, %v1289
      %v1304 = vsel %vm1300, %v1289, %v1291
      %v1305 = vsel %vm1300, %v1291, %v1293
      %v1306 = vsel %vm1300, %v1293, %v1295
      %v1307 = vsel %vm1300, %v1295, %v1297
      %v1308 = vsel %vm1300, %v1297, %v1299
      %v1310 = vsel %vm367, %v1258, 0
      %v1313 = vsel %vm371, %v1301, 0
      %v1316 = vsel %vm371, %v1302, 0
      %v1319 = vsel %vm371, %v1303, 0
      %v1322 = vsel %vm371, %v1304, 0
      %v1325 = vsel %vm371, %v1305, 0
      %v1328 = vsel %vm371, %v1306, 0
      %v1331 = vsel %vm371, %v1307, 0
      %v1334 = vsel %vm371, %v1308, 0
      %1336 = vmatprep.subr.bf16.mxu0 %v1316
      %1337 = vmatpush1.bf16.msra.mxu0 %v1313
      %1338 = vmatprep.subr.bf16.mxu0 0
      %1339 = vmatpush1.bf16.msra.mxu0 0
      %1340 = vmatprep.subr.bf16.mxu0 0
      %1341 = vmatpush1.bf16.msra.mxu0 0
      %1342 = vmatprep.subr.bf16.mxu0 0
      %1343 = vmatpush1.bf16.msra.mxu0 0
      %1344 = vmatprep.subr.bf16.mxu0 0
      %1345 = vmatpush1.bf16.msra.mxu0 0
      %1346 = vmatprep.subr.bf16.mxu0 0
      %1347 = vmatpush1.bf16.msra.mxu0 0
      %1348 = vmatprep.subr.bf16.mxu0 0
      %1349 = vmatpush1.bf16.msra.mxu0 0
      %1350 = vmatprep.subr.bf16.mxu0 0
      %1351 = vmatpush1.bf16.msra.mxu0 0
      %1352 = vmatprep.subr.bf16.mxu0 0
      %1353 = vmatpush1.bf16.msra.mxu0 0
      %1354 = vmatprep.subr.bf16.mxu0 0
      %1355 = vmatpush1.bf16.msra.mxu0 0
      %1356 = vmatprep.subr.bf16.mxu0 0
      %1357 = vmatpush1.bf16.msra.mxu0 0
      %1358 = vmatprep.subr.bf16.mxu0 0
      %1359 = vmatpush1.bf16.msra.mxu0 0
      %1360 = vmatprep.subr.bf16.mxu0 0
      %1361 = vmatpush1.bf16.msra.mxu0 0
      %1362 = vmatprep.subr.bf16.mxu0 0
      %1363 = vmatpush1.bf16.msra.mxu0 0
      %1364 = vmatprep.subr.bf16.mxu0 0
      %1365 = vmatpush1.bf16.msra.mxu0 0
      %1366 = vmatprep.subr.bf16.mxu0 0
      %1367 = vmatpush1.bf16.msra.mxu0 0
      %1368 = vmatprep.mubr.bf16.mxu0 0
      %1369 = vmatmul.mubr.bf16.gmra.mrb[0].mxu0 %v1310
      %v1370 = vpop.f32.mrb[0].mxu0
      %v1371 = vadd.f32 0.0, %v1370
      %v1372 = vpop.f32.mrb[0].mxu0
      %v1373 = vadd.f32 0.0, %v1372
      %v1374 = vpop.f32.mrb[0].mxu0
      %v1375 = vpop.f32.mrb[0].mxu0
      %1376 = vdwg.mxu0
      %1377 = vmatprep.subr.bf16.mxu0 %v1322
      %1378 = vmatpush1.bf16.msra.mxu0 %v1319
      %1379 = vmatprep.subr.bf16.mxu0 0
      %1380 = vmatpush1.bf16.msra.mxu0 0
      %1381 = vmatprep.subr.bf16.mxu0 0
      %1382 = vmatpush1.bf16.msra.mxu0 0
      %1383 = vmatprep.subr.bf16.mxu0 0
      %1384 = vmatpush1.bf16.msra.mxu0 0
      %1385 = vmatprep.subr.bf16.mxu0 0
      %1386 = vmatpush1.bf16.msra.mxu0 0
      %1387 = vmatprep.subr.bf16.mxu0 0
      %1388 = vmatpush1.bf16.msra.mxu0 0
      %1389 = vmatprep.subr.bf16.mxu0 0
      %1390 = vmatpush1.bf16.msra.mxu0 0
      %1391 = vmatprep.subr.bf16.mxu0 0
      %1392 = vmatpush1.bf16.msra.mxu0 0
      %1393 = vmatprep.subr.bf16.mxu0 0
      %1394 = vmatpush1.bf16.msra.mxu0 0
      %1395 = vmatprep.subr.bf16.mxu0 0
      %1396 = vmatpush1.bf16.msra.mxu0 0
      %1397 = vmatprep.subr.bf16.mxu0 0
      %1398 = vmatpush1.bf16.msra.mxu0 0
      %1399 = vmatprep.subr.bf16.mxu0 0
      %1400 = vmatpush1.bf16.msra.mxu0 0
      %1401 = vmatprep.subr.bf16.mxu0 0
      %1402 = vmatpush1.bf16.msra.mxu0 0
      %1403 = vmatprep.subr.bf16.mxu0 0
      %1404 = vmatpush1.bf16.msra.mxu0 0
      %1405 = vmatprep.subr.bf16.mxu0 0
      %1406 = vmatpush1.bf16.msra.mxu0 0
      %1407 = vmatprep.subr.bf16.mxu0 0
      %1408 = vmatpush1.bf16.msra.mxu0 0
      %1409 = vmatprep.mubr.bf16.mxu0 0
      %1410 = vmatmul.mubr.bf16.gmra.mrb[0].mxu0 %v1310
      %v1411 = vpop.f32.mrb[0].mxu0
      %v1412 = vadd.f32 0.0, %v1411
      %v1413 = vpop.f32.mrb[0].mxu0
      %v1414 = vadd.f32 0.0, %v1413
      %v1415 = vpop.f32.mrb[0].mxu0
      %v1416 = vpop.f32.mrb[0].mxu0
      %1417 = vdwg.mxu0
      %1418 = vmatprep.subr.bf16.mxu0 %v1328
      %1419 = vmatpush1.bf16.msra.mxu0 %v1325
      %1420 = vmatprep.subr.bf16.mxu0 0
      %1421 = vmatpush1.bf16.msra.mxu0 0
      %1422 = vmatprep.subr.bf16.mxu0 0
      %1423 = vmatpush1.bf16.msra.mxu0 0
      %1424 = vmatprep.subr.bf16.mxu0 0
      %1425 = vmatpush1.bf16.msra.mxu0 0
      %1426 = vmatprep.subr.bf16.mxu0 0
      %1427 = vmatpush1.bf16.msra.mxu0 0
      %1428 = vmatprep.subr.bf16.mxu0 0
      %1429 = vmatpush1.bf16.msra.mxu0 0
      %1430 = vmatprep.subr.bf16.mxu0 0
      %1431 = vmatpush1.bf16.msra.mxu0 0
      %1432 = vmatprep.subr.bf16.mxu0 0
      %1433 = vmatpush1.bf16.msra.mxu0 0
      %1434 = vmatprep.subr.bf16.mxu0 0
      %1435 = vmatpush1.bf16.msra.mxu0 0
      %1436 = vmatprep.subr.bf16.mxu0 0
      %1437 = vmatpush1.bf16.msra.mxu0 0
      %1438 = vmatprep.subr.bf16.mxu0 0
      %1439 = vmatpush1.bf16.msra.mxu0 0
      %1440 = vmatprep.subr.bf16.mxu0 0
      %1441 = vmatpush1.bf16.msra.mxu0 0
      %1442 = vmatprep.subr.bf16.mxu0 0
      %1443 = vmatpush1.bf16.msra.mxu0 0
      %1444 = vmatprep.subr.bf16.mxu0 0
      %1445 = vmatpush1.bf16.msra.mxu0 0
      %1446 = vmatprep.subr.bf16.mxu0 0
      %1447 = vmatpush1.bf16.msra.mxu0 0
      %1448 = vmatprep.subr.bf16.mxu0 0
      %1449 = vmatpush1.bf16.msra.mxu0 0
      %1450 = vmatprep.mubr.bf16.mxu0 0
      %1451 = vmatmul.mubr.bf16.gmra.mrb[0].mxu0 %v1310
      %v1452 = vpop.f32.mrb[0].mxu0
      %v1453 = vadd.f32 0.0, %v1452
      %v1454 = vpop.f32.mrb[0].mxu0
      %v1455 = vadd.f32 0.0, %v1454
      %v1456 = vpop.f32.mrb[0].mxu0
      %v1457 = vpop.f32.mrb[0].mxu0
      %1458 = vdwg.mxu0
      %1459 = vmatprep.subr.bf16.mxu0 %v1334
      %1460 = vmatpush1.bf16.msra.mxu0 %v1331
      %1461 = vmatprep.subr.bf16.mxu0 0
      %1462 = vmatpush1.bf16.msra.mxu0 0
      %1463 = vmatprep.subr.bf16.mxu0 0
      %1464 = vmatpush1.bf16.msra.mxu0 0
      %1465 = vmatprep.subr.bf16.mxu0 0
      %1466 = vmatpush1.bf16.msra.mxu0 0
      %1467 = vmatprep.subr.bf16.mxu0 0
      %1468 = vmatpush1.bf16.msra.mxu0 0
      %1469 = vmatprep.subr.bf16.mxu0 0
      %1470 = vmatpush1.bf16.msra.mxu0 0
      %1471 = vmatprep.subr.bf16.mxu0 0
      %1472 = vmatpush1.bf16.msra.mxu0 0
      %1473 = vmatprep.subr.bf16.mxu0 0
      %1474 = vmatpush1.bf16.msra.mxu0 0
      %1475 = vmatprep.subr.bf16.mxu0 0
      %1476 = vmatpush1.bf16.msra.mxu0 0
      %1477 = vmatprep.subr.bf16.mxu0 0
      %1478 = vmatpush1.bf16.msra.mxu0 0
      %1479 = vmatprep.subr.bf16.mxu0 0
      %1480 = vmatpush1.bf16.msra.mxu0 0
      %1481 = vmatprep.subr.bf16.mxu0 0
      %1482 = vmatpush1.bf16.msra.mxu0 0
      %1483 = vmatprep.subr.bf16.mxu0 0
      %1484 = vmatpush1.bf16.msra.mxu0 0
      %1485 = vmatprep.subr.bf16.mxu0 0
      %1486 = vmatpush1.bf16.msra.mxu0 0
      %1487 = vmatprep.subr.bf16.mxu0 0
      %1488 = vmatpush1.bf16.msra.mxu0 0
      %1489 = vmatprep.subr.bf16.mxu0 0
      %1490 = vmatpush1.bf16.msra.mxu0 0
      %1491 = vmatprep.mubr.bf16.mxu0 0
      %1492 = vmatmul.mubr.bf16.gmra.mrb[0].mxu0 %v1310
      %v1493 = vpop.f32.mrb[0].mxu0
      %v1494 = vadd.f32 0.0, %v1493
      %v1495 = vpop.f32.mrb[0].mxu0
      %v1496 = vadd.f32 0.0, %v1495
      %v1497 = vpop.f32.mrb[0].mxu0
      %v1498 = vpop.f32.mrb[0].mxu0
      %1499 = vdwg.mxu0
      %v1500 = vmul.f32 %v1371, %v656
      %v1501 = vmul.f32 %v1373, %v660
      %v1502 = vmul.f32 %v1412, %v664
      %v1503 = vmul.f32 %v1414, %v668
      %v1504 = vmul.f32 %v1453, %v672
      %v1505 = vmul.f32 %v1455, %v676
      %v1506 = vmul.f32 %v1494, %v680
      %v1507 = vmul.f32 %v1496, %v684
      %v1508 = vld [vmem:[#allocation3] sm:$0xff]
      %v1509 = vld [vmem:[#allocation3 + $0x8] sm:$0xff]
      %v1510 = vld [vmem:[#allocation3 + $0x10] sm:$0xff]
      %v1511 = vld [vmem:[#allocation3 + $0x18] sm:$0xff]
      %v1512 = vld [vmem:[#allocation3 + $0x20] sm:$0xff]
      %v1513 = vld [vmem:[#allocation3 + $0x28] sm:$0xff]
      %v1514 = vld [vmem:[#allocation3 + $0x30] sm:$0xff]
      %v1515 = vld [vmem:[#allocation3 + $0x38] sm:$0xff]
      %v1516 = vadd.f32 %v1508, %v1500
      %v1517 = vadd.f32 %v1509, %v1501
      %v1518 = vadd.f32 %v1510, %v1502
      %v1519 = vadd.f32 %v1511, %v1503
      %v1520 = vadd.f32 %v1512, %v1504
      %v1521 = vadd.f32 %v1513, %v1505
      %v1522 = vadd.f32 %v1514, %v1506
      %v1523 = vadd.f32 %v1515, %v1507
      %1524 = vst [vmem:[#allocation3] sm:$0xff] %v1516
      %1525 = vst [vmem:[#allocation3 + $0x8] sm:$0xff] %v1517
      %1526 = vst [vmem:[#allocation3 + $0x10] sm:$0xff] %v1518
      %1527 = vst [vmem:[#allocation3 + $0x18] sm:$0xff] %v1519
      %1528 = vst [vmem:[#allocation3 + $0x20] sm:$0xff] %v1520
      %1529 = vst [vmem:[#allocation3 + $0x28] sm:$0xff] %v1521
      %1530 = vst [vmem:[#allocation3 + $0x30] sm:$0xff] %v1522
      %1531 = vst [vmem:[#allocation3 + $0x38] sm:$0xff] %v1523
      %v1532 = vld [vmem:[#allocation2] sm:$0xff]
      %v1533 = vld [vmem:[#allocation2 + $0x8] sm:$0xff]
      %v1534 = vld [vmem:[#allocation2 + $0x10] sm:$0xff]
      %v1535 = vld [vmem:[#allocation2 + $0x18] sm:$0xff]
      %v1536 = vld [vmem:[#allocation2 + $0x20] sm:$0xf]
      %s1537 = scalar_lea.vmem %s5, 12
      %v1538 = vld [vmem:[%s1537] sm:$0xf]
      %v1544 = vunpack.c.l.b16 %v1532
      %v1545 = vunpack.c.h.b16 %v1532
      %v1546 = vunpack.c.l.b16 %v1533
      %v1547 = vunpack.c.h.b16 %v1533
      %v1548 = vunpack.c.l.b16 %v1534
      %v1549 = vunpack.c.h.b16 %v1534
      %v1550 = vunpack.c.l.b16 %v1535
      %v1551 = vunpack.c.h.b16 %v1535
      %v1552 = vunpack.c.l.b16 %v1536
      %v1553 = vpack.c.b16 %v1544, %v1544
      %v1554 = vpack.c.b16 %v1545, %v1545
      %v1555 = vpack.c.b16 %v1546, %v1546
      %v1556 = vpack.c.b16 %v1547, %v1547
      %v1557 = vpack.c.b16 %v1548, %v1548
      %v1558 = vpack.c.b16 %v1549, %v1549
      %v1559 = vpack.c.b16 %v1550, %v1550
      %v1560 = vpack.c.b16 %v1551, %v1551
      %v1561 = vpack.c.b16 %v1552, %v1552
      %1562 = vrot.lane.b32.xlu0 %v1553, 1
      %v1563 = vpop.permute.xlu0 %1562
      %1564 = vrot.lane.b32.xlu0 %v1554, 1
      %v1565 = vpop.permute.xlu0 %1564
      %1566 = vrot.lane.b32.xlu0 %v1555, 1
      %v1567 = vpop.permute.xlu0 %1566
      %1568 = vrot.lane.b32.xlu0 %v1556, 1
      %v1569 = vpop.permute.xlu0 %1568
      %1570 = vrot.lane.b32.xlu0 %v1557, 1
      %v1571 = vpop.permute.xlu0 %1570
      %1572 = vrot.lane.b32.xlu0 %v1558, 1
      %v1573 = vpop.permute.xlu0 %1572
      %1574 = vrot.lane.b32.xlu0 %v1559, 1
      %v1575 = vpop.permute.xlu0 %1574
      %1576 = vrot.lane.b32.xlu0 %v1560, 1
      %v1577 = vpop.permute.xlu0 %1576
      %1578 = vrot.lane.b32.xlu0 %v1561, 1
      %v1579 = vpop.permute.xlu0 %1578
      %vm1580 = vcmask 7168
      %v1581 = vsel %vm1580, %v1563, %v1565
      %v1582 = vsel %vm1580, %v1565, %v1567
      %v1583 = vsel %vm1580, %v1567, %v1569
      %v1584 = vsel %vm1580, %v1569, %v1571
      %v1585 = vsel %vm1580, %v1571, %v1573
      %v1586 = vsel %vm1580, %v1573, %v1575
      %v1587 = vsel %vm1580, %v1575, %v1577
      %v1588 = vsel %vm1580, %v1577, %v1579
      %v1590 = vsel %vm367, %v1538, 0
      %v1593 = vsel %vm371, %v1581, 0
      %v1596 = vsel %vm371, %v1582, 0
      %v1599 = vsel %vm371, %v1583, 0
      %v1602 = vsel %vm371, %v1584, 0
      %v1605 = vsel %vm371, %v1585, 0
      %v1608 = vsel %vm371, %v1586, 0
      %v1611 = vsel %vm371, %v1587, 0
      %v1614 = vsel %vm371, %v1588, 0
      %1616 = vmatprep.subr.bf16.mxu0 %v1596
      %1617 = vmatpush1.bf16.msra.mxu0 %v1593
      %1618 = vmatprep.subr.bf16.mxu0 0
      %1619 = vmatpush1.bf16.msra.mxu0 0
      %1620 = vmatprep.subr.bf16.mxu0 0
      %1621 = vmatpush1.bf16.msra.mxu0 0
      %1622 = vmatprep.subr.bf16.mxu0 0
      %1623 = vmatpush1.bf16.msra.mxu0 0
      %1624 = vmatprep.subr.bf16.mxu0 0
      %1625 = vmatpush1.bf16.msra.mxu0 0
      %1626 = vmatprep.subr.bf16.mxu0 0
      %1627 = vmatpush1.bf16.msra.mxu0 0
      %1628 = vmatprep.subr.bf16.mxu0 0
      %1629 = vmatpush1.bf16.msra.mxu0 0
      %1630 = vmatprep.subr.bf16.mxu0 0
      %1631 = vmatpush1.bf16.msra.mxu0 0
      %1632 = vmatprep.subr.bf16.mxu0 0
      %1633 = vmatpush1.bf16.msra.mxu0 0
      %1634 = vmatprep.subr.bf16.mxu0 0
      %1635 = vmatpush1.bf16.msra.mxu0 0
      %1636 = vmatprep.subr.bf16.mxu0 0
      %1637 = vmatpush1.bf16.msra.mxu0 0
      %1638 = vmatprep.subr.bf16.mxu0 0
      %1639 = vmatpush1.bf16.msra.mxu0 0
      %1640 = vmatprep.subr.bf16.mxu0 0
      %1641 = vmatpush1.bf16.msra.mxu0 0
      %1642 = vmatprep.subr.bf16.mxu0 0
      %1643 = vmatpush1.bf16.msra.mxu0 0
      %1644 = vmatprep.subr.bf16.mxu0 0
      %1645 = vmatpush1.bf16.msra.mxu0 0
      %1646 = vmatprep.subr.bf16.mxu0 0
      %1647 = vmatpush1.bf16.msra.mxu0 0
      %1648 = vmatprep.mubr.bf16.mxu0 0
      %1649 = vmatmul.mubr.bf16.gmra.mrb[0].mxu0 %v1590
      %v1650 = vpop.f32.mrb[0].mxu0
      %v1651 = vadd.f32 0.0, %v1650
      %v1652 = vpop.f32.mrb[0].mxu0
      %v1653 = vadd.f32 0.0, %v1652
      %v1654 = vpop.f32.mrb[0].mxu0
      %v1655 = vpop.f32.mrb[0].mxu0
      %1656 = vdwg.mxu0
      %1657 = vmatprep.subr.bf16.mxu0 %v1602
      %1658 = vmatpush1.bf16.msra.mxu0 %v1599
      %1659 = vmatprep.subr.bf16.mxu0 0
      %1660 = vmatpush1.bf16.msra.mxu0 0
      %1661 = vmatprep.subr.bf16.mxu0 0
      %1662 = vmatpush1.bf16.msra.mxu0 0
      %1663 = vmatprep.subr.bf16.mxu0 0
      %1664 = vmatpush1.bf16.msra.mxu0 0
      %1665 = vmatprep.subr.bf16.mxu0 0
      %1666 = vmatpush1.bf16.msra.mxu0 0
      %1667 = vmatprep.subr.bf16.mxu0 0
      %1668 = vmatpush1.bf16.msra.mxu0 0
      %1669 = vmatprep.subr.bf16.mxu0 0
      %1670 = vmatpush1.bf16.msra.mxu0 0
      %1671 = vmatprep.subr.bf16.mxu0 0
      %1672 = vmatpush1.bf16.msra.mxu0 0
      %1673 = vmatprep.subr.bf16.mxu0 0
      %1674 = vmatpush1.bf16.msra.mxu0 0
      %1675 = vmatprep.subr.bf16.mxu0 0
      %1676 = vmatpush1.bf16.msra.mxu0 0
      %1677 = vmatprep.subr.bf16.mxu0 0
      %1678 = vmatpush1.bf16.msra.mxu0 0
      %1679 = vmatprep.subr.bf16.mxu0 0
      %1680 = vmatpush1.bf16.msra.mxu0 0
      %1681 = vmatprep.subr.bf16.mxu0 0
      %1682 = vmatpush1.bf16.msra.mxu0 0
      %1683 = vmatprep.subr.bf16.mxu0 0
      %1684 = vmatpush1.bf16.msra.mxu0 0
      %1685 = vmatprep.subr.bf16.mxu0 0
      %1686 = vmatpush1.bf16.msra.mxu0 0
      %1687 = vmatprep.subr.bf16.mxu0 0
      %1688 = vmatpush1.bf16.msra.mxu0 0
      %1689 = vmatprep.mubr.bf16.mxu0 0
      %1690 = vmatmul.mubr.bf16.gmra.mrb[0].mxu0 %v1590
      %v1691 = vpop.f32.mrb[0].mxu0
      %v1692 = vadd.f32 0.0, %v1691
      %v1693 = vpop.f32.mrb[0].mxu0
      %v1694 = vadd.f32 0.0, %v1693
      %v1695 = vpop.f32.mrb[0].mxu0
      %v1696 = vpop.f32.mrb[0].mxu0
      %1697 = vdwg.mxu0
      %1698 = vmatprep.subr.bf16.mxu0 %v1608
      %1699 = vmatpush1.bf16.msra.mxu0 %v1605
      %1700 = vmatprep.subr.bf16.mxu0 0
      %1701 = vmatpush1.bf16.msra.mxu0 0
      %1702 = vmatprep.subr.bf16.mxu0 0
      %1703 = vmatpush1.bf16.msra.mxu0 0
      %1704 = vmatprep.subr.bf16.mxu0 0
      %1705 = vmatpush1.bf16.msra.mxu0 0
      %1706 = vmatprep.subr.bf16.mxu0 0
      %1707 = vmatpush1.bf16.msra.mxu0 0
      %1708 = vmatprep.subr.bf16.mxu0 0
      %1709 = vmatpush1.bf16.msra.mxu0 0
      %1710 = vmatprep.subr.bf16.mxu0 0
      %1711 = vmatpush1.bf16.msra.mxu0 0
      %1712 = vmatprep.subr.bf16.mxu0 0
      %1713 = vmatpush1.bf16.msra.mxu0 0
      %1714 = vmatprep.subr.bf16.mxu0 0
      %1715 = vmatpush1.bf16.msra.mxu0 0
      %1716 = vmatprep.subr.bf16.mxu0 0
      %1717 = vmatpush1.bf16.msra.mxu0 0
      %1718 = vmatprep.subr.bf16.mxu0 0
      %1719 = vmatpush1.bf16.msra.mxu0 0
      %1720 = vmatprep.subr.bf16.mxu0 0
      %1721 = vmatpush1.bf16.msra.mxu0 0
      %1722 = vmatprep.subr.bf16.mxu0 0
      %1723 = vmatpush1.bf16.msra.mxu0 0
      %1724 = vmatprep.subr.bf16.mxu0 0
      %1725 = vmatpush1.bf16.msra.mxu0 0
      %1726 = vmatprep.subr.bf16.mxu0 0
      %1727 = vmatpush1.bf16.msra.mxu0 0
      %1728 = vmatprep.subr.bf16.mxu0 0
      %1729 = vmatpush1.bf16.msra.mxu0 0
      %1730 = vmatprep.mubr.bf16.mxu0 0
      %1731 = vmatmul.mubr.bf16.gmra.mrb[0].mxu0 %v1590
      %v1732 = vpop.f32.mrb[0].mxu0
      %v1733 = vadd.f32 0.0, %v1732
      %v1734 = vpop.f32.mrb[0].mxu0
      %v1735 = vadd.f32 0.0, %v1734
      %v1736 = vpop.f32.mrb[0].mxu0
      %v1737 = vpop.f32.mrb[0].mxu0
      %1738 = vdwg.mxu0
      %1739 = vmatprep.subr.bf16.mxu0 %v1614
      %1740 = vmatpush1.bf16.msra.mxu0 %v1611
      %1741 = vmatprep.subr.bf16.mxu0 0
      %1742 = vmatpush1.bf16.msra.mxu0 0
      %1743 = vmatprep.subr.bf16.mxu0 0
      %1744 = vmatpush1.bf16.msra.mxu0 0
      %1745 = vmatprep.subr.bf16.mxu0 0
      %1746 = vmatpush1.bf16.msra.mxu0 0
      %1747 = vmatprep.subr.bf16.mxu0 0
      %1748 = vmatpush1.bf16.msra.mxu0 0
      %1749 = vmatprep.subr.bf16.mxu0 0
      %1750 = vmatpush1.bf16.msra.mxu0 0
      %1751 = vmatprep.subr.bf16.mxu0 0
      %1752 = vmatpush1.bf16.msra.mxu0 0
      %1753 = vmatprep.subr.bf16.mxu0 0
      %1754 = vmatpush1.bf16.msra.mxu0 0
      %1755 = vmatprep.subr.bf16.mxu0 0
      %1756 = vmatpush1.bf16.msra.mxu0 0
      %1757 = vmatprep.subr.bf16.mxu0 0
      %1758 = vmatpush1.bf16.msra.mxu0 0
      %1759 = vmatprep.subr.bf16.mxu0 0
      %1760 = vmatpush1.bf16.msra.mxu0 0
      %1761 = vmatprep.subr.bf16.mxu0 0
      %1762 = vmatpush1.bf16.msra.mxu0 0
      %1763 = vmatprep.subr.bf16.mxu0 0
      %1764 = vmatpush1.bf16.msra.mxu0 0
      %1765 = vmatprep.subr.bf16.mxu0 0
      %1766 = vmatpush1.bf16.msra.mxu0 0
      %1767 = vmatprep.subr.bf16.mxu0 0
      %1768 = vmatpush1.bf16.msra.mxu0 0
      %1769 = vmatprep.subr.bf16.mxu0 0
      %1770 = vmatpush1.bf16.msra.mxu0 0
      %1771 = vmatprep.mubr.bf16.mxu0 0
      %1772 = vmatmul.mubr.bf16.gmra.mrb[0].mxu0 %v1590
      %v1773 = vpop.f32.mrb[0].mxu0
      %v1774 = vadd.f32 0.0, %v1773
      %v1775 = vpop.f32.mrb[0].mxu0
      %v1776 = vadd.f32 0.0, %v1775
      %v1777 = vpop.f32.mrb[0].mxu0
      %v1778 = vpop.f32.mrb[0].mxu0
      %1779 = vdwg.mxu0
      %v1780 = vmul.f32 %v1651, %v613
      %v1781 = vmul.f32 %v1653, %v617
      %v1782 = vmul.f32 %v1692, %v621
      %v1783 = vmul.f32 %v1694, %v625
      %v1784 = vmul.f32 %v1733, %v629
      %v1785 = vmul.f32 %v1735, %v633
      %v1786 = vmul.f32 %v1774, %v637
      %v1787 = vmul.f32 %v1776, %v641
      %v1788 = vld [vmem:[#allocation3] sm:$0xff]
      %v1789 = vld [vmem:[#allocation3 + $0x8] sm:$0xff]
      %v1790 = vld [vmem:[#allocation3 + $0x10] sm:$0xff]
      %v1791 = vld [vmem:[#allocation3 + $0x18] sm:$0xff]
      %v1792 = vld [vmem:[#allocation3 + $0x20] sm:$0xff]
      %v1793 = vld [vmem:[#allocation3 + $0x28] sm:$0xff]
      %v1794 = vld [vmem:[#allocation3 + $0x30] sm:$0xff]
      %v1795 = vld [vmem:[#allocation3 + $0x38] sm:$0xff]
      %v1796 = vadd.f32 %v1788, %v1780
      %v1797 = vadd.f32 %v1789, %v1781
      %v1798 = vadd.f32 %v1790, %v1782
      %v1799 = vadd.f32 %v1791, %v1783
      %v1800 = vadd.f32 %v1792, %v1784
      %v1801 = vadd.f32 %v1793, %v1785
      %v1802 = vadd.f32 %v1794, %v1786
      %v1803 = vadd.f32 %v1795, %v1787
      %1804 = vst [vmem:[#allocation3] sm:$0xff] %v1796
      %1805 = vst [vmem:[#allocation3 + $0x8] sm:$0xff] %v1797
      %1806 = vst [vmem:[#allocation3 + $0x10] sm:$0xff] %v1798
      %1807 = vst [vmem:[#allocation3 + $0x18] sm:$0xff] %v1799
      %1808 = vst [vmem:[#allocation3 + $0x20] sm:$0xff] %v1800
      %1809 = vst [vmem:[#allocation3 + $0x28] sm:$0xff] %v1801
      %1810 = vst [vmem:[#allocation3 + $0x30] sm:$0xff] %v1802
      %1811 = vst [vmem:[#allocation3 + $0x38] sm:$0xff] %v1803
      %v1812 = vld [vmem:[#allocation2 + $0x4] sm:$0xff]
      %v1813 = vld [vmem:[#allocation2 + $0xc] sm:$0xff]
      %v1814 = vld [vmem:[#allocation2 + $0x14] sm:$0xff]
      %v1815 = vld [vmem:[#allocation2 + $0x1c] sm:$0xff]
      %s1816 = scalar_lea.vmem %s5, 16
      %v1817 = vld [vmem:[%s1816] sm:$0xf]
      %v1822 = vunpack.c.l.b16 %v1812
      %v1823 = vunpack.c.h.b16 %v1812
      %v1824 = vunpack.c.l.b16 %v1813
      %v1825 = vunpack.c.h.b16 %v1813
      %v1826 = vunpack.c.l.b16 %v1814
      %v1827 = vunpack.c.h.b16 %v1814
      %v1828 = vunpack.c.l.b16 %v1815
      %v1829 = vunpack.c.h.b16 %v1815
      %v1830 = vpack.c.b16 %v1822, %v1822
      %v1831 = vpack.c.b16 %v1823, %v1823
      %v1832 = vpack.c.b16 %v1824, %v1824
      %v1833 = vpack.c.b16 %v1825, %v1825
      %v1834 = vpack.c.b16 %v1826, %v1826
      %v1835 = vpack.c.b16 %v1827, %v1827
      %v1836 = vpack.c.b16 %v1828, %v1828
      %v1837 = vpack.c.b16 %v1829, %v1829
      %v1839 = vsel %vm367, %v1817, 0
      %v1842 = vsel %vm371, %v1830, 0
      %v1845 = vsel %vm371, %v1831, 0
      %v1848 = vsel %vm371, %v1832, 0
      %v1851 = vsel %vm371, %v1833, 0
      %v1854 = vsel %vm371, %v1834, 0
      %v1857 = vsel %vm371, %v1835, 0
      %v1860 = vsel %vm371, %v1836, 0
      %v1863 = vsel %vm371, %v1837, 0
      %1865 = vmatprep.subr.bf16.mxu0 %v1845
      %1866 = vmatpush1.bf16.msra.mxu0 %v1842
      %1867 = vmatprep.subr.bf16.mxu0 0
      %1868 = vmatpush1.bf16.msra.mxu0 0
      %1869 = vmatprep.subr.bf16.mxu0 0
      %1870 = vmatpush1.bf16.msra.mxu0 0
      %1871 = vmatprep.subr.bf16.mxu0 0
      %1872 = vmatpush1.bf16.msra.mxu0 0
      %1873 = vmatprep.subr.bf16.mxu0 0
      %1874 = vmatpush1.bf16.msra.mxu0 0
      %1875 = vmatprep.subr.bf16.mxu0 0
      %1876 = vmatpush1.bf16.msra.mxu0 0
      %1877 = vmatprep.subr.bf16.mxu0 0
      %1878 = vmatpush1.bf16.msra.mxu0 0
      %1879 = vmatprep.subr.bf16.mxu0 0
      %1880 = vmatpush1.bf16.msra.mxu0 0
      %1881 = vmatprep.subr.bf16.mxu0 0
      %1882 = vmatpush1.bf16.msra.mxu0 0
      %1883 = vmatprep.subr.bf16.mxu0 0
      %1884 = vmatpush1.bf16.msra.mxu0 0
      %1885 = vmatprep.subr.bf16.mxu0 0
      %1886 = vmatpush1.bf16.msra.mxu0 0
      %1887 = vmatprep.subr.bf16.mxu0 0
      %1888 = vmatpush1.bf16.msra.mxu0 0
      %1889 = vmatprep.subr.bf16.mxu0 0
      %1890 = vmatpush1.bf16.msra.mxu0 0
      %1891 = vmatprep.subr.bf16.mxu0 0
      %1892 = vmatpush1.bf16.msra.mxu0 0
      %1893 = vmatprep.subr.bf16.mxu0 0
      %1894 = vmatpush1.bf16.msra.mxu0 0
      %1895 = vmatprep.subr.bf16.mxu0 0
      %1896 = vmatpush1.bf16.msra.mxu0 0
      %1897 = vmatprep.mubr.bf16.mxu0 0
      %1898 = vmatmul.mubr.bf16.gmra.mrb[0].mxu0 %v1839
      %v1899 = vpop.f32.mrb[0].mxu0
      %v1900 = vadd.f32 0.0, %v1899
      %v1901 = vpop.f32.mrb[0].mxu0
      %v1902 = vadd.f32 0.0, %v1901
      %v1903 = vpop.f32.mrb[0].mxu0
      %v1904 = vpop.f32.mrb[0].mxu0
      %1905 = vdwg.mxu0
      %1906 = vmatprep.subr.bf16.mxu0 %v1851
      %1907 = vmatpush1.bf16.msra.mxu0 %v1848
      %1908 = vmatprep.subr.bf16.mxu0 0
      %1909 = vmatpush1.bf16.msra.mxu0 0
      %1910 = vmatprep.subr.bf16.mxu0 0
      %1911 = vmatpush1.bf16.msra.mxu0 0
      %1912 = vmatprep.subr.bf16.mxu0 0
      %1913 = vmatpush1.bf16.msra.mxu0 0
      %1914 = vmatprep.subr.bf16.mxu0 0
      %1915 = vmatpush1.bf16.msra.mxu0 0
      %1916 = vmatprep.subr.bf16.mxu0 0
      %1917 = vmatpush1.bf16.msra.mxu0 0
      %1918 = vmatprep.subr.bf16.mxu0 0
      %1919 = vmatpush1.bf16.msra.mxu0 0
      %1920 = vmatprep.subr.bf16.mxu0 0
      %1921 = vmatpush1.bf16.msra.mxu0 0
      %1922 = vmatprep.subr.bf16.mxu0 0
      %1923 = vmatpush1.bf16.msra.mxu0 0
      %1924 = vmatprep.subr.bf16.mxu0 0
      %1925 = vmatpush1.bf16.msra.mxu0 0
      %1926 = vmatprep.subr.bf16.mxu0 0
      %1927 = vmatpush1.bf16.msra.mxu0 0
      %1928 = vmatprep.subr.bf16.mxu0 0
      %1929 = vmatpush1.bf16.msra.mxu0 0
      %1930 = vmatprep.subr.bf16.mxu0 0
      %1931 = vmatpush1.bf16.msra.mxu0 0
      %1932 = vmatprep.subr.bf16.mxu0 0
      %1933 = vmatpush1.bf16.msra.mxu0 0
      %1934 = vmatprep.subr.bf16.mxu0 0
      %1935 = vmatpush1.bf16.msra.mxu0 0
      %1936 = vmatprep.subr.bf16.mxu0 0
      %1937 = vmatpush1.bf16.msra.mxu0 0
      %1938 = vmatprep.mubr.bf16.mxu0 0
      %1939 = vmatmul.mubr.bf16.gmra.mrb[0].mxu0 %v1839
      %v1940 = vpop.f32.mrb[0].mxu0
      %v1941 = vadd.f32 0.0, %v1940
      %v1942 = vpop.f32.mrb[0].mxu0
      %v1943 = vadd.f32 0.0, %v1942
      %v1944 = vpop.f32.mrb[0].mxu0
      %v1945 = vpop.f32.mrb[0].mxu0
      %1946 = vdwg.mxu0
      %1947 = vmatprep.subr.bf16.mxu0 %v1857
      %1948 = vmatpush1.bf16.msra.mxu0 %v1854
      %1949 = vmatprep.subr.bf16.mxu0 0
      %1950 = vmatpush1.bf16.msra.mxu0 0
      %1951 = vmatprep.subr.bf16.mxu0 0
      %1952 = vmatpush1.bf16.msra.mxu0 0
      %1953 = vmatprep.subr.bf16.mxu0 0
      %1954 = vmatpush1.bf16.msra.mxu0 0
      %1955 = vmatprep.subr.bf16.mxu0 0
      %1956 = vmatpush1.bf16.msra.mxu0 0
      %1957 = vmatprep.subr.bf16.mxu0 0
      %1958 = vmatpush1.bf16.msra.mxu0 0
      %1959 = vmatprep.subr.bf16.mxu0 0
      %1960 = vmatpush1.bf16.msra.mxu0 0
      %1961 = vmatprep.subr.bf16.mxu0 0
      %1962 = vmatpush1.bf16.msra.mxu0 0
      %1963 = vmatprep.subr.bf16.mxu0 0
      %1964 = vmatpush1.bf16.msra.mxu0 0
      %1965 = vmatprep.subr.bf16.mxu0 0
      %1966 = vmatpush1.bf16.msra.mxu0 0
      %1967 = vmatprep.subr.bf16.mxu0 0
      %1968 = vmatpush1.bf16.msra.mxu0 0
      %1969 = vmatprep.subr.bf16.mxu0 0
      %1970 = vmatpush1.bf16.msra.mxu0 0
      %1971 = vmatprep.subr.bf16.mxu0 0
      %1972 = vmatpush1.bf16.msra.mxu0 0
      %1973 = vmatprep.subr.bf16.mxu0 0
      %1974 = vmatpush1.bf16.msra.mxu0 0
      %1975 = vmatprep.subr.bf16.mxu0 0
      %1976 = vmatpush1.bf16.msra.mxu0 0
      %1977 = vmatprep.subr.bf16.mxu0 0
      %1978 = vmatpush1.bf16.msra.mxu0 0
      %1979 = vmatprep.mubr.bf16.mxu0 0
      %1980 = vmatmul.mubr.bf16.gmra.mrb[0].mxu0 %v1839
      %v1981 = vpop.f32.mrb[0].mxu0
      %v1982 = vadd.f32 0.0, %v1981
      %v1983 = vpop.f32.mrb[0].mxu0
      %v1984 = vadd.f32 0.0, %v1983
      %v1985 = vpop.f32.mrb[0].mxu0
      %v1986 = vpop.f32.mrb[0].mxu0
      %1987 = vdwg.mxu0
      %1988 = vmatprep.subr.bf16.mxu0 %v1863
      %1989 = vmatpush1.bf16.msra.mxu0 %v1860
      %1990 = vmatprep.subr.bf16.mxu0 0
      %1991 = vmatpush1.bf16.msra.mxu0 0
      %1992 = vmatprep.subr.bf16.mxu0 0
      %1993 = vmatpush1.bf16.msra.mxu0 0
      %1994 = vmatprep.subr.bf16.mxu0 0
      %1995 = vmatpush1.bf16.msra.mxu0 0
      %1996 = vmatprep.subr.bf16.mxu0 0
      %1997 = vmatpush1.bf16.msra.mxu0 0
      %1998 = vmatprep.subr.bf16.mxu0 0
      %1999 = vmatpush1.bf16.msra.mxu0 0
      %2000 = vmatprep.subr.bf16.mxu0 0
      %2001 = vmatpush1.bf16.msra.mxu0 0
      %2002 = vmatprep.subr.bf16.mxu0 0
      %2003 = vmatpush1.bf16.msra.mxu0 0
      %2004 = vmatprep.subr.bf16.mxu0 0
      %2005 = vmatpush1.bf16.msra.mxu0 0
      %2006 = vmatprep.subr.bf16.mxu0 0
      %2007 = vmatpush1.bf16.msra.mxu0 0
      %2008 = vmatprep.subr.bf16.mxu0 0
      %2009 = vmatpush1.bf16.msra.mxu0 0
      %2010 = vmatprep.subr.bf16.mxu0 0
      %2011 = vmatpush1.bf16.msra.mxu0 0
      %2012 = vmatprep.subr.bf16.mxu0 0
      %2013 = vmatpush1.bf16.msra.mxu0 0
      %2014 = vmatprep.subr.bf16.mxu0 0
      %2015 = vmatpush1.bf16.msra.mxu0 0
      %2016 = vmatprep.subr.bf16.mxu0 0
      %2017 = vmatpush1.bf16.msra.mxu0 0
      %2018 = vmatprep.subr.bf16.mxu0 0
      %2019 = vmatpush1.bf16.msra.mxu0 0
      %2020 = vmatprep.mubr.bf16.mxu0 0
      %2021 = vmatmul.mubr.bf16.gmra.mrb[0].mxu0 %v1839
      %v2022 = vpop.f32.mrb[0].mxu0
      %v2023 = vadd.f32 0.0, %v2022
      %v2024 = vpop.f32.mrb[0].mxu0
      %v2025 = vadd.f32 0.0, %v2024
      %v2026 = vpop.f32.mrb[0].mxu0
      %v2027 = vpop.f32.mrb[0].mxu0
      %2028 = vdwg.mxu0
      %v2029 = vld [vmem:[#allocation3] sm:$0xff]
      %v2030 = vld [vmem:[#allocation3 + $0x8] sm:$0xff]
      %v2031 = vld [vmem:[#allocation3 + $0x10] sm:$0xff]
      %v2032 = vld [vmem:[#allocation3 + $0x18] sm:$0xff]
      %v2033 = vld [vmem:[#allocation3 + $0x20] sm:$0xff]
      %v2034 = vld [vmem:[#allocation3 + $0x28] sm:$0xff]
      %v2035 = vld [vmem:[#allocation3 + $0x30] sm:$0xff]
      %v2036 = vld [vmem:[#allocation3 + $0x38] sm:$0xff]
      %v2037 = vadd.f32 %v2029, %v1900
      %v2038 = vadd.f32 %v2030, %v1902
      %v2039 = vadd.f32 %v2031, %v1941
      %v2040 = vadd.f32 %v2032, %v1943
      %v2041 = vadd.f32 %v2033, %v1982
      %v2042 = vadd.f32 %v2034, %v1984
      %v2043 = vadd.f32 %v2035, %v2023
      %v2044 = vadd.f32 %v2036, %v2025
      %2045 = vst [vmem:[#allocation3] sm:$0xff] %v2037
      %2046 = vst [vmem:[#allocation3 + $0x8] sm:$0xff] %v2038
      %2047 = vst [vmem:[#allocation3 + $0x10] sm:$0xff] %v2039
      %2048 = vst [vmem:[#allocation3 + $0x18] sm:$0xff] %v2040
      %2049 = vst [vmem:[#allocation3 + $0x20] sm:$0xff] %v2041
      %2050 = vst [vmem:[#allocation3 + $0x28] sm:$0xff] %v2042
      %2051 = vst [vmem:[#allocation3 + $0x30] sm:$0xff] %v2043
      %2052 = vst [vmem:[#allocation3 + $0x38] sm:$0xff] %v2044
      %v2053 = vld [vmem:[#allocation2 + $0x4] sm:$0xff]
      %v2054 = vld [vmem:[#allocation2 + $0xc] sm:$0xff]
      %v2055 = vld [vmem:[#allocation2 + $0x14] sm:$0xff]
      %v2056 = vld [vmem:[#allocation2 + $0x1c] sm:$0xff]
      %v2057 = vld [vmem:[#allocation2 + $0x24] sm:$0xf]
      %s2058 = scalar_lea.vmem %s5, 20
      %v2059 = vld [vmem:[%s2058] sm:$0xf]
      %v2065 = vunpack.c.l.b16 %v2053
      %v2066 = vunpack.c.h.b16 %v2053
      %v2067 = vunpack.c.l.b16 %v2054
      %v2068 = vunpack.c.h.b16 %v2054
      %v2069 = vunpack.c.l.b16 %v2055
      %v2070 = vunpack.c.h.b16 %v2055
      %v2071 = vunpack.c.l.b16 %v2056
      %v2072 = vunpack.c.h.b16 %v2056
      %v2073 = vunpack.c.l.b16 %v2057
      %v2074 = vpack.c.b16 %v2065, %v2065
      %v2075 = vpack.c.b16 %v2066, %v2066
      %v2076 = vpack.c.b16 %v2067, %v2067
      %v2077 = vpack.c.b16 %v2068, %v2068
      %v2078 = vpack.c.b16 %v2069, %v2069
      %v2079 = vpack.c.b16 %v2070, %v2070
      %v2080 = vpack.c.b16 %v2071, %v2071
      %v2081 = vpack.c.b16 %v2072, %v2072
      %v2082 = vpack.c.b16 %v2073, %v2073
      %2083 = vrot.lane.b32.xlu0 %v2074, 127
      %v2084 = vpop.permute.xlu0 %2083
      %2085 = vrot.lane.b32.xlu0 %v2075, 127
      %v2086 = vpop.permute.xlu0 %2085
      %2087 = vrot.lane.b32.xlu0 %v2076, 127
      %v2088 = vpop.permute.xlu0 %2087
      %2089 = vrot.lane.b32.xlu0 %v2077, 127
      %v2090 = vpop.permute.xlu0 %2089
      %2091 = vrot.lane.b32.xlu0 %v2078, 127
      %v2092 = vpop.permute.xlu0 %2091
      %2093 = vrot.lane.b32.xlu0 %v2079, 127
      %v2094 = vpop.permute.xlu0 %2093
      %2095 = vrot.lane.b32.xlu0 %v2080, 127
      %v2096 = vpop.permute.xlu0 %2095
      %2097 = vrot.lane.b32.xlu0 %v2081, 127
      %v2098 = vpop.permute.xlu0 %2097
      %2099 = vrot.lane.b32.xlu0 %v2082, 127
      %v2100 = vpop.permute.xlu0 %2099
      %vm2101 = vcmask 1039360
      %v2102 = vsel %vm2101, %v2084, %v2086
      %v2103 = vsel %vm2101, %v2086, %v2088
      %v2104 = vsel %vm2101, %v2088, %v2090
      %v2105 = vsel %vm2101, %v2090, %v2092
      %v2106 = vsel %vm2101, %v2092, %v2094
      %v2107 = vsel %vm2101, %v2094, %v2096
      %v2108 = vsel %vm2101, %v2096, %v2098
      %v2109 = vsel %vm2101, %v2098, %v2100
      %v2111 = vsel %vm367, %v2059, 0
      %v2114 = vsel %vm371, %v2102, 0
      %v2117 = vsel %vm371, %v2103, 0
      %v2120 = vsel %vm371, %v2104, 0
      %v2123 = vsel %vm371, %v2105, 0
      %v2126 = vsel %vm371, %v2106, 0
      %v2129 = vsel %vm371, %v2107, 0
      %v2132 = vsel %vm371, %v2108, 0
      %v2135 = vsel %vm371, %v2109, 0
      %2137 = vmatprep.subr.bf16.mxu0 %v2117
      %2138 = vmatpush1.bf16.msra.mxu0 %v2114
      %2139 = vmatprep.subr.bf16.mxu0 0
      %2140 = vmatpush1.bf16.msra.mxu0 0
      %2141 = vmatprep.subr.bf16.mxu0 0
      %2142 = vmatpush1.bf16.msra.mxu0 0
      %2143 = vmatprep.subr.bf16.mxu0 0
      %2144 = vmatpush1.bf16.msra.mxu0 0
      %2145 = vmatprep.subr.bf16.mxu0 0
      %2146 = vmatpush1.bf16.msra.mxu0 0
      %2147 = vmatprep.subr.bf16.mxu0 0
      %2148 = vmatpush1.bf16.msra.mxu0 0
      %2149 = vmatprep.subr.bf16.mxu0 0
      %2150 = vmatpush1.bf16.msra.mxu0 0
      %2151 = vmatprep.subr.bf16.mxu0 0
      %2152 = vmatpush1.bf16.msra.mxu0 0
      %2153 = vmatprep.subr.bf16.mxu0 0
      %2154 = vmatpush1.bf16.msra.mxu0 0
      %2155 = vmatprep.subr.bf16.mxu0 0
      %2156 = vmatpush1.bf16.msra.mxu0 0
      %2157 = vmatprep.subr.bf16.mxu0 0
      %2158 = vmatpush1.bf16.msra.mxu0 0
      %2159 = vmatprep.subr.bf16.mxu0 0
      %2160 = vmatpush1.bf16.msra.mxu0 0
      %2161 = vmatprep.subr.bf16.mxu0 0
      %2162 = vmatpush1.bf16.msra.mxu0 0
      %2163 = vmatprep.subr.bf16.mxu0 0
      %2164 = vmatpush1.bf16.msra.mxu0 0
      %2165 = vmatprep.subr.bf16.mxu0 0
      %2166 = vmatpush1.bf16.msra.mxu0 0
      %2167 = vmatprep.subr.bf16.mxu0 0
      %2168 = vmatpush1.bf16.msra.mxu0 0
      %2169 = vmatprep.mubr.bf16.mxu0 0
      %2170 = vmatmul.mubr.bf16.gmra.mrb[0].mxu0 %v2111
      %v2171 = vpop.f32.mrb[0].mxu0
      %v2172 = vadd.f32 0.0, %v2171
      %v2173 = vpop.f32.mrb[0].mxu0
      %v2174 = vadd.f32 0.0, %v2173
      %v2175 = vpop.f32.mrb[0].mxu0
      %v2176 = vpop.f32.mrb[0].mxu0
      %2177 = vdwg.mxu0
      %2178 = vmatprep.subr.bf16.mxu0 %v2123
      %2179 = vmatpush1.bf16.msra.mxu0 %v2120
      %2180 = vmatprep.subr.bf16.mxu0 0
      %2181 = vmatpush1.bf16.msra.mxu0 0
      %2182 = vmatprep.subr.bf16.mxu0 0
      %2183 = vmatpush1.bf16.msra.mxu0 0
      %2184 = vmatprep.subr.bf16.mxu0 0
      %2185 = vmatpush1.bf16.msra.mxu0 0
      %2186 = vmatprep.subr.bf16.mxu0 0
      %2187 = vmatpush1.bf16.msra.mxu0 0
      %2188 = vmatprep.subr.bf16.mxu0 0
      %2189 = vmatpush1.bf16.msra.mxu0 0
      %2190 = vmatprep.subr.bf16.mxu0 0
      %2191 = vmatpush1.bf16.msra.mxu0 0
      %2192 = vmatprep.subr.bf16.mxu0 0
      %2193 = vmatpush1.bf16.msra.mxu0 0
      %2194 = vmatprep.subr.bf16.mxu0 0
      %2195 = vmatpush1.bf16.msra.mxu0 0
      %2196 = vmatprep.subr.bf16.mxu0 0
      %2197 = vmatpush1.bf16.msra.mxu0 0
      %2198 = vmatprep.subr.bf16.mxu0 0
      %2199 = vmatpush1.bf16.msra.mxu0 0
      %2200 = vmatprep.subr.bf16.mxu0 0
      %2201 = vmatpush1.bf16.msra.mxu0 0
      %2202 = vmatprep.subr.bf16.mxu0 0
      %2203 = vmatpush1.bf16.msra.mxu0 0
      %2204 = vmatprep.subr.bf16.mxu0 0
      %2205 = vmatpush1.bf16.msra.mxu0 0
      %2206 = vmatprep.subr.bf16.mxu0 0
      %2207 = vmatpush1.bf16.msra.mxu0 0
      %2208 = vmatprep.subr.bf16.mxu0 0
      %2209 = vmatpush1.bf16.msra.mxu0 0
      %2210 = vmatprep.mubr.bf16.mxu0 0
      %2211 = vmatmul.mubr.bf16.gmra.mrb[0].mxu0 %v2111
      %v2212 = vpop.f32.mrb[0].mxu0
      %v2213 = vadd.f32 0.0, %v2212
      %v2214 = vpop.f32.mrb[0].mxu0
      %v2215 = vadd.f32 0.0, %v2214
      %v2216 = vpop.f32.mrb[0].mxu0
      %v2217 = vpop.f32.mrb[0].mxu0
      %2218 = vdwg.mxu0
      %2219 = vmatprep.subr.bf16.mxu0 %v2129
      %2220 = vmatpush1.bf16.msra.mxu0 %v2126
      %2221 = vmatprep.subr.bf16.mxu0 0
      %2222 = vmatpush1.bf16.msra.mxu0 0
      %2223 = vmatprep.subr.bf16.mxu0 0
      %2224 = vmatpush1.bf16.msra.mxu0 0
      %2225 = vmatprep.subr.bf16.mxu0 0
      %2226 = vmatpush1.bf16.msra.mxu0 0
      %2227 = vmatprep.subr.bf16.mxu0 0
      %2228 = vmatpush1.bf16.msra.mxu0 0
      %2229 = vmatprep.subr.bf16.mxu0 0
      %2230 = vmatpush1.bf16.msra.mxu0 0
      %2231 = vmatprep.subr.bf16.mxu0 0
      %2232 = vmatpush1.bf16.msra.mxu0 0
      %2233 = vmatprep.subr.bf16.mxu0 0
      %2234 = vmatpush1.bf16.msra.mxu0 0
      %2235 = vmatprep.subr.bf16.mxu0 0
      %2236 = vmatpush1.bf16.msra.mxu0 0
      %2237 = vmatprep.subr.bf16.mxu0 0
      %2238 = vmatpush1.bf16.msra.mxu0 0
      %2239 = vmatprep.subr.bf16.mxu0 0
      %2240 = vmatpush1.bf16.msra.mxu0 0
      %2241 = vmatprep.subr.bf16.mxu0 0
      %2242 = vmatpush1.bf16.msra.mxu0 0
      %2243 = vmatprep.subr.bf16.mxu0 0
      %2244 = vmatpush1.bf16.msra.mxu0 0
      %2245 = vmatprep.subr.bf16.mxu0 0
      %2246 = vmatpush1.bf16.msra.mxu0 0
      %2247 = vmatprep.subr.bf16.mxu0 0
      %2248 = vmatpush1.bf16.msra.mxu0 0
      %2249 = vmatprep.subr.bf16.mxu0 0
      %2250 = vmatpush1.bf16.msra.mxu0 0
      %2251 = vmatprep.mubr.bf16.mxu0 0
      %2252 = vmatmul.mubr.bf16.gmra.mrb[0].mxu0 %v2111
      %v2253 = vpop.f32.mrb[0].mxu0
      %v2254 = vadd.f32 0.0, %v2253
      %v2255 = vpop.f32.mrb[0].mxu0
      %v2256 = vadd.f32 0.0, %v2255
      %v2257 = vpop.f32.mrb[0].mxu0
      %v2258 = vpop.f32.mrb[0].mxu0
      %2259 = vdwg.mxu0
      %2260 = vmatprep.subr.bf16.mxu0 %v2135
      %2261 = vmatpush1.bf16.msra.mxu0 %v2132
      %2262 = vmatprep.subr.bf16.mxu0 0
      %2263 = vmatpush1.bf16.msra.mxu0 0
      %2264 = vmatprep.subr.bf16.mxu0 0
      %2265 = vmatpush1.bf16.msra.mxu0 0
      %2266 = vmatprep.subr.bf16.mxu0 0
      %2267 = vmatpush1.bf16.msra.mxu0 0
      %2268 = vmatprep.subr.bf16.mxu0 0
      %2269 = vmatpush1.bf16.msra.mxu0 0
      %2270 = vmatprep.subr.bf16.mxu0 0
      %2271 = vmatpush1.bf16.msra.mxu0 0
      %2272 = vmatprep.subr.bf16.mxu0 0
      %2273 = vmatpush1.bf16.msra.mxu0 0
      %2274 = vmatprep.subr.bf16.mxu0 0
      %2275 = vmatpush1.bf16.msra.mxu0 0
      %2276 = vmatprep.subr.bf16.mxu0 0
      %2277 = vmatpush1.bf16.msra.mxu0 0
      %2278 = vmatprep.subr.bf16.mxu0 0
      %2279 = vmatpush1.bf16.msra.mxu0 0
      %2280 = vmatprep.subr.bf16.mxu0 0
      %2281 = vmatpush1.bf16.msra.mxu0 0
      %2282 = vmatprep.subr.bf16.mxu0 0
      %2283 = vmatpush1.bf16.msra.mxu0 0
      %2284 = vmatprep.subr.bf16.mxu0 0
      %2285 = vmatpush1.bf16.msra.mxu0 0
      %2286 = vmatprep.subr.bf16.mxu0 0
      %2287 = vmatpush1.bf16.msra.mxu0 0
      %2288 = vmatprep.subr.bf16.mxu0 0
      %2289 = vmatpush1.bf16.msra.mxu0 0
      %2290 = vmatprep.subr.bf16.mxu0 0
      %2291 = vmatpush1.bf16.msra.mxu0 0
      %2292 = vmatprep.mubr.bf16.mxu0 0
      %2293 = vmatmul.mubr.bf16.gmra.mrb[0].mxu0 %v2111
      %v2294 = vpop.f32.mrb[0].mxu0
      %v2295 = vadd.f32 0.0, %v2294
      %v2296 = vpop.f32.mrb[0].mxu0
      %v2297 = vadd.f32 0.0, %v2296
      %v2298 = vpop.f32.mrb[0].mxu0
      %v2299 = vpop.f32.mrb[0].mxu0
      %2300 = vdwg.mxu0
      %v2301 = vmul.f32 %v2172, %v656
      %v2302 = vmul.f32 %v2174, %v660
      %v2303 = vmul.f32 %v2213, %v664
      %v2304 = vmul.f32 %v2215, %v668
      %v2305 = vmul.f32 %v2254, %v672
      %v2306 = vmul.f32 %v2256, %v676
      %v2307 = vmul.f32 %v2295, %v680
      %v2308 = vmul.f32 %v2297, %v684
      %v2309 = vld [vmem:[#allocation3] sm:$0xff]
      %v2310 = vld [vmem:[#allocation3 + $0x8] sm:$0xff]
      %v2311 = vld [vmem:[#allocation3 + $0x10] sm:$0xff]
      %v2312 = vld [vmem:[#allocation3 + $0x18] sm:$0xff]
      %v2313 = vld [vmem:[#allocation3 + $0x20] sm:$0xff]
      %v2314 = vld [vmem:[#allocation3 + $0x28] sm:$0xff]
      %v2315 = vld [vmem:[#allocation3 + $0x30] sm:$0xff]
      %v2316 = vld [vmem:[#allocation3 + $0x38] sm:$0xff]
      %v2317 = vadd.f32 %v2309, %v2301
      %v2318 = vadd.f32 %v2310, %v2302
      %v2319 = vadd.f32 %v2311, %v2303
      %v2320 = vadd.f32 %v2312, %v2304
      %v2321 = vadd.f32 %v2313, %v2305
      %v2322 = vadd.f32 %v2314, %v2306
      %v2323 = vadd.f32 %v2315, %v2307
      %v2324 = vadd.f32 %v2316, %v2308
      %2325 = vst [vmem:[#allocation3] sm:$0xff] %v2317
      %2326 = vst [vmem:[#allocation3 + $0x8] sm:$0xff] %v2318
      %2327 = vst [vmem:[#allocation3 + $0x10] sm:$0xff] %v2319
      %2328 = vst [vmem:[#allocation3 + $0x18] sm:$0xff] %v2320
      %2329 = vst [vmem:[#allocation3 + $0x20] sm:$0xff] %v2321
      %2330 = vst [vmem:[#allocation3 + $0x28] sm:$0xff] %v2322
      %2331 = vst [vmem:[#allocation3 + $0x30] sm:$0xff] %v2323
      %2332 = vst [vmem:[#allocation3 + $0x38] sm:$0xff] %v2324
      %v2333 = vld [vmem:[#allocation2 + $0x4] sm:$0xff]
      %v2334 = vld [vmem:[#allocation2 + $0xc] sm:$0xff]
      %v2335 = vld [vmem:[#allocation2 + $0x14] sm:$0xff]
      %v2336 = vld [vmem:[#allocation2 + $0x1c] sm:$0xff]
      %v2337 = vld [vmem:[#allocation2 + $0x24] sm:$0xf]
      %s2338 = scalar_lea.vmem %s5, 24
      %v2339 = vld [vmem:[%s2338] sm:$0xf]
      %v2345 = vunpack.c.l.b16 %v2333
      %v2346 = vunpack.c.h.b16 %v2333
      %v2347 = vunpack.c.l.b16 %v2334
      %v2348 = vunpack.c.h.b16 %v2334
      %v2349 = vunpack.c.l.b16 %v2335
      %v2350 = vunpack.c.h.b16 %v2335
      %v2351 = vunpack.c.l.b16 %v2336
      %v2352 = vunpack.c.h.b16 %v2336
      %v2353 = vunpack.c.l.b16 %v2337
      %v2354 = vpack.c.b16 %v2345, %v2345
      %v2355 = vpack.c.b16 %v2346, %v2346
      %v2356 = vpack.c.b16 %v2347, %v2347
      %v2357 = vpack.c.b16 %v2348, %v2348
      %v2358 = vpack.c.b16 %v2349, %v2349
      %v2359 = vpack.c.b16 %v2350, %v2350
      %v2360 = vpack.c.b16 %v2351, %v2351
      %v2361 = vpack.c.b16 %v2352, %v2352
      %v2362 = vpack.c.b16 %v2353, %v2353
      %2363 = vrot.lane.b32.xlu0 %v2354, 97
      %v2364 = vpop.permute.xlu0 %2363
      %2365 = vrot.lane.b32.xlu0 %v2355, 97
      %v2366 = vpop.permute.xlu0 %2365
      %2367 = vrot.lane.b32.xlu0 %v2356, 97
      %v2368 = vpop.permute.xlu0 %2367
      %2369 = vrot.lane.b32.xlu0 %v2357, 97
      %v2370 = vpop.permute.xlu0 %2369
      %2371 = vrot.lane.b32.xlu0 %v2358, 97
      %v2372 = vpop.permute.xlu0 %2371
      %2373 = vrot.lane.b32.xlu0 %v2359, 97
      %v2374 = vpop.permute.xlu0 %2373
      %2375 = vrot.lane.b32.xlu0 %v2360, 97
      %v2376 = vpop.permute.xlu0 %2375
      %2377 = vrot.lane.b32.xlu0 %v2361, 97
      %v2378 = vpop.permute.xlu0 %2377
      %2379 = vrot.lane.b32.xlu0 %v2362, 97
      %v2380 = vpop.permute.xlu0 %2379
      %vm2381 = vcmask 793600
      %v2382 = vsel %vm2381, %v2364, %v2366
      %v2383 = vsel %vm2381, %v2366, %v2368
      %v2384 = vsel %vm2381, %v2368, %v2370
      %v2385 = vsel %vm2381, %v2370, %v2372
      %v2386 = vsel %vm2381, %v2372, %v2374
      %v2387 = vsel %vm2381, %v2374, %v2376
      %v2388 = vsel %vm2381, %v2376, %v2378
      %v2389 = vsel %vm2381, %v2378, %v2380
      %v2391 = vsel %vm367, %v2339, 0
      %v2394 = vsel %vm371, %v2382, 0
      %v2397 = vsel %vm371, %v2383, 0
      %v2400 = vsel %vm371, %v2384, 0
      %v2403 = vsel %vm371, %v2385, 0
      %v2406 = vsel %vm371, %v2386, 0
      %v2409 = vsel %vm371, %v2387, 0
      %v2412 = vsel %vm371, %v2388, 0
      %v2415 = vsel %vm371, %v2389, 0
      %2417 = vmatprep.subr.bf16.mxu0 %v2397
      %2418 = vmatpush1.bf16.msra.mxu0 %v2394
      %2419 = vmatprep.subr.bf16.mxu0 0
      %2420 = vmatpush1.bf16.msra.mxu0 0
      %2421 = vmatprep.subr.bf16.mxu0 0
      %2422 = vmatpush1.bf16.msra.mxu0 0
      %2423 = vmatprep.subr.bf16.mxu0 0
      %2424 = vmatpush1.bf16.msra.mxu0 0
      %2425 = vmatprep.subr.bf16.mxu0 0
      %2426 = vmatpush1.bf16.msra.mxu0 0
      %2427 = vmatprep.subr.bf16.mxu0 0
      %2428 = vmatpush1.bf16.msra.mxu0 0
      %2429 = vmatprep.subr.bf16.mxu0 0
      %2430 = vmatpush1.bf16.msra.mxu0 0
      %2431 = vmatprep.subr.bf16.mxu0 0
      %2432 = vmatpush1.bf16.msra.mxu0 0
      %2433 = vmatprep.subr.bf16.mxu0 0
      %2434 = vmatpush1.bf16.msra.mxu0 0
      %2435 = vmatprep.subr.bf16.mxu0 0
      %2436 = vmatpush1.bf16.msra.mxu0 0
      %2437 = vmatprep.subr.bf16.mxu0 0
      %2438 = vmatpush1.bf16.msra.mxu0 0
      %2439 = vmatprep.subr.bf16.mxu0 0
      %2440 = vmatpush1.bf16.msra.mxu0 0
      %2441 = vmatprep.subr.bf16.mxu0 0
      %2442 = vmatpush1.bf16.msra.mxu0 0
      %2443 = vmatprep.subr.bf16.mxu0 0
      %2444 = vmatpush1.bf16.msra.mxu0 0
      %2445 = vmatprep.subr.bf16.mxu0 0
      %2446 = vmatpush1.bf16.msra.mxu0 0
      %2447 = vmatprep.subr.bf16.mxu0 0
      %2448 = vmatpush1.bf16.msra.mxu0 0
      %2449 = vmatprep.mubr.bf16.mxu0 0
      %2450 = vmatmul.mubr.bf16.gmra.mrb[0].mxu0 %v2391
      %v2451 = vpop.f32.mrb[0].mxu0
      %v2452 = vadd.f32 0.0, %v2451
      %v2453 = vpop.f32.mrb[0].mxu0
      %v2454 = vadd.f32 0.0, %v2453
      %v2455 = vpop.f32.mrb[0].mxu0
      %v2456 = vpop.f32.mrb[0].mxu0
      %2457 = vdwg.mxu0
      %2458 = vmatprep.subr.bf16.mxu0 %v2403
      %2459 = vmatpush1.bf16.msra.mxu0 %v2400
      %2460 = vmatprep.subr.bf16.mxu0 0
      %2461 = vmatpush1.bf16.msra.mxu0 0
      %2462 = vmatprep.subr.bf16.mxu0 0
      %2463 = vmatpush1.bf16.msra.mxu0 0
      %2464 = vmatprep.subr.bf16.mxu0 0
      %2465 = vmatpush1.bf16.msra.mxu0 0
      %2466 = vmatprep.subr.bf16.mxu0 0
      %2467 = vmatpush1.bf16.msra.mxu0 0
      %2468 = vmatprep.subr.bf16.mxu0 0
      %2469 = vmatpush1.bf16.msra.mxu0 0
      %2470 = vmatprep.subr.bf16.mxu0 0
      %2471 = vmatpush1.bf16.msra.mxu0 0
      %2472 = vmatprep.subr.bf16.mxu0 0
      %2473 = vmatpush1.bf16.msra.mxu0 0
      %2474 = vmatprep.subr.bf16.mxu0 0
      %2475 = vmatpush1.bf16.msra.mxu0 0
      %2476 = vmatprep.subr.bf16.mxu0 0
      %2477 = vmatpush1.bf16.msra.mxu0 0
      %2478 = vmatprep.subr.bf16.mxu0 0
      %2479 = vmatpush1.bf16.msra.mxu0 0
      %2480 = vmatprep.subr.bf16.mxu0 0
      %2481 = vmatpush1.bf16.msra.mxu0 0
      %2482 = vmatprep.subr.bf16.mxu0 0
      %2483 = vmatpush1.bf16.msra.mxu0 0
      %2484 = vmatprep.subr.bf16.mxu0 0
      %2485 = vmatpush1.bf16.msra.mxu0 0
      %2486 = vmatprep.subr.bf16.mxu0 0
      %2487 = vmatpush1.bf16.msra.mxu0 0
      %2488 = vmatprep.subr.bf16.mxu0 0
      %2489 = vmatpush1.bf16.msra.mxu0 0
      %2490 = vmatprep.mubr.bf16.mxu0 0
      %2491 = vmatmul.mubr.bf16.gmra.mrb[0].mxu0 %v2391
      %v2492 = vpop.f32.mrb[0].mxu0
      %v2493 = vadd.f32 0.0, %v2492
      %v2494 = vpop.f32.mrb[0].mxu0
      %v2495 = vadd.f32 0.0, %v2494
      %v2496 = vpop.f32.mrb[0].mxu0
      %v2497 = vpop.f32.mrb[0].mxu0
      %2498 = vdwg.mxu0
      %2499 = vmatprep.subr.bf16.mxu0 %v2409
      %2500 = vmatpush1.bf16.msra.mxu0 %v2406
      %2501 = vmatprep.subr.bf16.mxu0 0
      %2502 = vmatpush1.bf16.msra.mxu0 0
      %2503 = vmatprep.subr.bf16.mxu0 0
      %2504 = vmatpush1.bf16.msra.mxu0 0
      %2505 = vmatprep.subr.bf16.mxu0 0
      %2506 = vmatpush1.bf16.msra.mxu0 0
      %2507 = vmatprep.subr.bf16.mxu0 0
      %2508 = vmatpush1.bf16.msra.mxu0 0
      %2509 = vmatprep.subr.bf16.mxu0 0
      %2510 = vmatpush1.bf16.msra.mxu0 0
      %2511 = vmatprep.subr.bf16.mxu0 0
      %2512 = vmatpush1.bf16.msra.mxu0 0
      %2513 = vmatprep.subr.bf16.mxu0 0
      %2514 = vmatpush1.bf16.msra.mxu0 0
      %2515 = vmatprep.subr.bf16.mxu0 0
      %2516 = vmatpush1.bf16.msra.mxu0 0
      %2517 = vmatprep.subr.bf16.mxu0 0
      %2518 = vmatpush1.bf16.msra.mxu0 0
      %2519 = vmatprep.subr.bf16.mxu0 0
      %2520 = vmatpush1.bf16.msra.mxu0 0
      %2521 = vmatprep.subr.bf16.mxu0 0
      %2522 = vmatpush1.bf16.msra.mxu0 0
      %2523 = vmatprep.subr.bf16.mxu0 0
      %2524 = vmatpush1.bf16.msra.mxu0 0
      %2525 = vmatprep.subr.bf16.mxu0 0
      %2526 = vmatpush1.bf16.msra.mxu0 0
      %2527 = vmatprep.subr.bf16.mxu0 0
      %2528 = vmatpush1.bf16.msra.mxu0 0
      %2529 = vmatprep.subr.bf16.mxu0 0
      %2530 = vmatpush1.bf16.msra.mxu0 0
      %2531 = vmatprep.mubr.bf16.mxu0 0
      %2532 = vmatmul.mubr.bf16.gmra.mrb[0].mxu0 %v2391
      %v2533 = vpop.f32.mrb[0].mxu0
      %v2534 = vadd.f32 0.0, %v2533
      %v2535 = vpop.f32.mrb[0].mxu0
      %v2536 = vadd.f32 0.0, %v2535
      %v2537 = vpop.f32.mrb[0].mxu0
      %v2538 = vpop.f32.mrb[0].mxu0
      %2539 = vdwg.mxu0
      %2540 = vmatprep.subr.bf16.mxu0 %v2415
      %2541 = vmatpush1.bf16.msra.mxu0 %v2412
      %2542 = vmatprep.subr.bf16.mxu0 0
      %2543 = vmatpush1.bf16.msra.mxu0 0
      %2544 = vmatprep.subr.bf16.mxu0 0
      %2545 = vmatpush1.bf16.msra.mxu0 0
      %2546 = vmatprep.subr.bf16.mxu0 0
      %2547 = vmatpush1.bf16.msra.mxu0 0
      %2548 = vmatprep.subr.bf16.mxu0 0
      %2549 = vmatpush1.bf16.msra.mxu0 0
      %2550 = vmatprep.subr.bf16.mxu0 0
      %2551 = vmatpush1.bf16.msra.mxu0 0
      %2552 = vmatprep.subr.bf16.mxu0 0
      %2553 = vmatpush1.bf16.msra.mxu0 0
      %2554 = vmatprep.subr.bf16.mxu0 0
      %2555 = vmatpush1.bf16.msra.mxu0 0
      %2556 = vmatprep.subr.bf16.mxu0 0
      %2557 = vmatpush1.bf16.msra.mxu0 0
      %2558 = vmatprep.subr.bf16.mxu0 0
      %2559 = vmatpush1.bf16.msra.mxu0 0
      %2560 = vmatprep.subr.bf16.mxu0 0
      %2561 = vmatpush1.bf16.msra.mxu0 0
      %2562 = vmatprep.subr.bf16.mxu0 0
      %2563 = vmatpush1.bf16.msra.mxu0 0
      %2564 = vmatprep.subr.bf16.mxu0 0
      %2565 = vmatpush1.bf16.msra.mxu0 0
      %2566 = vmatprep.subr.bf16.mxu0 0
      %2567 = vmatpush1.bf16.msra.mxu0 0
      %2568 = vmatprep.subr.bf16.mxu0 0
      %2569 = vmatpush1.bf16.msra.mxu0 0
      %2570 = vmatprep.subr.bf16.mxu0 0
      %2571 = vmatpush1.bf16.msra.mxu0 0
      %2572 = vmatprep.mubr.bf16.mxu0 0
      %2573 = vmatmul.mubr.bf16.gmra.mrb[0].mxu0 %v2391
      %v2574 = vpop.f32.mrb[0].mxu0
      %v2575 = vadd.f32 0.0, %v2574
      %v2576 = vpop.f32.mrb[0].mxu0
      %v2577 = vadd.f32 0.0, %v2576
      %v2578 = vpop.f32.mrb[0].mxu0
      %v2579 = vpop.f32.mrb[0].mxu0
      %2580 = vdwg.mxu0
      %v2581 = vmul.f32 %v2452, %v613
      %v2582 = vmul.f32 %v2454, %v617
      %v2583 = vmul.f32 %v2493, %v621
      %v2584 = vmul.f32 %v2495, %v625
      %v2585 = vmul.f32 %v2534, %v629
      %v2586 = vmul.f32 %v2536, %v633
      %v2587 = vmul.f32 %v2575, %v637
      %v2588 = vmul.f32 %v2577, %v641
      %v2589 = vld [vmem:[#allocation3] sm:$0xff]
      %v2590 = vld [vmem:[#allocation3 + $0x8] sm:$0xff]
      %v2591 = vld [vmem:[#allocation3 + $0x10] sm:$0xff]
      %v2592 = vld [vmem:[#allocation3 + $0x18] sm:$0xff]
      %v2593 = vld [vmem:[#allocation3 + $0x20] sm:$0xff]
      %v2594 = vld [vmem:[#allocation3 + $0x28] sm:$0xff]
      %v2595 = vld [vmem:[#allocation3 + $0x30] sm:$0xff]
      %v2596 = vld [vmem:[#allocation3 + $0x38] sm:$0xff]
      %v2597 = vadd.f32 %v2589, %v2581
      %v2598 = vadd.f32 %v2590, %v2582
      %v2599 = vadd.f32 %v2591, %v2583
      %v2600 = vadd.f32 %v2592, %v2584
      %v2601 = vadd.f32 %v2593, %v2585
      %v2602 = vadd.f32 %v2594, %v2586
      %v2603 = vadd.f32 %v2595, %v2587
      %v2604 = vadd.f32 %v2596, %v2588
      %2605 = vst [vmem:[#allocation3] sm:$0xff] %v2597
      %2606 = vst [vmem:[#allocation3 + $0x8] sm:$0xff] %v2598
      %2607 = vst [vmem:[#allocation3 + $0x10] sm:$0xff] %v2599
      %2608 = vst [vmem:[#allocation3 + $0x18] sm:$0xff] %v2600
      %2609 = vst [vmem:[#allocation3 + $0x20] sm:$0xff] %v2601
      %2610 = vst [vmem:[#allocation3 + $0x28] sm:$0xff] %v2602
      %2611 = vst [vmem:[#allocation3 + $0x30] sm:$0xff] %v2603
      %2612 = vst [vmem:[#allocation3 + $0x38] sm:$0xff] %v2604
      %v2613 = vld [vmem:[#allocation2 + $0x4] sm:$0xff]
      %v2614 = vld [vmem:[#allocation2 + $0xc] sm:$0xff]
      %v2615 = vld [vmem:[#allocation2 + $0x14] sm:$0xff]
      %v2616 = vld [vmem:[#allocation2 + $0x1c] sm:$0xff]
      %v2617 = vld [vmem:[#allocation2 + $0x24] sm:$0xf]
      %s2618 = scalar_lea.vmem %s5, 28
      %v2619 = vld [vmem:[%s2618] sm:$0xf]
      %v2625 = vunpack.c.l.b16 %v2613
      %v2626 = vunpack.c.h.b16 %v2613
      %v2627 = vunpack.c.l.b16 %v2614
      %v2628 = vunpack.c.h.b16 %v2614
      %v2629 = vunpack.c.l.b16 %v2615
      %v2630 = vunpack.c.h.b16 %v2615
      %v2631 = vunpack.c.l.b16 %v2616
      %v2632 = vunpack.c.h.b16 %v2616
      %v2633 = vunpack.c.l.b16 %v2617
      %v2634 = vpack.c.b16 %v2625, %v2625
      %v2635 = vpack.c.b16 %v2626, %v2626
      %v2636 = vpack.c.b16 %v2627, %v2627
      %v2637 = vpack.c.b16 %v2628, %v2628
      %v2638 = vpack.c.b16 %v2629, %v2629
      %v2639 = vpack.c.b16 %v2630, %v2630
      %v2640 = vpack.c.b16 %v2631, %v2631
      %v2641 = vpack.c.b16 %v2632, %v2632
      %v2642 = vpack.c.b16 %v2633, %v2633
      %2643 = vrot.lane.b32.xlu0 %v2634, 96
      %v2644 = vpop.permute.xlu0 %2643
      %2645 = vrot.lane.b32.xlu0 %v2635, 96
      %v2646 = vpop.permute.xlu0 %2645
      %2647 = vrot.lane.b32.xlu0 %v2636, 96
      %v2648 = vpop.permute.xlu0 %2647
      %2649 = vrot.lane.b32.xlu0 %v2637, 96
      %v2650 = vpop.permute.xlu0 %2649
      %2651 = vrot.lane.b32.xlu0 %v2638, 96
      %v2652 = vpop.permute.xlu0 %2651
      %2653 = vrot.lane.b32.xlu0 %v2639, 96
      %v2654 = vpop.permute.xlu0 %2653
      %2655 = vrot.lane.b32.xlu0 %v2640, 96
      %v2656 = vpop.permute.xlu0 %2655
      %2657 = vrot.lane.b32.xlu0 %v2641, 96
      %v2658 = vpop.permute.xlu0 %2657
      %2659 = vrot.lane.b32.xlu0 %v2642, 96
      %v2660 = vpop.permute.xlu0 %2659
      %vm2661 = vcmask 785408
      %v2662 = vsel %vm2661, %v2644, %v2646
      %v2663 = vsel %vm2661, %v2646, %v2648
      %v2664 = vsel %vm2661, %v2648, %v2650
      %v2665 = vsel %vm2661, %v2650, %v2652
      %v2666 = vsel %vm2661, %v2652, %v2654
      %v2667 = vsel %vm2661, %v2654, %v2656
      %v2668 = vsel %vm2661, %v2656, %v2658
      %v2669 = vsel %vm2661, %v2658, %v2660
      %v2671 = vsel %vm367, %v2619, 0
      %v2674 = vsel %vm371, %v2662, 0
      %v2677 = vsel %vm371, %v2663, 0
      %v2680 = vsel %vm371, %v2664, 0
      %v2683 = vsel %vm371, %v2665, 0
      %v2686 = vsel %vm371, %v2666, 0
      %v2689 = vsel %vm371, %v2667, 0
      %v2692 = vsel %vm371, %v2668, 0
      %v2695 = vsel %vm371, %v2669, 0
      %2697 = vmatprep.subr.bf16.mxu0 %v2677
      %2698 = vmatpush1.bf16.msra.mxu0 %v2674
      %2699 = vmatprep.subr.bf16.mxu0 0
      %2700 = vmatpush1.bf16.msra.mxu0 0
      %2701 = vmatprep.subr.bf16.mxu0 0
      %2702 = vmatpush1.bf16.msra.mxu0 0
      %2703 = vmatprep.subr.bf16.mxu0 0
      %2704 = vmatpush1.bf16.msra.mxu0 0
      %2705 = vmatprep.subr.bf16.mxu0 0
      %2706 = vmatpush1.bf16.msra.mxu0 0
      %2707 = vmatprep.subr.bf16.mxu0 0
      %2708 = vmatpush1.bf16.msra.mxu0 0
      %2709 = vmatprep.subr.bf16.mxu0 0
      %2710 = vmatpush1.bf16.msra.mxu0 0
      %2711 = vmatprep.subr.bf16.mxu0 0
      %2712 = vmatpush1.bf16.msra.mxu0 0
      %2713 = vmatprep.subr.bf16.mxu0 0
      %2714 = vmatpush1.bf16.msra.mxu0 0
      %2715 = vmatprep.subr.bf16.mxu0 0
      %2716 = vmatpush1.bf16.msra.mxu0 0
      %2717 = vmatprep.subr.bf16.mxu0 0
      %2718 = vmatpush1.bf16.msra.mxu0 0
      %2719 = vmatprep.subr.bf16.mxu0 0
      %2720 = vmatpush1.bf16.msra.mxu0 0
      %2721 = vmatprep.subr.bf16.mxu0 0
      %2722 = vmatpush1.bf16.msra.mxu0 0
      %2723 = vmatprep.subr.bf16.mxu0 0
      %2724 = vmatpush1.bf16.msra.mxu0 0
      %2725 = vmatprep.subr.bf16.mxu0 0
      %2726 = vmatpush1.bf16.msra.mxu0 0
      %2727 = vmatprep.subr.bf16.mxu0 0
      %2728 = vmatpush1.bf16.msra.mxu0 0
      %2729 = vmatprep.mubr.bf16.mxu0 0
      %2730 = vmatmul.mubr.bf16.gmra.mrb[0].mxu0 %v2671
      %v2731 = vpop.f32.mrb[0].mxu0
      %v2732 = vadd.f32 0.0, %v2731
      %v2733 = vpop.f32.mrb[0].mxu0
      %v2734 = vadd.f32 0.0, %v2733
      %v2735 = vpop.f32.mrb[0].mxu0
      %v2736 = vpop.f32.mrb[0].mxu0
      %2737 = vdwg.mxu0
      %2738 = vmatprep.subr.bf16.mxu0 %v2683
      %2739 = vmatpush1.bf16.msra.mxu0 %v2680
      %2740 = vmatprep.subr.bf16.mxu0 0
      %2741 = vmatpush1.bf16.msra.mxu0 0
      %2742 = vmatprep.subr.bf16.mxu0 0
      %2743 = vmatpush1.bf16.msra.mxu0 0
      %2744 = vmatprep.subr.bf16.mxu0 0
      %2745 = vmatpush1.bf16.msra.mxu0 0
      %2746 = vmatprep.subr.bf16.mxu0 0
      %2747 = vmatpush1.bf16.msra.mxu0 0
      %2748 = vmatprep.subr.bf16.mxu0 0
      %2749 = vmatpush1.bf16.msra.mxu0 0
      %2750 = vmatprep.subr.bf16.mxu0 0
      %2751 = vmatpush1.bf16.msra.mxu0 0
      %2752 = vmatprep.subr.bf16.mxu0 0
      %2753 = vmatpush1.bf16.msra.mxu0 0
      %2754 = vmatprep.subr.bf16.mxu0 0
      %2755 = vmatpush1.bf16.msra.mxu0 0
      %2756 = vmatprep.subr.bf16.mxu0 0
      %2757 = vmatpush1.bf16.msra.mxu0 0
      %2758 = vmatprep.subr.bf16.mxu0 0
      %2759 = vmatpush1.bf16.msra.mxu0 0
      %2760 = vmatprep.subr.bf16.mxu0 0
      %2761 = vmatpush1.bf16.msra.mxu0 0
      %2762 = vmatprep.subr.bf16.mxu0 0
      %2763 = vmatpush1.bf16.msra.mxu0 0
      %2764 = vmatprep.subr.bf16.mxu0 0
      %2765 = vmatpush1.bf16.msra.mxu0 0
      %2766 = vmatprep.subr.bf16.mxu0 0
      %2767 = vmatpush1.bf16.msra.mxu0 0
      %2768 = vmatprep.subr.bf16.mxu0 0
      %2769 = vmatpush1.bf16.msra.mxu0 0
      %2770 = vmatprep.mubr.bf16.mxu0 0
      %2771 = vmatmul.mubr.bf16.gmra.mrb[0].mxu0 %v2671
      %v2772 = vpop.f32.mrb[0].mxu0
      %v2773 = vadd.f32 0.0, %v2772
      %v2774 = vpop.f32.mrb[0].mxu0
      %v2775 = vadd.f32 0.0, %v2774
      %v2776 = vpop.f32.mrb[0].mxu0
      %v2777 = vpop.f32.mrb[0].mxu0
      %2778 = vdwg.mxu0
      %2779 = vmatprep.subr.bf16.mxu0 %v2689
      %2780 = vmatpush1.bf16.msra.mxu0 %v2686
      %2781 = vmatprep.subr.bf16.mxu0 0
      %2782 = vmatpush1.bf16.msra.mxu0 0
      %2783 = vmatprep.subr.bf16.mxu0 0
      %2784 = vmatpush1.bf16.msra.mxu0 0
      %2785 = vmatprep.subr.bf16.mxu0 0
      %2786 = vmatpush1.bf16.msra.mxu0 0
      %2787 = vmatprep.subr.bf16.mxu0 0
      %2788 = vmatpush1.bf16.msra.mxu0 0
      %2789 = vmatprep.subr.bf16.mxu0 0
      %2790 = vmatpush1.bf16.msra.mxu0 0
      %2791 = vmatprep.subr.bf16.mxu0 0
      %2792 = vmatpush1.bf16.msra.mxu0 0
      %2793 = vmatprep.subr.bf16.mxu0 0
      %2794 = vmatpush1.bf16.msra.mxu0 0
      %2795 = vmatprep.subr.bf16.mxu0 0
      %2796 = vmatpush1.bf16.msra.mxu0 0
      %2797 = vmatprep.subr.bf16.mxu0 0
      %2798 = vmatpush1.bf16.msra.mxu0 0
      %2799 = vmatprep.subr.bf16.mxu0 0
      %2800 = vmatpush1.bf16.msra.mxu0 0
      %2801 = vmatprep.subr.bf16.mxu0 0
      %2802 = vmatpush1.bf16.msra.mxu0 0
      %2803 = vmatprep.subr.bf16.mxu0 0
      %2804 = vmatpush1.bf16.msra.mxu0 0
      %2805 = vmatprep.subr.bf16.mxu0 0
      %2806 = vmatpush1.bf16.msra.mxu0 0
      %2807 = vmatprep.subr.bf16.mxu0 0
      %2808 = vmatpush1.bf16.msra.mxu0 0
      %2809 = vmatprep.subr.bf16.mxu0 0
      %2810 = vmatpush1.bf16.msra.mxu0 0
      %2811 = vmatprep.mubr.bf16.mxu0 0
      %2812 = vmatmul.mubr.bf16.gmra.mrb[0].mxu0 %v2671
      %v2813 = vpop.f32.mrb[0].mxu0
      %v2814 = vadd.f32 0.0, %v2813
      %v2815 = vpop.f32.mrb[0].mxu0
      %v2816 = vadd.f32 0.0, %v2815
      %v2817 = vpop.f32.mrb[0].mxu0
      %v2818 = vpop.f32.mrb[0].mxu0
      %2819 = vdwg.mxu0
      %2820 = vmatprep.subr.bf16.mxu0 %v2695
      %2821 = vmatpush1.bf16.msra.mxu0 %v2692
      %2822 = vmatprep.subr.bf16.mxu0 0
      %2823 = vmatpush1.bf16.msra.mxu0 0
      %2824 = vmatprep.subr.bf16.mxu0 0
      %2825 = vmatpush1.bf16.msra.mxu0 0
      %2826 = vmatprep.subr.bf16.mxu0 0
      %2827 = vmatpush1.bf16.msra.mxu0 0
      %2828 = vmatprep.subr.bf16.mxu0 0
      %2829 = vmatpush1.bf16.msra.mxu0 0
      %2830 = vmatprep.subr.bf16.mxu0 0
      %2831 = vmatpush1.bf16.msra.mxu0 0
      %2832 = vmatprep.subr.bf16.mxu0 0
      %2833 = vmatpush1.bf16.msra.mxu0 0
      %2834 = vmatprep.subr.bf16.mxu0 0
      %2835 = vmatpush1.bf16.msra.mxu0 0
      %2836 = vmatprep.subr.bf16.mxu0 0
      %2837 = vmatpush1.bf16.msra.mxu0 0
      %2838 = vmatprep.subr.bf16.mxu0 0
      %2839 = vmatpush1.bf16.msra.mxu0 0
      %2840 = vmatprep.subr.bf16.mxu0 0
      %2841 = vmatpush1.bf16.msra.mxu0 0
      %2842 = vmatprep.subr.bf16.mxu0 0
      %2843 = vmatpush1.bf16.msra.mxu0 0
      %2844 = vmatprep.subr.bf16.mxu0 0
      %2845 = vmatpush1.bf16.msra.mxu0 0
      %2846 = vmatprep.subr.bf16.mxu0 0
      %2847 = vmatpush1.bf16.msra.mxu0 0
      %2848 = vmatprep.subr.bf16.mxu0 0
      %2849 = vmatpush1.bf16.msra.mxu0 0
      %2850 = vmatprep.subr.bf16.mxu0 0
      %2851 = vmatpush1.bf16.msra.mxu0 0
      %2852 = vmatprep.mubr.bf16.mxu0 0
      %2853 = vmatmul.mubr.bf16.gmra.mrb[0].mxu0 %v2671
      %v2854 = vpop.f32.mrb[0].mxu0
      %v2855 = vadd.f32 0.0, %v2854
      %v2856 = vpop.f32.mrb[0].mxu0
      %v2857 = vadd.f32 0.0, %v2856
      %v2858 = vpop.f32.mrb[0].mxu0
      %v2859 = vpop.f32.mrb[0].mxu0
      %2860 = vdwg.mxu0
      %v2861 = vld [vmem:[#allocation3] sm:$0xff]
      %v2862 = vld [vmem:[#allocation3 + $0x8] sm:$0xff]
      %v2863 = vld [vmem:[#allocation3 + $0x10] sm:$0xff]
      %v2864 = vld [vmem:[#allocation3 + $0x18] sm:$0xff]
      %v2865 = vld [vmem:[#allocation3 + $0x20] sm:$0xff]
      %v2866 = vld [vmem:[#allocation3 + $0x28] sm:$0xff]
      %v2867 = vld [vmem:[#allocation3 + $0x30] sm:$0xff]
      %v2868 = vld [vmem:[#allocation3 + $0x38] sm:$0xff]
      %v2869 = vadd.f32 %v2861, %v2732
      %v2870 = vadd.f32 %v2862, %v2734
      %v2871 = vadd.f32 %v2863, %v2773
      %v2872 = vadd.f32 %v2864, %v2775
      %v2873 = vadd.f32 %v2865, %v2814
      %v2874 = vadd.f32 %v2866, %v2816
      %v2875 = vadd.f32 %v2867, %v2855
      %v2876 = vadd.f32 %v2868, %v2857
      %2877 = vst [vmem:[#allocation3] sm:$0xff] %v2869
      %2878 = vst [vmem:[#allocation3 + $0x8] sm:$0xff] %v2870
      %2879 = vst [vmem:[#allocation3 + $0x10] sm:$0xff] %v2871
      %2880 = vst [vmem:[#allocation3 + $0x18] sm:$0xff] %v2872
      %2881 = vst [vmem:[#allocation3 + $0x20] sm:$0xff] %v2873
      %2882 = vst [vmem:[#allocation3 + $0x28] sm:$0xff] %v2874
      %2883 = vst [vmem:[#allocation3 + $0x30] sm:$0xff] %v2875
      %2884 = vst [vmem:[#allocation3 + $0x38] sm:$0xff] %v2876
      %v2885 = vld [vmem:[#allocation2 + $0x4] sm:$0xff]
      %v2886 = vld [vmem:[#allocation2 + $0xc] sm:$0xff]
      %v2887 = vld [vmem:[#allocation2 + $0x14] sm:$0xff]
      %v2888 = vld [vmem:[#allocation2 + $0x1c] sm:$0xff]
      %v2889 = vld [vmem:[#allocation2 + $0x24] sm:$0xf]
      %s2890 = scalar_lea.vmem %s5, 32
      %v2891 = vld [vmem:[%s2890] sm:$0xf]
      %v2897 = vunpack.c.l.b16 %v2885
      %v2898 = vunpack.c.h.b16 %v2885
      %v2899 = vunpack.c.l.b16 %v2886
      %v2900 = vunpack.c.h.b16 %v2886
      %v2901 = vunpack.c.l.b16 %v2887
      %v2902 = vunpack.c.h.b16 %v2887
      %v2903 = vunpack.c.l.b16 %v2888
      %v2904 = vunpack.c.h.b16 %v2888
      %v2905 = vunpack.c.l.b16 %v2889
      %v2906 = vpack.c.b16 %v2897, %v2897
      %v2907 = vpack.c.b16 %v2898, %v2898
      %v2908 = vpack.c.b16 %v2899, %v2899
      %v2909 = vpack.c.b16 %v2900, %v2900
      %v2910 = vpack.c.b16 %v2901, %v2901
      %v2911 = vpack.c.b16 %v2902, %v2902
      %v2912 = vpack.c.b16 %v2903, %v2903
      %v2913 = vpack.c.b16 %v2904, %v2904
      %v2914 = vpack.c.b16 %v2905, %v2905
      %2915 = vrot.lane.b32.xlu0 %v2906, 95
      %v2916 = vpop.permute.xlu0 %2915
      %2917 = vrot.lane.b32.xlu0 %v2907, 95
      %v2918 = vpop.permute.xlu0 %2917
      %2919 = vrot.lane.b32.xlu0 %v2908, 95
      %v2920 = vpop.permute.xlu0 %2919
      %2921 = vrot.lane.b32.xlu0 %v2909, 95
      %v2922 = vpop.permute.xlu0 %2921
      %2923 = vrot.lane.b32.xlu0 %v2910, 95
      %v2924 = vpop.permute.xlu0 %2923
      %2925 = vrot.lane.b32.xlu0 %v2911, 95
      %v2926 = vpop.permute.xlu0 %2925
      %2927 = vrot.lane.b32.xlu0 %v2912, 95
      %v2928 = vpop.permute.xlu0 %2927
      %2929 = vrot.lane.b32.xlu0 %v2913, 95
      %v2930 = vpop.permute.xlu0 %2929
      %2931 = vrot.lane.b32.xlu0 %v2914, 95
      %v2932 = vpop.permute.xlu0 %2931
      %vm2933 = vcmask 777216
      %v2934 = vsel %vm2933, %v2916, %v2918
      %v2935 = vsel %vm2933, %v2918, %v2920
      %v2936 = vsel %vm2933, %v2920, %v2922
      %v2937 = vsel %vm2933, %v2922, %v2924
      %v2938 = vsel %vm2933, %v2924, %v2926
      %v2939 = vsel %vm2933, %v2926, %v2928
      %v2940 = vsel %vm2933, %v2928, %v2930
      %v2941 = vsel %vm2933, %v2930, %v2932
      %v2943 = vsel %vm367, %v2891, 0
      %v2946 = vsel %vm371, %v2934, 0
      %v2949 = vsel %vm371, %v2935, 0
      %v2952 = vsel %vm371, %v2936, 0
      %v2955 = vsel %vm371, %v2937, 0
      %v2958 = vsel %vm371, %v2938, 0
      %v2961 = vsel %vm371, %v2939, 0
      %v2964 = vsel %vm371, %v2940, 0
      %v2967 = vsel %vm371, %v2941, 0
      %2969 = vmatprep.subr.bf16.mxu0 %v2949
      %2970 = vmatpush1.bf16.msra.mxu0 %v2946
      %2971 = vmatprep.subr.bf16.mxu0 0
      %2972 = vmatpush1.bf16.msra.mxu0 0
      %2973 = vmatprep.subr.bf16.mxu0 0
      %2974 = vmatpush1.bf16.msra.mxu0 0
      %2975 = vmatprep.subr.bf16.mxu0 0
      %2976 = vmatpush1.bf16.msra.mxu0 0
      %2977 = vmatprep.subr.bf16.mxu0 0
      %2978 = vmatpush1.bf16.msra.mxu0 0
      %2979 = vmatprep.subr.bf16.mxu0 0
      %2980 = vmatpush1.bf16.msra.mxu0 0
      %2981 = vmatprep.subr.bf16.mxu0 0
      %2982 = vmatpush1.bf16.msra.mxu0 0
      %2983 = vmatprep.subr.bf16.mxu0 0
      %2984 = vmatpush1.bf16.msra.mxu0 0
      %2985 = vmatprep.subr.bf16.mxu0 0
      %2986 = vmatpush1.bf16.msra.mxu0 0
      %2987 = vmatprep.subr.bf16.mxu0 0
      %2988 = vmatpush1.bf16.msra.mxu0 0
      %2989 = vmatprep.subr.bf16.mxu0 0
      %2990 = vmatpush1.bf16.msra.mxu0 0
      %2991 = vmatprep.subr.bf16.mxu0 0
      %2992 = vmatpush1.bf16.msra.mxu0 0
      %2993 = vmatprep.subr.bf16.mxu0 0
      %2994 = vmatpush1.bf16.msra.mxu0 0
      %2995 = vmatprep.subr.bf16.mxu0 0
      %2996 = vmatpush1.bf16.msra.mxu0 0
      %2997 = vmatprep.subr.bf16.mxu0 0
      %2998 = vmatpush1.bf16.msra.mxu0 0
      %2999 = vmatprep.subr.bf16.mxu0 0
      %3000 = vmatpush1.bf16.msra.mxu0 0
      %3001 = vmatprep.mubr.bf16.mxu0 0
      %3002 = vmatmul.mubr.bf16.gmra.mrb[0].mxu0 %v2943
      %v3003 = vpop.f32.mrb[0].mxu0
      %v3004 = vadd.f32 0.0, %v3003
      %v3005 = vpop.f32.mrb[0].mxu0
      %v3006 = vadd.f32 0.0, %v3005
      %v3007 = vpop.f32.mrb[0].mxu0
      %v3008 = vpop.f32.mrb[0].mxu0
      %3009 = vdwg.mxu0
      %3010 = vmatprep.subr.bf16.mxu0 %v2955
      %3011 = vmatpush1.bf16.msra.mxu0 %v2952
      %3012 = vmatprep.subr.bf16.mxu0 0
      %3013 = vmatpush1.bf16.msra.mxu0 0
      %3014 = vmatprep.subr.bf16.mxu0 0
      %3015 = vmatpush1.bf16.msra.mxu0 0
      %3016 = vmatprep.subr.bf16.mxu0 0
      %3017 = vmatpush1.bf16.msra.mxu0 0
      %3018 = vmatprep.subr.bf16.mxu0 0
      %3019 = vmatpush1.bf16.msra.mxu0 0
      %3020 = vmatprep.subr.bf16.mxu0 0
      %3021 = vmatpush1.bf16.msra.mxu0 0
      %3022 = vmatprep.subr.bf16.mxu0 0
      %3023 = vmatpush1.bf16.msra.mxu0 0
      %3024 = vmatprep.subr.bf16.mxu0 0
      %3025 = vmatpush1.bf16.msra.mxu0 0
      %3026 = vmatprep.subr.bf16.mxu0 0
      %3027 = vmatpush1.bf16.msra.mxu0 0
      %3028 = vmatprep.subr.bf16.mxu0 0
      %3029 = vmatpush1.bf16.msra.mxu0 0
      %3030 = vmatprep.subr.bf16.mxu0 0
      %3031 = vmatpush1.bf16.msra.mxu0 0
      %3032 = vmatprep.subr.bf16.mxu0 0
      %3033 = vmatpush1.bf16.msra.mxu0 0
      %3034 = vmatprep.subr.bf16.mxu0 0
      %3035 = vmatpush1.bf16.msra.mxu0 0
      %3036 = vmatprep.subr.bf16.mxu0 0
      %3037 = vmatpush1.bf16.msra.mxu0 0
      %3038 = vmatprep.subr.bf16.mxu0 0
      %3039 = vmatpush1.bf16.msra.mxu0 0
      %3040 = vmatprep.subr.bf16.mxu0 0
      %3041 = vmatpush1.bf16.msra.mxu0 0
      %3042 = vmatprep.mubr.bf16.mxu0 0
      %3043 = vmatmul.mubr.bf16.gmra.mrb[0].mxu0 %v2943
      %v3044 = vpop.f32.mrb[0].mxu0
      %v3045 = vadd.f32 0.0, %v3044
      %v3046 = vpop.f32.mrb[0].mxu0
      %v3047 = vadd.f32 0.0, %v3046
      %v3048 = vpop.f32.mrb[0].mxu0
      %v3049 = vpop.f32.mrb[0].mxu0
      %3050 = vdwg.mxu0
      %3051 = vmatprep.subr.bf16.mxu0 %v2961
      %3052 = vmatpush1.bf16.msra.mxu0 %v2958
      %3053 = vmatprep.subr.bf16.mxu0 0
      %3054 = vmatpush1.bf16.msra.mxu0 0
      %3055 = vmatprep.subr.bf16.mxu0 0
      %3056 = vmatpush1.bf16.msra.mxu0 0
      %3057 = vmatprep.subr.bf16.mxu0 0
      %3058 = vmatpush1.bf16.msra.mxu0 0
      %3059 = vmatprep.subr.bf16.mxu0 0
      %3060 = vmatpush1.bf16.msra.mxu0 0
      %3061 = vmatprep.subr.bf16.mxu0 0
      %3062 = vmatpush1.bf16.msra.mxu0 0
      %3063 = vmatprep.subr.bf16.mxu0 0
      %3064 = vmatpush1.bf16.msra.mxu0 0
      %3065 = vmatprep.subr.bf16.mxu0 0
      %3066 = vmatpush1.bf16.msra.mxu0 0
      %3067 = vmatprep.subr.bf16.mxu0 0
      %3068 = vmatpush1.bf16.msra.mxu0 0
      %3069 = vmatprep.subr.bf16.mxu0 0
      %3070 = vmatpush1.bf16.msra.mxu0 0
      %3071 = vmatprep.subr.bf16.mxu0 0
      %3072 = vmatpush1.bf16.msra.mxu0 0
      %3073 = vmatprep.subr.bf16.mxu0 0
      %3074 = vmatpush1.bf16.msra.mxu0 0
      %3075 = vmatprep.subr.bf16.mxu0 0
      %3076 = vmatpush1.bf16.msra.mxu0 0
      %3077 = vmatprep.subr.bf16.mxu0 0
      %3078 = vmatpush1.bf16.msra.mxu0 0
      %3079 = vmatprep.subr.bf16.mxu0 0
      %3080 = vmatpush1.bf16.msra.mxu0 0
      %3081 = vmatprep.subr.bf16.mxu0 0
      %3082 = vmatpush1.bf16.msra.mxu0 0
      %3083 = vmatprep.mubr.bf16.mxu0 0
      %3084 = vmatmul.mubr.bf16.gmra.mrb[0].mxu0 %v2943
      %v3085 = vpop.f32.mrb[0].mxu0
      %v3086 = vadd.f32 0.0, %v3085
      %v3087 = vpop.f32.mrb[0].mxu0
      %v3088 = vadd.f32 0.0, %v3087
      %v3089 = vpop.f32.mrb[0].mxu0
      %v3090 = vpop.f32.mrb[0].mxu0
      %3091 = vdwg.mxu0
      %3092 = vmatprep.subr.bf16.mxu0 %v2967
      %3093 = vmatpush1.bf16.msra.mxu0 %v2964
      %3094 = vmatprep.subr.bf16.mxu0 0
      %3095 = vmatpush1.bf16.msra.mxu0 0
      %3096 = vmatprep.subr.bf16.mxu0 0
      %3097 = vmatpush1.bf16.msra.mxu0 0
      %3098 = vmatprep.subr.bf16.mxu0 0
      %3099 = vmatpush1.bf16.msra.mxu0 0
      %3100 = vmatprep.subr.bf16.mxu0 0
      %3101 = vmatpush1.bf16.msra.mxu0 0
      %3102 = vmatprep.subr.bf16.mxu0 0
      %3103 = vmatpush1.bf16.msra.mxu0 0
      %3104 = vmatprep.subr.bf16.mxu0 0
      %3105 = vmatpush1.bf16.msra.mxu0 0
      %3106 = vmatprep.subr.bf16.mxu0 0
      %3107 = vmatpush1.bf16.msra.mxu0 0
      %3108 = vmatprep.subr.bf16.mxu0 0
      %3109 = vmatpush1.bf16.msra.mxu0 0
      %3110 = vmatprep.subr.bf16.mxu0 0
      %3111 = vmatpush1.bf16.msra.mxu0 0
      %3112 = vmatprep.subr.bf16.mxu0 0
      %3113 = vmatpush1.bf16.msra.mxu0 0
      %3114 = vmatprep.subr.bf16.mxu0 0
      %3115 = vmatpush1.bf16.msra.mxu0 0
      %3116 = vmatprep.subr.bf16.mxu0 0
      %3117 = vmatpush1.bf16.msra.mxu0 0
      %3118 = vmatprep.subr.bf16.mxu0 0
      %3119 = vmatpush1.bf16.msra.mxu0 0
      %3120 = vmatprep.subr.bf16.mxu0 0
      %3121 = vmatpush1.bf16.msra.mxu0 0
      %3122 = vmatprep.subr.bf16.mxu0 0
      %3123 = vmatpush1.bf16.msra.mxu0 0
      %3124 = vmatprep.mubr.bf16.mxu0 0
      %3125 = vmatmul.mubr.bf16.gmra.mrb[0].mxu0 %v2943
      %v3126 = vpop.f32.mrb[0].mxu0
      %v3127 = vadd.f32 0.0, %v3126
      %v3128 = vpop.f32.mrb[0].mxu0
      %v3129 = vadd.f32 0.0, %v3128
      %v3130 = vpop.f32.mrb[0].mxu0
      %v3131 = vpop.f32.mrb[0].mxu0
      %3132 = vdwg.mxu0
      %v3133 = vmul.f32 %v3004, %v656
      %v3134 = vmul.f32 %v3006, %v660
      %v3135 = vmul.f32 %v3045, %v664
      %v3136 = vmul.f32 %v3047, %v668
      %v3137 = vmul.f32 %v3086, %v672
      %v3138 = vmul.f32 %v3088, %v676
      %v3139 = vmul.f32 %v3127, %v680
      %v3140 = vmul.f32 %v3129, %v684
      %v3141 = vld [vmem:[#allocation3] sm:$0xff]
      %v3142 = vld [vmem:[#allocation3 + $0x8] sm:$0xff]
      %v3143 = vld [vmem:[#allocation3 + $0x10] sm:$0xff]
      %v3144 = vld [vmem:[#allocation3 + $0x18] sm:$0xff]
      %v3145 = vld [vmem:[#allocation3 + $0x20] sm:$0xff]
      %v3146 = vld [vmem:[#allocation3 + $0x28] sm:$0xff]
      %v3147 = vld [vmem:[#allocation3 + $0x30] sm:$0xff]
      %v3148 = vld [vmem:[#allocation3 + $0x38] sm:$0xff]
      %v3149 = vadd.f32 %v3141, %v3133
      %v3150 = vadd.f32 %v3142, %v3134
      %v3151 = vadd.f32 %v3143, %v3135
      %v3152 = vadd.f32 %v3144, %v3136
      %v3153 = vadd.f32 %v3145, %v3137
      %v3154 = vadd.f32 %v3146, %v3138
      %v3155 = vadd.f32 %v3147, %v3139
      %v3156 = vadd.f32 %v3148, %v3140
      %3157 = vst [vmem:[#allocation3] sm:$0xff] %v3149
      %3158 = vst [vmem:[#allocation3 + $0x8] sm:$0xff] %v3150
      %3159 = vst [vmem:[#allocation3 + $0x10] sm:$0xff] %v3151
      %3160 = vst [vmem:[#allocation3 + $0x18] sm:$0xff] %v3152
      %3161 = vst [vmem:[#allocation3 + $0x20] sm:$0xff] %v3153
      %3162 = vst [vmem:[#allocation3 + $0x28] sm:$0xff] %v3154
      %3163 = vst [vmem:[#allocation3 + $0x30] sm:$0xff] %v3155
      %3164 = vst [vmem:[#allocation3 + $0x38] sm:$0xff] %v3156
      %v3165 = vld [vmem:[#allocation3] sm:$0xff]
      %v3166 = vld [vmem:[#allocation3 + $0x8] sm:$0xff]
      %v3167 = vld [vmem:[#allocation3 + $0x10] sm:$0xff]
      %v3168 = vld [vmem:[#allocation3 + $0x18] sm:$0xff]
      %v3169 = vld [vmem:[#allocation3 + $0x20] sm:$0xff]
      %v3170 = vld [vmem:[#allocation3 + $0x28] sm:$0xff]
      %v3171 = vld [vmem:[#allocation3 + $0x30] sm:$0xff]
      %v3172 = vld [vmem:[#allocation3 + $0x38] sm:$0xff]
      %v3173 = vld [vmem:[%s6] sm:$0xff]
      %3175 = vset.pattern.permute.xlu0 0
      %3176 = vperm.xlu0 %3175, %v3173
      %v3177 = vpop.permute.xlu0 %3176
      %v3179 = vadd.f32 %v3165, %v3177
      %v3180 = vadd.f32 %v3166, %v3177
      %v3181 = vadd.f32 %v3167, %v3177
      %v3182 = vadd.f32 %v3168, %v3177
      %v3183 = vadd.f32 %v3169, %v3177
      %v3184 = vadd.f32 %v3170, %v3177
      %v3185 = vadd.f32 %v3171, %v3177
      %v3186 = vadd.f32 %v3172, %v3177
      %v3187 = vmax.f32 %v3179, 0.0
      %v3188 = vmax.f32 %v3180, 0.0
      %v3189 = vmax.f32 %v3181, 0.0
      %v3190 = vmax.f32 %v3182, 0.0
      %v3191 = vmax.f32 %v3183, 0.0
      %v3192 = vmax.f32 %v3184, 0.0
      %v3193 = vmax.f32 %v3185, 0.0
      %v3194 = vmax.f32 %v3186, 0.0
      %3195 = vst [vmem:[%s298] sm:$0xff] %v3187
      %3196 = vst [vmem:[%s298 + $0x8] sm:$0xff] %v3188
      %3197 = vst [vmem:[%s298 + $0x10] sm:$0xff] %v3189
      %3198 = vst [vmem:[%s298 + $0x18] sm:$0xff] %v3190
      %3199 = vst [vmem:[%s298 + $0x20] sm:$0xff] %v3191
      %3200 = vst [vmem:[%s298 + $0x28] sm:$0xff] %v3192
      %3201 = vst [vmem:[%s298 + $0x30] sm:$0xff] %v3193
      %3202 = vst [vmem:[%s298 + $0x38] sm:$0xff] %v3194
      %p3203 = scmp.lt.s32.totalorder %s18, 1
      %s3204 = scalar_select %p3203, %s18, 1
      %s3205 = smul.addr %s3204, 8
      %s3206 = smul.addr %s3205, 8
      %s3207 = scalar_lea.vmem %s7, %s3206
      // Predicated region
      $region49: #{decoder_block_forward.3} parent=47 // pred_check
        %p3208 = pneg %p193
      $region50: #{decoder_block_forward.3} parent=47 // pred_check_branch
        %3210 = sbr.rel (%p3208) target = $region52
      $region51: #{decoder_block_forward.3} parent=47 // pred_region
        _
      $region52: #{decoder_block_forward.3} parent=47 // pred_fallthru
        _
    $region48: #{decoder_block_forward.3} parent=5 // pred_fallthru
      _
    %p3211 = scmp.le.s32.totalorder 2, %s13
    // Predicated region
    $region53: #{decoder_block_forward.3} parent=5 // pred_check
      %p3212 = pneg %p3211
    $region54: #{decoder_block_forward.3} parent=5 // pred_check_branch
      %3214 = sbr.rel (%p3212) target = $region56
    $region55: #{decoder_block_forward.3} parent=5 // pred_region
      %s3215 = ssub.s32 %s13, 2
      // Predicated region
      $region57: #{decoder_block_forward.3} parent=55 // pred_check
        %p3216 = pneg %p199
      $region58: #{decoder_block_forward.3} parent=55 // pred_check_branch
        %3218 = sbr.rel (%p3216) target = $region60
      $region59: #{decoder_block_forward.3} parent=55 // pred_region
        %p3219 = scmp.lt.s32.totalorder %s19, 1
        %s3220 = scalar_select %p3219, %s19, 1
        %s3221 = smul.addr %s3220, 8
        %s3222 = smul.addr %s3221, 8
        %s3223 = scalar_lea.vmem %s7, %s3222
      $region60: #{decoder_block_forward.3} parent=55 // pred_fallthru
        _
    $region56: #{decoder_block_forward.3} parent=5 // pred_fallthru
      _
  $region6: #{decoder_block_forward.3} parent=0 // loop_footer
    %s17 = sadd.s32 1, %s13
  $region7: #{decoder_block_forward.3} parent=0 // loop_footer_branch
    %12 = sbr.rel target = $region3
  $region8: #{decoder_block_forward.3} parent=0 // loop_exit
    _

</llo_original>
